<compile_context>
chip_gen: v7x
topology: tpu7x:2x2x1
jax: 0.10.0
libtpu: 0.0.40
codegen_flags: <defaults>
</compile_context>

<pallas_src>
import functools

import jax
import jax.numpy as jnp
from jax.experimental import pallas as pl
from jax.experimental.pallas import tpu as pltpu


def _dotproduct_kernel(cf_ref, af_ref, wc_ref, bc_ref, wa_ref, ba_ref, o_ref,
                       *, norm: bool, compute_dtype):
    # In-kernel cast of the streamed feature tiles (VPU) -> no extra HBM pass
    # in the wrapper. If the caller already stores features in `compute_dtype`
    # this is a no-op.
    cf = cf_ref[...]
    af = af_ref[...]
    if cf.dtype != compute_dtype:
        cf = cf.astype(compute_dtype)
    if af.dtype != compute_dtype:
        af = af.astype(compute_dtype)

    # Encoders: single Linear layers (x @ W + b) on the MXU, f32 accumulation.
    c_emb = jnp.dot(cf, wc_ref[...],
                    preferred_element_type=jnp.float32) + bc_ref[...]
    a_emb = jnp.dot(af, wa_ref[...],
                    preferred_element_type=jnp.float32) + ba_ref[...]

    # Row-wise dot product over the embedding dimension -> (tile_n,), f32.
    row_dot = jnp.sum(c_emb * a_emb, axis=1)

    if norm:
        # torch: e / (||e||_2 + 1e-13) applied to both embeddings folds into a
        # single per-row scale of the scalar dot:
        #   (c . a) / ((||c|| + eps) * (||a|| + eps))
        # One fused reciprocal on the (otherwise idle) EUP slot.
        c_nrm = jnp.sqrt(jnp.sum(c_emb * c_emb, axis=1)) + 1e-13
        a_nrm = jnp.sqrt(jnp.sum(a_emb * a_emb, axis=1)) + 1e-13
        row_dot = row_dot * pl.reciprocal(c_nrm * a_nrm, approx=True)

    # Lane-dense store: (1, tile_n) block of the (1, N) output.
    o_ref[...] = row_dot.reshape(1, -1)


def _round_up(x: int, m: int) -> int:
    return ((x + m - 1) // m) * m


def dot_product_forward(compound_features, assay_features, wc, bc, wa, ba,
                        *, norm=False, target_tile_n=1024,
                        compute_dtype=jnp.bfloat16):
    """Row-wise dot product of the two Linear-encoder embeddings -> (N,)."""
    N, C = compound_features.shape
    Na, A = assay_features.shape
    assert Na == N, "forward() expects the same number of rows in both inputs"
    D = wc.shape[1]
    assert target_tile_n % 128 == 0

    # Tile selection: largest tile up to target_tile_n, but keep grid_n >= 2
    # whenever N allows it (both v7x TensorCores stay busy).  tile_n must be a
    # multiple of 128 (lane dim of the (1, tile_n) output block) unless it
    # covers the whole N (full-extent block).
    if N > target_tile_n:
        tile_n = target_tile_n
    else:
        half = _round_up(pl.cdiv(N, 2), 128)
        tile_n = half if half < N else N
    grid_n = pl.cdiv(N, tile_n)   # ragged last block; tail outputs discarded

    # Grid-invariant weights: tiny one-time cast, resident in VMEM.
    wc_c = wc.astype(compute_dtype)
    wa_c = wa.astype(compute_dtype)
    bc_f = bc.reshape(1, D).astype(jnp.float32)
    ba_f = ba.reshape(1, D).astype(jnp.float32)

    kernel = functools.partial(_dotproduct_kernel, norm=bool(norm),
                               compute_dtype=compute_dtype)

    out = pl.pallas_call(
        kernel,
        out_shape=jax.ShapeDtypeStruct((1, N), jnp.float32),
        grid_spec=pltpu.PrefetchScalarGridSpec(
            num_scalar_prefetch=0,
            grid=(grid_n,),
            in_specs=[
                pl.BlockSpec((tile_n, C), lambda i: (i, 0)),   # compound tile
                pl.BlockSpec((tile_n, A), lambda i: (i, 0)),   # assay tile
                pl.BlockSpec((C, D), lambda i: (0, 0)),        # Wc (grid-invariant)
                pl.BlockSpec((1, D), lambda i: (0, 0)),        # bc
                pl.BlockSpec((A, D), lambda i: (0, 0)),        # Wa (grid-invariant)
                pl.BlockSpec((1, D), lambda i: (0, 0)),        # ba
            ],
            # Lane-dense output block (last dim multiple of 128 or == N).
            out_specs=pl.BlockSpec((1, tile_n), lambda i: (0, i)),
        ),
        compiler_params=pltpu.CompilerParams(
            dimension_semantics=("parallel",),
            vmem_limit_bytes=32 * 1024 * 1024,
        ),
    )(compound_features, assay_features, wc_c, bc_f, wa_c, ba_f)

    return out[0, :N]   # (N,)


def _reference(cf, af, wc, bc, wa, ba, *, norm=False, compute_dtype=jnp.float32):
    c_emb = jnp.dot(cf.astype(compute_dtype), wc.astype(compute_dtype),
                    preferred_element_type=jnp.float32) + bc.reshape(1, -1)
    a_emb = jnp.dot(af.astype(compute_dtype), wa.astype(compute_dtype),
                    preferred_element_type=jnp.float32) + ba.reshape(1, -1)
    if norm:
        c_emb = c_emb / (jnp.linalg.norm(c_emb, axis=1, keepdims=True) + 1e-13)
        a_emb = a_emb / (jnp.linalg.norm(a_emb, axis=1, keepdims=True) + 1e-13)
    return jnp.sum(c_emb * a_emb, axis=1)


if __name__ == "__main__":
    # N is deliberately NOT a multiple of the tile so the ragged last block is
    # exercised, and the derived grid is 2 (both v7x TensorCores get a step).
    N = 1000           # compound-assay pairs (rows)
    C = 128            # compound_features_size
    A = 256            # assay_features_size
    D = 128            # embedding_size

    key = jax.random.PRNGKey(0)
    k_cf, k_af, k_wc, k_bc, k_wa, k_ba = jax.random.split(key, 6)

    compound_features = jax.random.normal(k_cf, (N, C), dtype=jnp.float32)
    assay_features = jax.random.normal(k_af, (N, A), dtype=jnp.float32)

    # PyTorch Linear stores (out, in); we keep the transposed (in, out) layout.
    wc = jax.random.normal(k_wc, (C, D), dtype=jnp.float32) * (1.0 / jnp.sqrt(C))
    bc = jax.random.normal(k_bc, (1, D), dtype=jnp.float32) * 0.01
    wa = jax.random.normal(k_wa, (A, D), dtype=jnp.float32) * (1.0 / jnp.sqrt(A))
    ba = jax.random.normal(k_ba, (1, D), dtype=jnp.float32) * 0.01

    # 1) f32 compute path, norm=False (module math, f32 MXU).  The absolute
    #    tolerance is sized to cover worst-case differences in MXU f32 pass
    #    count between the Pallas lowering and the XLA reference dot at
    #    |emb| ~ 1, D = 128 (row_dot values have std ~ sqrt(D) ~ 11).
    out_f32 = jax.block_until_ready(dot_product_forward(
        compound_features, assay_features, wc, bc, wa, ba,
        norm=False, compute_dtype=jnp.float32))
    ref_f32 = _reference(compound_features, assay_features, wc, bc, wa, ba,
                         norm=False)
    assert out_f32.shape == (N,)
    assert jnp.allclose(out_f32, ref_f32, rtol=2e-2, atol=3e-1), "f32 mismatch"

    # 2) bf16 MXU path with f32-stored inputs (cast happens inside the kernel).
    out_bf16 = jax.block_until_ready(dot_product_forward(
        compound_features, assay_features, wc, bc, wa, ba,
        norm=False, compute_dtype=jnp.bfloat16))
    ref_bf16 = _reference(compound_features, assay_features, wc, bc, wa, ba,
                          norm=False, compute_dtype=jnp.bfloat16)
    assert jnp.allclose(out_bf16, ref_bf16, rtol=2e-2, atol=2e-2), "bf16 mismatch"

    # 3) bf16-stored features (true best-case HBM traffic: 2 B/elem streams).
    out_bf16_in = jax.block_until_ready(dot_product_forward(
        compound_features.astype(jnp.bfloat16),
        assay_features.astype(jnp.bfloat16), wc, bc, wa, ba,
        norm=False, compute_dtype=jnp.bfloat16))
    assert jnp.allclose(out_bf16_in, ref_bf16, rtol=2e-2, atol=2e-2), \
        "bf16-stored mismatch"

    # 4) norm=True path (fused approx-reciprocal normalization).
    out_norm = jax.block_until_ready(dot_product_forward(
        compound_features, assay_features, wc, bc, wa, ba,
        norm=True, compute_dtype=jnp.float32))
    ref_norm = _reference(compound_features, assay_features, wc, bc, wa, ba,
                          norm=True)
    assert jnp.allclose(out_norm, ref_norm, rtol=2e-2, atol=2e-2), "norm mismatch"

    print("KERNEL_OK")
</pallas_src>

<mosaic_0001>
module attributes {stable_mosaic.version = 11 : i64} {
  func.func @_dotproduct_kernel(%arg0: i32, %arg1: memref<512x128xf32, #tpu.memory_space<vmem>>, %arg2: memref<512x256xf32, #tpu.memory_space<vmem>>, %arg3: memref<128x128xf32, #tpu.memory_space<vmem>>, %arg4: memref<1x128xf32, #tpu.memory_space<vmem>>, %arg5: memref<256x128xf32, #tpu.memory_space<vmem>>, %arg6: memref<1x128xf32, #tpu.memory_space<vmem>>, %arg7: memref<1x512xf32, #tpu.memory_space<vmem>>) attributes {dimension_semantics = [#tpu.dimension_semantics<parallel>], iteration_bounds = array<i64: 2>, scalar_prefetch = 0 : i64, scratch_operands = 0 : i64, tpu.core_type = #tpu.core_type<tc>, window_params = [{transform_indices = @transform_0, window_bounds = array<i64: 512, 128>}, {transform_indices = @transform_1, window_bounds = array<i64: 512, 256>}, {pipeline_mode = #tpu.pipeline_mode<synchronous>, transform_indices = @transform_2, window_bounds = array<i64: 128, 128>}, {pipeline_mode = #tpu.pipeline_mode<synchronous>, transform_indices = @transform_3, window_bounds = array<i64: 1, 128>}, {pipeline_mode = #tpu.pipeline_mode<synchronous>, transform_indices = @transform_4, window_bounds = array<i64: 256, 128>}, {pipeline_mode = #tpu.pipeline_mode<synchronous>, transform_indices = @transform_5, window_bounds = array<i64: 1, 128>}, {transform_indices = @transform_6, window_bounds = array<i64: 1, 512>}]} {
    %c0 = arith.constant 0 : index
    %c0_0 = arith.constant 0 : index
    %0 = vector.load %arg1[%c0, %c0_0] : memref<512x128xf32, #tpu.memory_space<vmem>>, vector<512x128xf32>
    %c0_1 = arith.constant 0 : index
    %c0_2 = arith.constant 0 : index
    %1 = vector.load %arg2[%c0_1, %c0_2] : memref<512x256xf32, #tpu.memory_space<vmem>>, vector<512x256xf32>
    %c0_3 = arith.constant 0 : index
    %c0_4 = arith.constant 0 : index
    %2 = vector.load %arg3[%c0_3, %c0_4] : memref<128x128xf32, #tpu.memory_space<vmem>>, vector<128x128xf32>
    %cst = arith.constant dense<0.000000e+00> : vector<512x128xf32>
    %3 = tpu.matmul %0, %2, %cst {dimension_numbers = #tpu.dot_dimension_numbers<[1], [0], [0], [1], [0, 0, 1, 1], [], []>} : vector<512x128xf32>, vector<128x128xf32>, vector<512x128xf32> -> vector<512x128xf32>
    %c0_5 = arith.constant 0 : index
    %c0_6 = arith.constant 0 : index
    %4 = vector.load %arg4[%c0_5, %c0_6] : memref<1x128xf32, #tpu.memory_space<vmem>>, vector<1x128xf32>
    %5 = vector.broadcast %4 : vector<1x128xf32> to vector<512x128xf32>
    %6 = arith.addf %3, %5 : vector<512x128xf32>
    %c0_7 = arith.constant 0 : index
    %c0_8 = arith.constant 0 : index
    %7 = vector.load %arg5[%c0_7, %c0_8] : memref<256x128xf32, #tpu.memory_space<vmem>>, vector<256x128xf32>
    %cst_9 = arith.constant dense<0.000000e+00> : vector<512x128xf32>
    %8 = tpu.matmul %1, %7, %cst_9 {dimension_numbers = #tpu.dot_dimension_numbers<[1], [0], [0], [1], [0, 0, 1, 1], [], []>} : vector<512x256xf32>, vector<256x128xf32>, vector<512x128xf32> -> vector<512x128xf32>
    %c0_10 = arith.constant 0 : index
    %c0_11 = arith.constant 0 : index
    %9 = vector.load %arg6[%c0_10, %c0_11] : memref<1x128xf32, #tpu.memory_space<vmem>>, vector<1x128xf32>
    %10 = vector.broadcast %9 : vector<1x128xf32> to vector<512x128xf32>
    %11 = arith.addf %8, %10 : vector<512x128xf32>
    %12 = arith.mulf %6, %11 : vector<512x128xf32>
    %cst_12 = arith.constant dense<0.000000e+00> : vector<512xf32>
    %13 = vector.multi_reduction <add>, %12, %cst_12 [1] : vector<512x128xf32> to vector<512xf32>
    %14 = vector.shape_cast %13 : vector<512xf32> to vector<1x512xf32>
    %c0_13 = arith.constant 0 : index
    %c0_14 = arith.constant 0 : index
    %15 = vector.load %arg7[%c0_13, %c0_14] : memref<1x512xf32, #tpu.memory_space<vmem>>, vector<1x512xf32>
    tpu.vector_store %arg7[%c0_13, %c0_14], %14 {strides = array<i32>} : memref<1x512xf32, #tpu.memory_space<vmem>>, vector<1x512xf32>,
    return
  }
  func.func @transform_0(%arg0: i32) -> (i32, i32) {
    %c0_i32 = arith.constant 0 : i32
    %c0_i32_0 = arith.constant 0 : i32
    return %arg0, %c0_i32 : i32, i32
  }
  func.func @transform_1(%arg0: i32) -> (i32, i32) {
    %c0_i32 = arith.constant 0 : i32
    %c0_i32_0 = arith.constant 0 : i32
    return %arg0, %c0_i32 : i32, i32
  }
  func.func @transform_2(%arg0: i32) -> (i32, i32) {
    %c0_i32 = arith.constant 0 : i32
    %c0_i32_0 = arith.constant 0 : i32
    %c0_i32_1 = arith.constant 0 : i32
    return %c0_i32, %c0_i32_0 : i32, i32
  }
  func.func @transform_3(%arg0: i32) -> (i32, i32) {
    %c0_i32 = arith.constant 0 : i32
    %c0_i32_0 = arith.constant 0 : i32
    %c0_i32_1 = arith.constant 0 : i32
    return %c0_i32, %c0_i32_0 : i32, i32
  }
  func.func @transform_4(%arg0: i32) -> (i32, i32) {
    %c0_i32 = arith.constant 0 : i32
    %c0_i32_0 = arith.constant 0 : i32
    %c0_i32_1 = arith.constant 0 : i32
    return %c0_i32, %c0_i32_0 : i32, i32
  }
  func.func @transform_5(%arg0: i32) -> (i32, i32) {
    %c0_i32 = arith.constant 0 : i32
    %c0_i32_0 = arith.constant 0 : i32
    %c0_i32_1 = arith.constant 0 : i32
    return %c0_i32, %c0_i32_0 : i32, i32
  }
  func.func @transform_6(%arg0: i32) -> (i32, i32) {
    %c0_i32 = arith.constant 0 : i32
    %c0_i32_0 = arith.constant 0 : i32
    return %c0_i32, %arg0 : i32, i32
  }
}

</mosaic_0001>

<llo_original>
// kernel: tpu_custom_call.1
$region0: #{tpu_custom_call.1}
  #allocation0 [shape = 'u32[]', space=smem, size = 0x4, offset = 0x4, fixed_abs, tag = 'smem constant byte address 0x4 - core index']
  #allocation1 [shape = 'u32[144,128]{1,0:T(1,128)}', space=vmem, size = 0x12000, scoped, tag = 'internal scratch']
  %s0 = inlined_call_operand.hbm [shape: f32[1000,128], index: 0, kind: input, shape index: {}]
  %s1 = inlined_call_operand.hbm [shape: f32[1000,256], index: 1, kind: input, shape index: {}]
  %s2 = inlined_call_operand.hbm [shape: f32[128,128], index: 2, kind: input, shape index: {}]
  %s3 = inlined_call_operand.vmem [shape: f32[1,128], index: 3, kind: input, shape index: {}]
  %s4 = inlined_call_operand.hbm [shape: f32[256,128], index: 4, kind: input, shape index: {}]
  %s5 = inlined_call_operand.vmem [shape: f32[1,128], index: 5, kind: input, shape index: {}]
  %s6 = inlined_call_operand.hbm [shape: f32[1,1000], index: 6, kind: output, shape index: {}]
  %s7 = sld [smem:[#allocation0]]
  $region73: #{tpu_custom_call.1} parent=0
    _
  %s9 = ssub.s32 1, %s7
  %s10 = scalar_select 0, %s9, %s7
  $region1: #{tpu_custom_call.1} parent=0
    #allocation2 [shape = 'u8[524288]{0}', space=vmem, size = 0x80000, scoped, tag = 'input window, operand 0']
    #allocation3 [shape = 's32[2]{0}', space=sflag, size = 0x8, scoped, tag = 'scoped memory for tpu_custom_call.1']
    #allocation4 [shape = 's32[2]{0}', space=sflag, size = 0x8, scoped, tag = 'scoped memory for tpu_custom_call.1']
    #allocation5 [shape = 'u8[1048576]{0}', space=vmem, size = 0x100000, scoped, tag = 'input window, operand 1']
    #allocation6 [shape = 's32[2]{0}', space=sflag, size = 0x8, scoped, tag = 'scoped memory for tpu_custom_call.1']
    #allocation7 [shape = 'u8[65536]{0}', space=vmem, size = 0x10000, scoped, tag = 'input window, operand 2, single buffered']
    #allocation8 [shape = 'u8[131072]{0}', space=vmem, size = 0x20000, scoped, tag = 'input window, operand 4, single buffered']
    #allocation9 [shape = 's32[1]{0}', space=sflag, size = 0x4, scoped, tag = 'scoped memory for tpu_custom_call.1']
    #allocation10 [shape = 'u8[4096]{0}', space=vmem, size = 0x1000, scoped, tag = 'output window, operand 0']
    %11 = vsyncpa [#allocation3], 0
    %s12 = scalar_lea.sflag [#allocation3], 1
    %13 = vsyncpa %s12, 0
    %14 = vsyncpa [#allocation6], 0
    %s15 = scalar_lea.sflag [#allocation6], 1
    %16 = vsyncpa %s15, 0
    %17 = vsyncpa [#allocation9], 0
    %18 = vsyncpa [#allocation4], 0
    %s19 = scalar_lea.sflag [#allocation4], 1
    %20 = vsyncpa %s19, 0
    loop: start=0, step=1, limit=4
    $region2: #{tpu_custom_call.1} parent=1 // loop_pre_header
      _
    $region3: #{tpu_custom_call.1} parent=1 // loop_header
      %s22 = sphi 0, %s26
      %p23 = scmp.ge.s32.totalorder %s22, 4
      %s32 = sphi 0, %s34
      %s35 = sphi 0, %s32
      %s36 = sphi 0, %s35
      %s52 = sphi 0, %s36
      %s58 = sphi 0, %s60
      %s61 = sphi 0, %s58
      %s62 = sphi 0, %s61
      %s78 = sphi 0, %s62
      %s82 = sphi 0, %s82
      %s84 = sphi 0, %s82
      %s85 = sphi 0, %s84
      %s99 = sphi 0, %s85
      %s103 = sphi 0, %s103
      %s105 = sphi 0, %s103
      %s106 = sphi 0, %s105
      %s120 = sphi 0, %s106
      %s124 = sphi 0, %s124
      %s126 = sphi 0, %s124
      %s127 = sphi 0, %s126
      %s141 = sphi 0, %s127
      %s145 = sphi 0, %s145
      %s147 = sphi 0, %s145
      %s148 = sphi 0, %s147
      %s162 = sphi 0, %s148
      %s168 = sphi 0, %s170
      %s171 = sphi 0, %s168
      %s172 = sphi 0, %s171
      %s188 = sphi 0, %s172
    $region4: #{tpu_custom_call.1} parent=1 // loop_header_branch
      %25 = sbr.rel (%p23) target = $region8
    $region5: #{tpu_custom_call.1} parent=1 // loop_body
      %s27 = ssub.s32 %s22, 1
      %s28 = ssub.s32 %s22, 2
      %s29 = sadd.s32 %s22, 1
      %s30 = ssub.s32 %s22, %s29
      %p31 = scmp.eq.s32.totalorder %s30, 0
      %s33 = sadd.s32 %s32, 1
      %s34 = scalar_select %p31, %s32, %s33
      %p37 = pneg %p31
      %p38 = scmp.eq.s32.totalorder %s22, 1
      %p39 = por %p37, %p38
      %p40 = scmp.ne.s32.totalorder %s32, %s35
      %p41 = scmp.eq.s32.totalorder %s22, 0
      %p42 = por %p40, %p41
      %p43 = scmp.ne.s32.totalorder %s32, %s35
      %p44 = scmp.eq.s32.totalorder %s27, 1
      %p45 = por %p43, %p44
      %p46 = scmp.ne.s32.totalorder %s35, %s36
      %p47 = scmp.eq.s32.totalorder %s27, 0
      %p48 = por %p46, %p47
      %p49 = scmp.ne.s32.totalorder %s35, %s36
      %p50 = scmp.eq.s32.totalorder %s28, 1
      %p51 = por %p49, %p50
      %p53 = scmp.ne.s32.totalorder %s36, %s52
      %p54 = scmp.eq.s32.totalorder %s28, 0
      %p55 = por %p53, %p54
      %s56 = ssub.s32 %s22, %s29
      %p57 = scmp.eq.s32.totalorder %s56, 0
      %s59 = sadd.s32 %s58, 1
      %s60 = scalar_select %p57, %s58, %s59
      %p63 = pneg %p57
      %p64 = scmp.eq.s32.totalorder %s22, 1
      %p65 = por %p63, %p64
      %p66 = scmp.ne.s32.totalorder %s58, %s61
      %p67 = scmp.eq.s32.totalorder %s22, 0
      %p68 = por %p66, %p67
      %p69 = scmp.ne.s32.totalorder %s58, %s61
      %p70 = scmp.eq.s32.totalorder %s27, 1
      %p71 = por %p69, %p70
      %p72 = scmp.ne.s32.totalorder %s61, %s62
      %p73 = scmp.eq.s32.totalorder %s27, 0
      %p74 = por %p72, %p73
      %p75 = scmp.ne.s32.totalorder %s61, %s62
      %p76 = scmp.eq.s32.totalorder %s28, 1
      %p77 = por %p75, %p76
      %p79 = scmp.ne.s32.totalorder %s62, %s78
      %p80 = scmp.eq.s32.totalorder %s28, 0
      %p81 = por %p79, %p80
      %s83 = sadd.s32 %s82, 1
      %p86 = scmp.eq.s32.totalorder %s22, 1
      %p87 = scmp.ne.s32.totalorder %s82, %s84
      %p88 = scmp.eq.s32.totalorder %s22, 0
      %p89 = por %p87, %p88
      %p90 = scmp.ne.s32.totalorder %s82, %s84
      %p91 = scmp.eq.s32.totalorder %s27, 1
      %p92 = por %p90, %p91
      %p93 = scmp.ne.s32.totalorder %s84, %s85
      %p94 = scmp.eq.s32.totalorder %s27, 0
      %p95 = por %p93, %p94
      %p96 = scmp.ne.s32.totalorder %s84, %s85
      %p97 = scmp.eq.s32.totalorder %s28, 1
      %p98 = por %p96, %p97
      %p100 = scmp.ne.s32.totalorder %s85, %s99
      %p101 = scmp.eq.s32.totalorder %s28, 0
      %p102 = por %p100, %p101
      %s104 = sadd.s32 %s103, 1
      %p107 = scmp.eq.s32.totalorder %s22, 1
      %p108 = scmp.ne.s32.totalorder %s103, %s105
      %p109 = scmp.eq.s32.totalorder %s22, 0
      %p110 = por %p108, %p109
      %p111 = scmp.ne.s32.totalorder %s103, %s105
      %p112 = scmp.eq.s32.totalorder %s27, 1
      %p113 = por %p111, %p112
      %p114 = scmp.ne.s32.totalorder %s105, %s106
      %p115 = scmp.eq.s32.totalorder %s27, 0
      %p116 = por %p114, %p115
      %p117 = scmp.ne.s32.totalorder %s105, %s106
      %p118 = scmp.eq.s32.totalorder %s28, 1
      %p119 = por %p117, %p118
      %p121 = scmp.ne.s32.totalorder %s106, %s120
      %p122 = scmp.eq.s32.totalorder %s28, 0
      %p123 = por %p121, %p122
      %s125 = sadd.s32 %s124, 1
      %p128 = scmp.eq.s32.totalorder %s22, 1
      %p129 = scmp.ne.s32.totalorder %s124, %s126
      %p130 = scmp.eq.s32.totalorder %s22, 0
      %p131 = por %p129, %p130
      %p132 = scmp.ne.s32.totalorder %s124, %s126
      %p133 = scmp.eq.s32.totalorder %s27, 1
      %p134 = por %p132, %p133
      %p135 = scmp.ne.s32.totalorder %s126, %s127
      %p136 = scmp.eq.s32.totalorder %s27, 0
      %p137 = por %p135, %p136
      %p138 = scmp.ne.s32.totalorder %s126, %s127
      %p139 = scmp.eq.s32.totalorder %s28, 1
      %p140 = por %p138, %p139
      %p142 = scmp.ne.s32.totalorder %s127, %s141
      %p143 = scmp.eq.s32.totalorder %s28, 0
      %p144 = por %p142, %p143
      %s146 = sadd.s32 %s145, 1
      %p149 = scmp.eq.s32.totalorder %s22, 1
      %p150 = scmp.ne.s32.totalorder %s145, %s147
      %p151 = scmp.eq.s32.totalorder %s22, 0
      %p152 = por %p150, %p151
      %p153 = scmp.ne.s32.totalorder %s145, %s147
      %p154 = scmp.eq.s32.totalorder %s27, 1
      %p155 = por %p153, %p154
      %p156 = scmp.ne.s32.totalorder %s147, %s148
      %p157 = scmp.eq.s32.totalorder %s27, 0
      %p158 = por %p156, %p157
      %p159 = scmp.ne.s32.totalorder %s147, %s148
      %p160 = scmp.eq.s32.totalorder %s28, 1
      %p161 = por %p159, %p160
      %p163 = scmp.ne.s32.totalorder %s148, %s162
      %p164 = scmp.eq.s32.totalorder %s28, 0
      %p165 = por %p163, %p164
      %s166 = ssub.s32 %s22, %s29
      %p167 = scmp.eq.s32.totalorder %s166, 0
      %s169 = sadd.s32 %s168, 1
      %s170 = scalar_select %p167, %s168, %s169
      %p173 = pneg %p167
      %p174 = scmp.eq.s32.totalorder %s22, 1
      %p175 = por %p173, %p174
      %p176 = scmp.ne.s32.totalorder %s168, %s171
      %p177 = scmp.eq.s32.totalorder %s22, 0
      %p178 = por %p176, %p177
      %p179 = scmp.ne.s32.totalorder %s168, %s171
      %p180 = scmp.eq.s32.totalorder %s27, 1
      %p181 = por %p179, %p180
      %p182 = scmp.ne.s32.totalorder %s171, %s172
      %p183 = scmp.eq.s32.totalorder %s27, 0
      %p184 = por %p182, %p183
      %p185 = scmp.ne.s32.totalorder %s171, %s172
      %p186 = scmp.eq.s32.totalorder %s28, 1
      %p187 = por %p185, %p186
      %p189 = scmp.ne.s32.totalorder %s172, %s188
      %p190 = scmp.eq.s32.totalorder %s28, 0
      %p191 = por %p189, %p190
      %p192 = scmp.le.s32.totalorder 1, %s22
      %p193 = scmp.lt.s32.totalorder %s22, 3
      %p194 = pnand %p192, %p193
      %p195 = pneg %p194
      // Predicated region
      $region9: #{tpu_custom_call.1} parent=5 // pred_check
        _
      $region10: #{tpu_custom_call.1} parent=5 // pred_check_branch
        %197 = sbr.rel (%p194) target = $region12
      $region11: #{tpu_custom_call.1} parent=5 // pred_region
        %s198 = ssub.s32 %s22, 1
        // Predicated region
        $region13: #{tpu_custom_call.1} parent=11 // pred_check
          %p199 = pneg %p95
        $region14: #{tpu_custom_call.1} parent=11 // pred_check_branch
          %201 = sbr.rel (%p199) target = $region16
        $region15: #{tpu_custom_call.1} parent=11 // pred_region
          %s203 = ssub.s32 2048, 2048
          %204 = vsyncadd [#allocation6], %s203
          %s205 = sshll.u32 [#allocation7], 4
          %s206 = int_to_ptr.vmem [resolvable:$true] %s205
          %211 = dma.hbm_to_vmem [thread:$0]  %s2, 2048, %s206, [#allocation6], 128, 128, 8
        $region16: #{tpu_custom_call.1} parent=11 // pred_fallthru
          _
        // Predicated region
        $region17: #{tpu_custom_call.1} parent=11 // pred_check
          %p212 = pneg %p116
        $region18: #{tpu_custom_call.1} parent=11 // pred_check_branch
          %214 = sbr.rel (%p212) target = $region20
        $region19: #{tpu_custom_call.1} parent=11 // pred_region
          _
        $region20: #{tpu_custom_call.1} parent=11 // pred_fallthru
          _
        // Predicated region
        $region21: #{tpu_custom_call.1} parent=11 // pred_check
          %p215 = pneg %p137
        $region22: #{tpu_custom_call.1} parent=11 // pred_check_branch
          %217 = sbr.rel (%p215) target = $region24
        $region23: #{tpu_custom_call.1} parent=11 // pred_region
          %s219 = ssub.s32 4096, 4096
          %220 = vsyncadd [#allocation9], %s219
          %s221 = sshll.u32 [#allocation8], 4
          %s222 = int_to_ptr.vmem [resolvable:$true] %s221
          %227 = dma.hbm_to_vmem [thread:$0]  %s4, 4096, %s222, [#allocation9], 128, 128, 8
        $region24: #{tpu_custom_call.1} parent=11 // pred_fallthru
          _
        // Predicated region
        $region25: #{tpu_custom_call.1} parent=11 // pred_check
          %p228 = pneg %p158
        $region26: #{tpu_custom_call.1} parent=11 // pred_check_branch
          %230 = sbr.rel (%p228) target = $region28
        $region27: #{tpu_custom_call.1} parent=11 // pred_region
          _
        $region28: #{tpu_custom_call.1} parent=11 // pred_fallthru
          _
      $region12: #{tpu_custom_call.1} parent=5 // pred_fallthru
        _
      %p231 = scmp.lt.s32.totalorder %s22, 2
      // Predicated region
      $region29: #{tpu_custom_call.1} parent=5 // pred_check
        %p232 = pneg %p231
      $region30: #{tpu_custom_call.1} parent=5 // pred_check_branch
        %234 = sbr.rel (%p232) target = $region32
      $region31: #{tpu_custom_call.1} parent=5 // pred_region
        // Predicated region
        $region33: #{tpu_custom_call.1} parent=31 // pred_check
          %p235 = pneg %p42
        $region34: #{tpu_custom_call.1} parent=31 // pred_check_branch
          %237 = sbr.rel (%p235) target = $region36
        $region35: #{tpu_custom_call.1} parent=31 // pred_region
          %s238 = sand.u32 %s32, 1
          %s239 = scalar_lea.sflag [#allocation3], %s238
          %s240 = sand.u32 %s32, 1
          %s241 = smul.addr %s240, 512
          %s242 = scalar_lea.vmem [#allocation2], %s241
          %s243 = smul.u32 64, %s22
          %s244 = ssub.s32 125, %s243
          %p245 = scmp.lt.s32.totalorder %s244, 64
          %s246 = scalar_select %p245, %s244, 64
          %s247 = smul.u32 128, %s246
          %s249 = ssub.s32 8192, %s247
          %250 = vsyncadd %s239, %s249
          %p251 = scmp.ne.s32.totalorder 0, %s247
          %s252 = smul.addr %s243, 128
          %s253 = scalar_lea.hbm %s0, %s252
          %s254 = smul.u32 8, %s246
          %s255 = sshll.u32 %s242, 4
          %s256 = int_to_ptr.vmem [resolvable:$true] %s255
          %s257 = sshll.u32 %s254, 4
          %261 = dma.hbm_to_vmem [thread:$0]  (%p251), %s253, %s257, %s256, %s239, 128, 128, 8
        $region36: #{tpu_custom_call.1} parent=31 // pred_fallthru
          _
        // Predicated region
        $region37: #{tpu_custom_call.1} parent=31 // pred_check
          %p262 = pneg %p68
        $region38: #{tpu_custom_call.1} parent=31 // pred_check_branch
          %264 = sbr.rel (%p262) target = $region40
        $region39: #{tpu_custom_call.1} parent=31 // pred_region
          %s265 = sand.u32 %s22, 1
          %s266 = scalar_lea.sflag [#allocation6], %s265
          %s267 = sand.u32 %s58, 1
          %s268 = smul.addr %s267, 1024
          %s269 = scalar_lea.vmem [#allocation5], %s268
          %s270 = smul.u32 64, %s22
          %s271 = ssub.s32 125, %s270
          %p272 = scmp.lt.s32.totalorder %s271, 64
          %s273 = scalar_select %p272, %s271, 64
          %s274 = smul.u32 128, %s273
          %s275 = smul.u32 %s274, 2
          %s277 = ssub.s32 16384, %s275
          %278 = vsyncadd %s266, %s277
          %p279 = scmp.ne.s32.totalorder 0, %s275
          %s280 = smul.addr %s270, 2
          %s281 = smul.addr %s280, 128
          %s282 = scalar_lea.hbm %s1, %s281
          %s283 = smul.u32 16, %s273
          %s284 = sshll.u32 %s269, 4
          %s285 = int_to_ptr.vmem [resolvable:$true] %s284
          %s286 = sshll.u32 %s283, 4
          %290 = dma.hbm_to_vmem [thread:$0]  (%p279), %s282, %s286, %s285, %s266, 256, 256, 16
        $region40: #{tpu_custom_call.1} parent=31 // pred_fallthru
          _
      $region32: #{tpu_custom_call.1} parent=5 // pred_fallthru
        _
      %p291 = scmp.le.s32.totalorder 1, %s22
      %p292 = scmp.lt.s32.totalorder %s22, 3
      %p293 = pnand %p291, %p292
      %p294 = pneg %p293
      // Predicated region
      $region41: #{tpu_custom_call.1} parent=5 // pred_check
        _
      $region42: #{tpu_custom_call.1} parent=5 // pred_check_branch
        %296 = sbr.rel (%p293) target = $region44
      $region43: #{tpu_custom_call.1} parent=5 // pred_region
        %s297 = ssub.s32 %s22, 1
        %s298 = sand.u32 %s35, 1
        %s299 = scalar_lea.sflag [#allocation3], %s298
        %s300 = sand.u32 %s35, 1
        %s301 = smul.addr %s300, 512
        %s302 = scalar_lea.vmem [#allocation2], %s301
        // Predicated region
        $region45: #{tpu_custom_call.1} parent=43 // pred_check
          %p303 = pneg %p48
        $region46: #{tpu_custom_call.1} parent=43 // pred_check_branch
          %305 = sbr.rel (%p303) target = $region48
        $region47: #{tpu_custom_call.1} parent=43 // pred_region
          %306 = dma.done %s299, 8192
        $region48: #{tpu_custom_call.1} parent=43 // pred_fallthru
          _
        %s307 = sand.u32 %s27, 1
        %s308 = scalar_lea.sflag [#allocation6], %s307
        %s309 = sand.u32 %s61, 1
        %s310 = smul.addr %s309, 1024
        %s311 = scalar_lea.vmem [#allocation5], %s310
        // Predicated region
        $region49: #{tpu_custom_call.1} parent=43 // pred_check
          %p312 = pneg %p74
        $region50: #{tpu_custom_call.1} parent=43 // pred_check_branch
          %314 = sbr.rel (%p312) target = $region52
        $region51: #{tpu_custom_call.1} parent=43 // pred_region
          %315 = dma.done %s308, 16384
        $region52: #{tpu_custom_call.1} parent=43 // pred_fallthru
          _
        // Predicated region
        $region53: #{tpu_custom_call.1} parent=43 // pred_check
          %p316 = pneg %p95
        $region54: #{tpu_custom_call.1} parent=43 // pred_check_branch
          %318 = sbr.rel (%p316) target = $region56
        $region55: #{tpu_custom_call.1} parent=43 // pred_region
          %319 = dma.done [#allocation6], 2048
        $region56: #{tpu_custom_call.1} parent=43 // pred_fallthru
          _
        // Predicated region
        $region57: #{tpu_custom_call.1} parent=43 // pred_check
          %p320 = pneg %p137
        $region58: #{tpu_custom_call.1} parent=43 // pred_check_branch
          %322 = sbr.rel (%p320) target = $region60
        $region59: #{tpu_custom_call.1} parent=43 // pred_region
          %323 = dma.done [#allocation9], 4096
        $region60: #{tpu_custom_call.1} parent=43 // pred_fallthru
          _
        %s324 = sand.u32 %s35, 1
        %s325 = scalar_lea.sflag [#allocation3], %s324
        %s326 = sand.u32 %s35, 1
        %s327 = smul.addr %s326, 512
        %s328 = scalar_lea.vmem [#allocation2], %s327
        %p329 = pneg %p48
        %p330 = pneg %p45
        %s331 = sand.u32 %s27, 1
        %s332 = scalar_lea.sflag [#allocation6], %s331
        %s333 = sand.u32 %s61, 1
        %s334 = smul.addr %s333, 1024
        %s335 = scalar_lea.vmem [#allocation5], %s334
        %p336 = pneg %p74
        %p337 = pneg %p71
        %p338 = pneg %p95
        %p339 = pneg %p92
        %p340 = pneg %p116
        %p341 = pneg %p113
        %p342 = pneg %p137
        %p343 = pneg %p134
        %p344 = pneg %p158
        %p345 = pneg %p155
        %p346 = pneg %p184
        %p347 = pneg %p181
        %s348 = sand.u32 %s171, 1
        %s349 = scalar_lea.sflag [#allocation4], %s348
        %s350 = sand.u32 %s171, 1
        %s351 = smul.addr %s350, 4
        %s352 = scalar_lea.vmem [#allocation10], %s351
        %s353 = smul.u32 64, %s27
        %s354 = ssub.s32 125, %s353
        %p355 = scmp.lt.s32.totalorder %s354, 64
        %s356 = scalar_select %p355, %s354, 64
        %s357 = smul.u32 128, %s356
        %s358 = smul.u32 64, %s27
        %s359 = ssub.s32 125, %s358
        %p360 = scmp.lt.s32.totalorder %s359, 64
        %s361 = scalar_select %p360, %s359, 64
        %s362 = smul.u32 128, %s361
        %s363 = smul.u32 %s362, 2
        %s364 = smul.u32 4, %s27
        %v365 = vld [vmem:[%s302] sm:$0xff]
        %v366 = vld [vmem:[%s302 + $0x8] sm:$0xff]
        %v367 = vld [vmem:[%s302 + $0x10] sm:$0xff]
        %v368 = vld [vmem:[%s302 + $0x18] sm:$0xff]
        %v369 = vld [vmem:[%s302 + $0x20] sm:$0xff]
        %v370 = vld [vmem:[%s302 + $0x28] sm:$0xff]
        %v371 = vld [vmem:[%s302 + $0x30] sm:$0xff]
        %v372 = vld [vmem:[%s302 + $0x38] sm:$0xff]
        %v373 = vld [vmem:[%s302 + $0x40] sm:$0xff]
        %v374 = vld [vmem:[%s302 + $0x48] sm:$0xff]
        %v375 = vld [vmem:[%s302 + $0x50] sm:$0xff]
        %v376 = vld [vmem:[%s302 + $0x58] sm:$0xff]
        %v377 = vld [vmem:[%s302 + $0x60] sm:$0xff]
        %v378 = vld [vmem:[%s302 + $0x68] sm:$0xff]
        %v379 = vld [vmem:[%s302 + $0x70] sm:$0xff]
        %v380 = vld [vmem:[%s302 + $0x78] sm:$0xff]
        %v381 = vld [vmem:[%s302 + $0x80] sm:$0xff]
        %v382 = vld [vmem:[%s302 + $0x88] sm:$0xff]
        %v383 = vld [vmem:[%s302 + $0x90] sm:$0xff]
        %v384 = vld [vmem:[%s302 + $0x98] sm:$0xff]
        %v385 = vld [vmem:[%s302 + $0xa0] sm:$0xff]
        %v386 = vld [vmem:[%s302 + $0xa8] sm:$0xff]
        %v387 = vld [vmem:[%s302 + $0xb0] sm:$0xff]
        %v388 = vld [vmem:[%s302 + $0xb8] sm:$0xff]
        %v389 = vld [vmem:[%s302 + $0xc0] sm:$0xff]
        %v390 = vld [vmem:[%s302 + $0xc8] sm:$0xff]
        %v391 = vld [vmem:[%s302 + $0xd0] sm:$0xff]
        %v392 = vld [vmem:[%s302 + $0xd8] sm:$0xff]
        %v393 = vld [vmem:[%s302 + $0xe0] sm:$0xff]
        %v394 = vld [vmem:[%s302 + $0xe8] sm:$0xff]
        %v395 = vld [vmem:[%s302 + $0xf0] sm:$0xff]
        %v396 = vld [vmem:[%s302 + $0xf8] sm:$0xff]
        %v397 = vld [vmem:[%s302 + $0x100] sm:$0xff]
        %v398 = vld [vmem:[%s302 + $0x108] sm:$0xff]
        %v399 = vld [vmem:[%s302 + $0x110] sm:$0xff]
        %v400 = vld [vmem:[%s302 + $0x118] sm:$0xff]
        %v401 = vld [vmem:[%s302 + $0x120] sm:$0xff]
        %v402 = vld [vmem:[%s302 + $0x128] sm:$0xff]
        %v403 = vld [vmem:[%s302 + $0x130] sm:$0xff]
        %v404 = vld [vmem:[%s302 + $0x138] sm:$0xff]
        %v405 = vld [vmem:[%s302 + $0x140] sm:$0xff]
        %v406 = vld [vmem:[%s302 + $0x148] sm:$0xff]
        %v407 = vld [vmem:[%s302 + $0x150] sm:$0xff]
        %v408 = vld [vmem:[%s302 + $0x158] sm:$0xff]
        %v409 = vld [vmem:[%s302 + $0x160] sm:$0xff]
        %v410 = vld [vmem:[%s302 + $0x168] sm:$0xff]
        %v411 = vld [vmem:[%s302 + $0x170] sm:$0xff]
        %v412 = vld [vmem:[%s302 + $0x178] sm:$0xff]
        %v413 = vld [vmem:[%s302 + $0x180] sm:$0xff]
        %v414 = vld [vmem:[%s302 + $0x188] sm:$0xff]
        %v415 = vld [vmem:[%s302 + $0x190] sm:$0xff]
        %v416 = vld [vmem:[%s302 + $0x198] sm:$0xff]
        %v417 = vld [vmem:[%s302 + $0x1a0] sm:$0xff]
        %v418 = vld [vmem:[%s302 + $0x1a8] sm:$0xff]
        %v419 = vld [vmem:[%s302 + $0x1b0] sm:$0xff]
        %v420 = vld [vmem:[%s302 + $0x1b8] sm:$0xff]
        %v421 = vld [vmem:[%s302 + $0x1c0] sm:$0xff]
        %v422 = vld [vmem:[%s302 + $0x1c8] sm:$0xff]
        %v423 = vld [vmem:[%s302 + $0x1d0] sm:$0xff]
        %v424 = vld [vmem:[%s302 + $0x1d8] sm:$0xff]
        %v425 = vld [vmem:[%s302 + $0x1e0] sm:$0xff]
        %v426 = vld [vmem:[%s302 + $0x1e8] sm:$0xff]
        %v427 = vld [vmem:[%s302 + $0x1f0] sm:$0xff]
        %v428 = vld [vmem:[%s302 + $0x1f8] sm:$0xff]
        %v429 = vld [vmem:[%s311] sm:$0xff]
        %v430 = vld [vmem:[%s311 + $0x8] sm:$0xff]
        %v431 = vld [vmem:[%s311 + $0x10] sm:$0xff]
        %v432 = vld [vmem:[%s311 + $0x18] sm:$0xff]
        %v433 = vld [vmem:[%s311 + $0x20] sm:$0xff]
        %v434 = vld [vmem:[%s311 + $0x28] sm:$0xff]
        %v435 = vld [vmem:[%s311 + $0x30] sm:$0xff]
        %v436 = vld [vmem:[%s311 + $0x38] sm:$0xff]
        %v437 = vld [vmem:[%s311 + $0x40] sm:$0xff]
        %v438 = vld [vmem:[%s311 + $0x48] sm:$0xff]
        %v439 = vld [vmem:[%s311 + $0x50] sm:$0xff]
        %v440 = vld [vmem:[%s311 + $0x58] sm:$0xff]
        %v441 = vld [vmem:[%s311 + $0x60] sm:$0xff]
        %v442 = vld [vmem:[%s311 + $0x68] sm:$0xff]
        %v443 = vld [vmem:[%s311 + $0x70] sm:$0xff]
        %v444 = vld [vmem:[%s311 + $0x78] sm:$0xff]
        %v445 = vld [vmem:[%s311 + $0x80] sm:$0xff]
        %v446 = vld [vmem:[%s311 + $0x88] sm:$0xff]
        %v447 = vld [vmem:[%s311 + $0x90] sm:$0xff]
        %v448 = vld [vmem:[%s311 + $0x98] sm:$0xff]
        %v449 = vld [vmem:[%s311 + $0xa0] sm:$0xff]
        %v450 = vld [vmem:[%s311 + $0xa8] sm:$0xff]
        %v451 = vld [vmem:[%s311 + $0xb0] sm:$0xff]
        %v452 = vld [vmem:[%s311 + $0xb8] sm:$0xff]
        %v453 = vld [vmem:[%s311 + $0xc0] sm:$0xff]
        %v454 = vld [vmem:[%s311 + $0xc8] sm:$0xff]
        %v455 = vld [vmem:[%s311 + $0xd0] sm:$0xff]
        %v456 = vld [vmem:[%s311 + $0xd8] sm:$0xff]
        %v457 = vld [vmem:[%s311 + $0xe0] sm:$0xff]
        %v458 = vld [vmem:[%s311 + $0xe8] sm:$0xff]
        %v459 = vld [vmem:[%s311 + $0xf0] sm:$0xff]
        %v460 = vld [vmem:[%s311 + $0xf8] sm:$0xff]
        %v461 = vld [vmem:[%s311 + $0x100] sm:$0xff]
        %v462 = vld [vmem:[%s311 + $0x108] sm:$0xff]
        %v463 = vld [vmem:[%s311 + $0x110] sm:$0xff]
        %v464 = vld [vmem:[%s311 + $0x118] sm:$0xff]
        %v465 = vld [vmem:[%s311 + $0x120] sm:$0xff]
        %v466 = vld [vmem:[%s311 + $0x128] sm:$0xff]
        %v467 = vld [vmem:[%s311 + $0x130] sm:$0xff]
        %v468 = vld [vmem:[%s311 + $0x138] sm:$0xff]
        %v469 = vld [vmem:[%s311 + $0x140] sm:$0xff]
        %v470 = vld [vmem:[%s311 + $0x148] sm:$0xff]
        %v471 = vld [vmem:[%s311 + $0x150] sm:$0xff]
        %v472 = vld [vmem:[%s311 + $0x158] sm:$0xff]
        %v473 = vld [vmem:[%s311 + $0x160] sm:$0xff]
        %v474 = vld [vmem:[%s311 + $0x168] sm:$0xff]
        %v475 = vld [vmem:[%s311 + $0x170] sm:$0xff]
        %v476 = vld [vmem:[%s311 + $0x178] sm:$0xff]
        %v477 = vld [vmem:[%s311 + $0x180] sm:$0xff]
        %v478 = vld [vmem:[%s311 + $0x188] sm:$0xff]
        %v479 = vld [vmem:[%s311 + $0x190] sm:$0xff]
        %v480 = vld [vmem:[%s311 + $0x198] sm:$0xff]
        %v481 = vld [vmem:[%s311 + $0x1a0] sm:$0xff]
        %v482 = vld [vmem:[%s311 + $0x1a8] sm:$0xff]
        %v483 = vld [vmem:[%s311 + $0x1b0] sm:$0xff]
        %v484 = vld [vmem:[%s311 + $0x1b8] sm:$0xff]
        %v485 = vld [vmem:[%s311 + $0x1c0] sm:$0xff]
        %v486 = vld [vmem:[%s311 + $0x1c8] sm:$0xff]
        %v487 = vld [vmem:[%s311 + $0x1d0] sm:$0xff]
        %v488 = vld [vmem:[%s311 + $0x1d8] sm:$0xff]
        %v489 = vld [vmem:[%s311 + $0x1e0] sm:$0xff]
        %v490 = vld [vmem:[%s311 + $0x1e8] sm:$0xff]
        %v491 = vld [vmem:[%s311 + $0x1f0] sm:$0xff]
        %v492 = vld [vmem:[%s311 + $0x1f8] sm:$0xff]
        %v493 = vld [vmem:[%s311 + $0x200] sm:$0xff]
        %v494 = vld [vmem:[%s311 + $0x208] sm:$0xff]
        %v495 = vld [vmem:[%s311 + $0x210] sm:$0xff]
        %v496 = vld [vmem:[%s311 + $0x218] sm:$0xff]
        %v497 = vld [vmem:[%s311 + $0x220] sm:$0xff]
        %v498 = vld [vmem:[%s311 + $0x228] sm:$0xff]
        %v499 = vld [vmem:[%s311 + $0x230] sm:$0xff]
        %v500 = vld [vmem:[%s311 + $0x238] sm:$0xff]
        %v501 = vld [vmem:[%s311 + $0x240] sm:$0xff]
        %v502 = vld [vmem:[%s311 + $0x248] sm:$0xff]
        %v503 = vld [vmem:[%s311 + $0x250] sm:$0xff]
        %v504 = vld [vmem:[%s311 + $0x258] sm:$0xff]
        %v505 = vld [vmem:[%s311 + $0x260] sm:$0xff]
        %v506 = vld [vmem:[%s311 + $0x268] sm:$0xff]
        %v507 = vld [vmem:[%s311 + $0x270] sm:$0xff]
        %v508 = vld [vmem:[%s311 + $0x278] sm:$0xff]
        %v509 = vld [vmem:[%s311 + $0x280] sm:$0xff]
        %v510 = vld [vmem:[%s311 + $0x288] sm:$0xff]
        %v511 = vld [vmem:[%s311 + $0x290] sm:$0xff]
        %v512 = vld [vmem:[%s311 + $0x298] sm:$0xff]
        %v513 = vld [vmem:[%s311 + $0x2a0] sm:$0xff]
        %v514 = vld [vmem:[%s311 + $0x2a8] sm:$0xff]
        %v515 = vld [vmem:[%s311 + $0x2b0] sm:$0xff]
        %v516 = vld [vmem:[%s311 + $0x2b8] sm:$0xff]
        %v517 = vld [vmem:[%s311 + $0x2c0] sm:$0xff]
        %v518 = vld [vmem:[%s311 + $0x2c8] sm:$0xff]
        %v519 = vld [vmem:[%s311 + $0x2d0] sm:$0xff]
        %v520 = vld [vmem:[%s311 + $0x2d8] sm:$0xff]
        %v521 = vld [vmem:[%s311 + $0x2e0] sm:$0xff]
        %v522 = vld [vmem:[%s311 + $0x2e8] sm:$0xff]
        %v523 = vld [vmem:[%s311 + $0x2f0] sm:$0xff]
        %v524 = vld [vmem:[%s311 + $0x2f8] sm:$0xff]
        %v525 = vld [vmem:[%s311 + $0x300] sm:$0xff]
        %v526 = vld [vmem:[%s311 + $0x308] sm:$0xff]
        %v527 = vld [vmem:[%s311 + $0x310] sm:$0xff]
        %v528 = vld [vmem:[%s311 + $0x318] sm:$0xff]
        %v529 = vld [vmem:[%s311 + $0x320] sm:$0xff]
        %v530 = vld [vmem:[%s311 + $0x328] sm:$0xff]
        %v531 = vld [vmem:[%s311 + $0x330] sm:$0xff]
        %v532 = vld [vmem:[%s311 + $0x338] sm:$0xff]
        %v533 = vld [vmem:[%s311 + $0x340] sm:$0xff]
        %v534 = vld [vmem:[%s311 + $0x348] sm:$0xff]
        %v535 = vld [vmem:[%s311 + $0x350] sm:$0xff]
        %v536 = vld [vmem:[%s311 + $0x358] sm:$0xff]
        %v537 = vld [vmem:[%s311 + $0x360] sm:$0xff]
        %v538 = vld [vmem:[%s311 + $0x368] sm:$0xff]
        %v539 = vld [vmem:[%s311 + $0x370] sm:$0xff]
        %v540 = vld [vmem:[%s311 + $0x378] sm:$0xff]
        %v541 = vld [vmem:[%s311 + $0x380] sm:$0xff]
        %v542 = vld [vmem:[%s311 + $0x388] sm:$0xff]
        %v543 = vld [vmem:[%s311 + $0x390] sm:$0xff]
        %v544 = vld [vmem:[%s311 + $0x398] sm:$0xff]
        %v545 = vld [vmem:[%s311 + $0x3a0] sm:$0xff]
        %v546 = vld [vmem:[%s311 + $0x3a8] sm:$0xff]
        %v547 = vld [vmem:[%s311 + $0x3b0] sm:$0xff]
        %v548 = vld [vmem:[%s311 + $0x3b8] sm:$0xff]
        %v549 = vld [vmem:[%s311 + $0x3c0] sm:$0xff]
        %v550 = vld [vmem:[%s311 + $0x3c8] sm:$0xff]
        %v551 = vld [vmem:[%s311 + $0x3d0] sm:$0xff]
        %v552 = vld [vmem:[%s311 + $0x3d8] sm:$0xff]
        %v553 = vld [vmem:[%s311 + $0x3e0] sm:$0xff]
        %v554 = vld [vmem:[%s311 + $0x3e8] sm:$0xff]
        %v555 = vld [vmem:[%s311 + $0x3f0] sm:$0xff]
        %v556 = vld [vmem:[%s311 + $0x3f8] sm:$0xff]
        %v557 = vld [vmem:[#allocation7] sm:$0xff]
        %v558 = vld [vmem:[#allocation7 + $0x8] sm:$0xff]
        %v559 = vld [vmem:[#allocation7 + $0x10] sm:$0xff]
        %v560 = vld [vmem:[#allocation7 + $0x18] sm:$0xff]
        %v561 = vld [vmem:[#allocation7 + $0x20] sm:$0xff]
        %v562 = vld [vmem:[#allocation7 + $0x28] sm:$0xff]
        %v563 = vld [vmem:[#allocation7 + $0x30] sm:$0xff]
        %v564 = vld [vmem:[#allocation7 + $0x38] sm:$0xff]
        %v565 = vld [vmem:[#allocation7 + $0x40] sm:$0xff]
        %v566 = vld [vmem:[#allocation7 + $0x48] sm:$0xff]
        %v567 = vld [vmem:[#allocation7 + $0x50] sm:$0xff]
        %v568 = vld [vmem:[#allocation7 + $0x58] sm:$0xff]
        %v569 = vld [vmem:[#allocation7 + $0x60] sm:$0xff]
        %v570 = vld [vmem:[#allocation7 + $0x68] sm:$0xff]
        %v571 = vld [vmem:[#allocation7 + $0x70] sm:$0xff]
        %v572 = vld [vmem:[#allocation7 + $0x78] sm:$0xff]
        %v573 = vld [vmem:[%s3] sm:$0x1]
        %v575 = vlaneseq
        %v576 = vshrl.u32 %v575, 7
        %v577 = vsub.s32 0, %v576
        %v578 = vrot.slane %v573, %v577
        %580 = vmatprep.subr.mxu0 0.0
        %581 = vmatpush1.msra.mxu0 %v557
        %582 = vmatprep.subr.mxu0 0.0
        %583 = vmatpush1.msra.mxu0 %v558
        %584 = vmatprep.subr.mxu0 0.0
        %585 = vmatpush1.msra.mxu0 %v559
        %586 = vmatprep.subr.mxu0 0.0
        %587 = vmatpush1.msra.mxu0 %v560
        %588 = vmatprep.subr.mxu0 0.0
        %589 = vmatpush1.msra.mxu0 %v561
        %590 = vmatprep.subr.mxu0 0.0
        %591 = vmatpush1.msra.mxu0 %v562
        %592 = vmatprep.subr.mxu0 0.0
        %593 = vmatpush1.msra.mxu0 %v563
        %594 = vmatprep.subr.mxu0 0.0
        %595 = vmatpush1.msra.mxu0 %v564
        %596 = vmatprep.subr.mxu0 0.0
        %597 = vmatpush1.msra.mxu0 %v565
        %598 = vmatprep.subr.mxu0 0.0
        %599 = vmatpush1.msra.mxu0 %v566
        %600 = vmatprep.subr.mxu0 0.0
        %601 = vmatpush1.msra.mxu0 %v567
        %602 = vmatprep.subr.mxu0 0.0
        %603 = vmatpush1.msra.mxu0 %v568
        %604 = vmatprep.subr.mxu0 0.0
        %605 = vmatpush1.msra.mxu0 %v569
        %606 = vmatprep.subr.mxu0 0.0
        %607 = vmatpush1.msra.mxu0 %v570
        %608 = vmatprep.subr.mxu0 0.0
        %609 = vmatpush1.msra.mxu0 %v571
        %610 = vmatprep.subr.mxu0 0.0
        %611 = vmatpush1.msra.mxu0 %v572
        %612 = vmatprep.subr.mxu0 0.0
        %613 = vmatpush1.msra.mxu0 0.0
        %614 = vmatprep.subr.mxu0 0.0
        %615 = vmatpush1.msra.mxu0 0.0
        %616 = vmatprep.subr.mxu0 0.0
        %617 = vmatpush1.msra.mxu0 0.0
        %618 = vmatprep.subr.mxu0 0.0
        %619 = vmatpush1.msra.mxu0 0.0
        %620 = vmatprep.subr.mxu0 0.0
        %621 = vmatpush1.msra.mxu0 0.0
        %622 = vmatprep.subr.mxu0 0.0
        %623 = vmatpush1.msra.mxu0 0.0
        %624 = vmatprep.subr.mxu0 0.0
        %625 = vmatpush1.msra.mxu0 0.0
        %626 = vmatprep.subr.mxu0 0.0
        %627 = vmatpush1.msra.mxu0 0.0
        %628 = vmatprep.subr.mxu0 0.0
        %629 = vmatpush1.msra.mxu0 0.0
        %630 = vmatprep.subr.mxu0 0.0
        %631 = vmatpush1.msra.mxu0 0.0
        %632 = vmatprep.subr.mxu0 0.0
        %633 = vmatpush1.msra.mxu0 0.0
        %634 = vmatprep.subr.mxu0 0.0
        %635 = vmatpush1.msra.mxu0 0.0
        %636 = vmatprep.subr.mxu0 0.0
        %637 = vmatpush1.msra.mxu0 0.0
        %638 = vmatprep.subr.mxu0 0.0
        %639 = vmatpush1.msra.mxu0 0.0
        %640 = vmatprep.subr.mxu0 0.0
        %641 = vmatpush1.msra.mxu0 0.0
        %642 = vmatprep.subr.mxu0 0.0
        %643 = vmatpush1.msra.mxu0 0.0
        %644 = vmatprep.mubr.f32.mxu0 0.0
        %645 = vmatmul.mubr.f32.gmra.mrb[0].mxu0 %v365
        %v646 = vpop.f32.mrb[0].mxu0
        %v647 = vadd.f32 %v578, %v646
        %v648 = vpop.f32.mrb[0].mxu0
        %649 = vmatprep.mubr.f32.mxu0 0.0
        %650 = vmatmul.mubr.f32.gmra.mrb[0].mxu0 %v366
        %v651 = vpop.f32.mrb[0].mxu0
        %v652 = vadd.f32 %v578, %v651
        %v653 = vpop.f32.mrb[0].mxu0
        %654 = vmatprep.mubr.f32.mxu0 0.0
        %655 = vmatmul.mubr.f32.gmra.mrb[0].mxu0 %v367
        %v656 = vpop.f32.mrb[0].mxu0
        %v657 = vadd.f32 %v578, %v656
        %v658 = vpop.f32.mrb[0].mxu0
        %659 = vmatprep.mubr.f32.mxu0 0.0
        %660 = vmatmul.mubr.f32.gmra.mrb[0].mxu0 %v368
        %v661 = vpop.f32.mrb[0].mxu0
        %v662 = vadd.f32 %v578, %v661
        %v663 = vpop.f32.mrb[0].mxu0
        %664 = vmatprep.mubr.f32.mxu0 0.0
        %665 = vmatmul.mubr.f32.gmra.mrb[0].mxu0 %v369
        %v666 = vpop.f32.mrb[0].mxu0
        %v667 = vadd.f32 %v578, %v666
        %v668 = vpop.f32.mrb[0].mxu0
        %669 = vmatprep.mubr.f32.mxu0 0.0
        %670 = vmatmul.mubr.f32.gmra.mrb[0].mxu0 %v370
        %v671 = vpop.f32.mrb[0].mxu0
        %v672 = vadd.f32 %v578, %v671
        %v673 = vpop.f32.mrb[0].mxu0
        %674 = vmatprep.mubr.f32.mxu0 0.0
        %675 = vmatmul.mubr.f32.gmra.mrb[0].mxu0 %v371
        %v676 = vpop.f32.mrb[0].mxu0
        %v677 = vadd.f32 %v578, %v676
        %v678 = vpop.f32.mrb[0].mxu0
        %679 = vmatprep.mubr.f32.mxu0 0.0
        %680 = vmatmul.mubr.f32.gmra.mrb[0].mxu0 %v372
        %v681 = vpop.f32.mrb[0].mxu0
        %v682 = vadd.f32 %v578, %v681
        %v683 = vpop.f32.mrb[0].mxu0
        %684 = vmatprep.mubr.f32.mxu0 0.0
        %685 = vmatmul.mubr.f32.gmra.mrb[0].mxu0 %v373
        %v686 = vpop.f32.mrb[0].mxu0
        %v687 = vadd.f32 %v578, %v686
        %v688 = vpop.f32.mrb[0].mxu0
        %689 = vmatprep.mubr.f32.mxu0 0.0
        %690 = vmatmul.mubr.f32.gmra.mrb[0].mxu0 %v374
        %v691 = vpop.f32.mrb[0].mxu0
        %v692 = vadd.f32 %v578, %v691
        %v693 = vpop.f32.mrb[0].mxu0
        %694 = vmatprep.mubr.f32.mxu0 0.0
        %695 = vmatmul.mubr.f32.gmra.mrb[0].mxu0 %v375
        %v696 = vpop.f32.mrb[0].mxu0
        %v697 = vadd.f32 %v578, %v696
        %v698 = vpop.f32.mrb[0].mxu0
        %699 = vmatprep.mubr.f32.mxu0 0.0
        %700 = vmatmul.mubr.f32.gmra.mrb[0].mxu0 %v376
        %v701 = vpop.f32.mrb[0].mxu0
        %v702 = vadd.f32 %v578, %v701
        %v703 = vpop.f32.mrb[0].mxu0
        %704 = vmatprep.mubr.f32.mxu0 0.0
        %705 = vmatmul.mubr.f32.gmra.mrb[0].mxu0 %v377
        %v706 = vpop.f32.mrb[0].mxu0
        %v707 = vadd.f32 %v578, %v706
        %v708 = vpop.f32.mrb[0].mxu0
        %709 = vmatprep.mubr.f32.mxu0 0.0
        %710 = vmatmul.mubr.f32.gmra.mrb[0].mxu0 %v378
        %v711 = vpop.f32.mrb[0].mxu0
        %v712 = vadd.f32 %v578, %v711
        %v713 = vpop.f32.mrb[0].mxu0
        %714 = vmatprep.mubr.f32.mxu0 0.0
        %715 = vmatmul.mubr.f32.gmra.mrb[0].mxu0 %v379
        %v716 = vpop.f32.mrb[0].mxu0
        %v717 = vadd.f32 %v578, %v716
        %v718 = vpop.f32.mrb[0].mxu0
        %719 = vmatprep.mubr.f32.mxu0 0.0
        %720 = vmatmul.mubr.f32.gmra.mrb[0].mxu0 %v380
        %v721 = vpop.f32.mrb[0].mxu0
        %v722 = vadd.f32 %v578, %v721
        %v723 = vpop.f32.mrb[0].mxu0
        %724 = vmatprep.mubr.f32.mxu0 0.0
        %725 = vmatmul.mubr.f32.gmra.mrb[0].mxu0 %v381
        %v726 = vpop.f32.mrb[0].mxu0
        %v727 = vadd.f32 %v578, %v726
        %v728 = vpop.f32.mrb[0].mxu0
        %729 = vmatprep.mubr.f32.mxu0 0.0
        %730 = vmatmul.mubr.f32.gmra.mrb[0].mxu0 %v382
        %v731 = vpop.f32.mrb[0].mxu0
        %v732 = vadd.f32 %v578, %v731
        %v733 = vpop.f32.mrb[0].mxu0
        %734 = vmatprep.mubr.f32.mxu0 0.0
        %735 = vmatmul.mubr.f32.gmra.mrb[0].mxu0 %v383
        %v736 = vpop.f32.mrb[0].mxu0
        %v737 = vadd.f32 %v578, %v736
        %v738 = vpop.f32.mrb[0].mxu0
        %739 = vmatprep.mubr.f32.mxu0 0.0
        %740 = vmatmul.mubr.f32.gmra.mrb[0].mxu0 %v384
        %v741 = vpop.f32.mrb[0].mxu0
        %v742 = vadd.f32 %v578, %v741
        %v743 = vpop.f32.mrb[0].mxu0
        %744 = vmatprep.mubr.f32.mxu0 0.0
        %745 = vmatmul.mubr.f32.gmra.mrb[0].mxu0 %v385
        %v746 = vpop.f32.mrb[0].mxu0
        %v747 = vadd.f32 %v578, %v746
        %v748 = vpop.f32.mrb[0].mxu0
        %749 = vmatprep.mubr.f32.mxu0 0.0
        %750 = vmatmul.mubr.f32.gmra.mrb[0].mxu0 %v386
        %v751 = vpop.f32.mrb[0].mxu0
        %v752 = vadd.f32 %v578, %v751
        %v753 = vpop.f32.mrb[0].mxu0
        %754 = vmatprep.mubr.f32.mxu0 0.0
        %755 = vmatmul.mubr.f32.gmra.mrb[0].mxu0 %v387
        %v756 = vpop.f32.mrb[0].mxu0
        %v757 = vadd.f32 %v578, %v756
        %v758 = vpop.f32.mrb[0].mxu0
        %759 = vmatprep.mubr.f32.mxu0 0.0
        %760 = vmatmul.mubr.f32.gmra.mrb[0].mxu0 %v388
        %v761 = vpop.f32.mrb[0].mxu0
        %v762 = vadd.f32 %v578, %v761
        %v763 = vpop.f32.mrb[0].mxu0
        %764 = vmatprep.mubr.f32.mxu0 0.0
        %765 = vmatmul.mubr.f32.gmra.mrb[0].mxu0 %v389
        %v766 = vpop.f32.mrb[0].mxu0
        %v767 = vadd.f32 %v578, %v766
        %v768 = vpop.f32.mrb[0].mxu0
        %769 = vmatprep.mubr.f32.mxu0 0.0
        %770 = vmatmul.mubr.f32.gmra.mrb[0].mxu0 %v390
        %v771 = vpop.f32.mrb[0].mxu0
        %v772 = vadd.f32 %v578, %v771
        %v773 = vpop.f32.mrb[0].mxu0
        %774 = vmatprep.mubr.f32.mxu0 0.0
        %775 = vmatmul.mubr.f32.gmra.mrb[0].mxu0 %v391
        %v776 = vpop.f32.mrb[0].mxu0
        %v777 = vadd.f32 %v578, %v776
        %v778 = vpop.f32.mrb[0].mxu0
        %779 = vmatprep.mubr.f32.mxu0 0.0
        %780 = vmatmul.mubr.f32.gmra.mrb[0].mxu0 %v392
        %v781 = vpop.f32.mrb[0].mxu0
        %v782 = vadd.f32 %v578, %v781
        %v783 = vpop.f32.mrb[0].mxu0
        %784 = vmatprep.mubr.f32.mxu0 0.0
        %785 = vmatmul.mubr.f32.gmra.mrb[0].mxu0 %v393
        %v786 = vpop.f32.mrb[0].mxu0
        %v787 = vadd.f32 %v578, %v786
        %v788 = vpop.f32.mrb[0].mxu0
        %789 = vmatprep.mubr.f32.mxu0 0.0
        %790 = vmatmul.mubr.f32.gmra.mrb[0].mxu0 %v394
        %v791 = vpop.f32.mrb[0].mxu0
        %v792 = vadd.f32 %v578, %v791
        %v793 = vpop.f32.mrb[0].mxu0
        %794 = vmatprep.mubr.f32.mxu0 0.0
        %795 = vmatmul.mubr.f32.gmra.mrb[0].mxu0 %v395
        %v796 = vpop.f32.mrb[0].mxu0
        %v797 = vadd.f32 %v578, %v796
        %v798 = vpop.f32.mrb[0].mxu0
        %799 = vmatprep.mubr.f32.mxu0 0.0
        %800 = vmatmul.mubr.f32.gmra.mrb[0].mxu0 %v396
        %v801 = vpop.f32.mrb[0].mxu0
        %v802 = vadd.f32 %v578, %v801
        %v803 = vpop.f32.mrb[0].mxu0
        %804 = vmatprep.mubr.f32.mxu0 0.0
        %805 = vmatmul.mubr.f32.gmra.mrb[0].mxu0 %v397
        %v806 = vpop.f32.mrb[0].mxu0
        %v807 = vadd.f32 %v578, %v806
        %v808 = vpop.f32.mrb[0].mxu0
        %809 = vmatprep.mubr.f32.mxu0 0.0
        %810 = vmatmul.mubr.f32.gmra.mrb[0].mxu0 %v398
        %v811 = vpop.f32.mrb[0].mxu0
        %v812 = vadd.f32 %v578, %v811
        %v813 = vpop.f32.mrb[0].mxu0
        %814 = vmatprep.mubr.f32.mxu0 0.0
        %815 = vmatmul.mubr.f32.gmra.mrb[0].mxu0 %v399
        %v816 = vpop.f32.mrb[0].mxu0
        %v817 = vadd.f32 %v578, %v816
        %v818 = vpop.f32.mrb[0].mxu0
        %819 = vmatprep.mubr.f32.mxu0 0.0
        %820 = vmatmul.mubr.f32.gmra.mrb[0].mxu0 %v400
        %v821 = vpop.f32.mrb[0].mxu0
        %v822 = vadd.f32 %v578, %v821
        %v823 = vpop.f32.mrb[0].mxu0
        %824 = vmatprep.mubr.f32.mxu0 0.0
        %825 = vmatmul.mubr.f32.gmra.mrb[0].mxu0 %v401
        %v826 = vpop.f32.mrb[0].mxu0
        %v827 = vadd.f32 %v578, %v826
        %v828 = vpop.f32.mrb[0].mxu0
        %829 = vmatprep.mubr.f32.mxu0 0.0
        %830 = vmatmul.mubr.f32.gmra.mrb[0].mxu0 %v402
        %v831 = vpop.f32.mrb[0].mxu0
        %v832 = vadd.f32 %v578, %v831
        %v833 = vpop.f32.mrb[0].mxu0
        %834 = vmatprep.mubr.f32.mxu0 0.0
        %835 = vmatmul.mubr.f32.gmra.mrb[0].mxu0 %v403
        %v836 = vpop.f32.mrb[0].mxu0
        %v837 = vadd.f32 %v578, %v836
        %v838 = vpop.f32.mrb[0].mxu0
        %839 = vmatprep.mubr.f32.mxu0 0.0
        %840 = vmatmul.mubr.f32.gmra.mrb[0].mxu0 %v404
        %v841 = vpop.f32.mrb[0].mxu0
        %v842 = vadd.f32 %v578, %v841
        %v843 = vpop.f32.mrb[0].mxu0
        %844 = vmatprep.mubr.f32.mxu0 0.0
        %845 = vmatmul.mubr.f32.gmra.mrb[0].mxu0 %v405
        %v846 = vpop.f32.mrb[0].mxu0
        %v847 = vadd.f32 %v578, %v846
        %v848 = vpop.f32.mrb[0].mxu0
        %849 = vmatprep.mubr.f32.mxu0 0.0
        %850 = vmatmul.mubr.f32.gmra.mrb[0].mxu0 %v406
        %v851 = vpop.f32.mrb[0].mxu0
        %v852 = vadd.f32 %v578, %v851
        %v853 = vpop.f32.mrb[0].mxu0
        %854 = vmatprep.mubr.f32.mxu0 0.0
        %855 = vmatmul.mubr.f32.gmra.mrb[0].mxu0 %v407
        %v856 = vpop.f32.mrb[0].mxu0
        %v857 = vadd.f32 %v578, %v856
        %v858 = vpop.f32.mrb[0].mxu0
        %859 = vmatprep.mubr.f32.mxu0 0.0
        %860 = vmatmul.mubr.f32.gmra.mrb[0].mxu0 %v408
        %v861 = vpop.f32.mrb[0].mxu0
        %v862 = vadd.f32 %v578, %v861
        %v863 = vpop.f32.mrb[0].mxu0
        %864 = vmatprep.mubr.f32.mxu0 0.0
        %865 = vmatmul.mubr.f32.gmra.mrb[0].mxu0 %v409
        %v866 = vpop.f32.mrb[0].mxu0
        %v867 = vadd.f32 %v578, %v866
        %v868 = vpop.f32.mrb[0].mxu0
        %869 = vmatprep.mubr.f32.mxu0 0.0
        %870 = vmatmul.mubr.f32.gmra.mrb[0].mxu0 %v410
        %v871 = vpop.f32.mrb[0].mxu0
        %v872 = vadd.f32 %v578, %v871
        %v873 = vpop.f32.mrb[0].mxu0
        %874 = vmatprep.mubr.f32.mxu0 0.0
        %875 = vmatmul.mubr.f32.gmra.mrb[0].mxu0 %v411
        %v876 = vpop.f32.mrb[0].mxu0
        %v877 = vadd.f32 %v578, %v876
        %v878 = vpop.f32.mrb[0].mxu0
        %879 = vmatprep.mubr.f32.mxu0 0.0
        %880 = vmatmul.mubr.f32.gmra.mrb[0].mxu0 %v412
        %v881 = vpop.f32.mrb[0].mxu0
        %v882 = vadd.f32 %v578, %v881
        %v883 = vpop.f32.mrb[0].mxu0
        %884 = vmatprep.mubr.f32.mxu0 0.0
        %885 = vmatmul.mubr.f32.gmra.mrb[0].mxu0 %v413
        %v886 = vpop.f32.mrb[0].mxu0
        %v887 = vadd.f32 %v578, %v886
        %v888 = vpop.f32.mrb[0].mxu0
        %889 = vmatprep.mubr.f32.mxu0 0.0
        %890 = vmatmul.mubr.f32.gmra.mrb[0].mxu0 %v414
        %v891 = vpop.f32.mrb[0].mxu0
        %v892 = vadd.f32 %v578, %v891
        %v893 = vpop.f32.mrb[0].mxu0
        %894 = vmatprep.mubr.f32.mxu0 0.0
        %895 = vmatmul.mubr.f32.gmra.mrb[0].mxu0 %v415
        %v896 = vpop.f32.mrb[0].mxu0
        %v897 = vadd.f32 %v578, %v896
        %v898 = vpop.f32.mrb[0].mxu0
        %899 = vmatprep.mubr.f32.mxu0 0.0
        %900 = vmatmul.mubr.f32.gmra.mrb[0].mxu0 %v416
        %v901 = vpop.f32.mrb[0].mxu0
        %v902 = vadd.f32 %v578, %v901
        %v903 = vpop.f32.mrb[0].mxu0
        %904 = vmatprep.mubr.f32.mxu0 0.0
        %905 = vmatmul.mubr.f32.gmra.mrb[0].mxu0 %v417
        %v906 = vpop.f32.mrb[0].mxu0
        %v907 = vadd.f32 %v578, %v906
        %v908 = vpop.f32.mrb[0].mxu0
        %909 = vmatprep.mubr.f32.mxu0 0.0
        %910 = vmatmul.mubr.f32.gmra.mrb[0].mxu0 %v418
        %v911 = vpop.f32.mrb[0].mxu0
        %v912 = vadd.f32 %v578, %v911
        %v913 = vpop.f32.mrb[0].mxu0
        %914 = vmatprep.mubr.f32.mxu0 0.0
        %915 = vmatmul.mubr.f32.gmra.mrb[0].mxu0 %v419
        %v916 = vpop.f32.mrb[0].mxu0
        %v917 = vadd.f32 %v578, %v916
        %v918 = vpop.f32.mrb[0].mxu0
        %919 = vmatprep.mubr.f32.mxu0 0.0
        %920 = vmatmul.mubr.f32.gmra.mrb[0].mxu0 %v420
        %v921 = vpop.f32.mrb[0].mxu0
        %v922 = vadd.f32 %v578, %v921
        %v923 = vpop.f32.mrb[0].mxu0
        %924 = vmatprep.mubr.f32.mxu0 0.0
        %925 = vmatmul.mubr.f32.gmra.mrb[0].mxu0 %v421
        %v926 = vpop.f32.mrb[0].mxu0
        %v927 = vadd.f32 %v578, %v926
        %v928 = vpop.f32.mrb[0].mxu0
        %929 = vmatprep.mubr.f32.mxu0 0.0
        %930 = vmatmul.mubr.f32.gmra.mrb[0].mxu0 %v422
        %v931 = vpop.f32.mrb[0].mxu0
        %v932 = vadd.f32 %v578, %v931
        %v933 = vpop.f32.mrb[0].mxu0
        %934 = vmatprep.mubr.f32.mxu0 0.0
        %935 = vmatmul.mubr.f32.gmra.mrb[0].mxu0 %v423
        %v936 = vpop.f32.mrb[0].mxu0
        %v937 = vadd.f32 %v578, %v936
        %v938 = vpop.f32.mrb[0].mxu0
        %939 = vmatprep.mubr.f32.mxu0 0.0
        %940 = vmatmul.mubr.f32.gmra.mrb[0].mxu0 %v424
        %v941 = vpop.f32.mrb[0].mxu0
        %v942 = vadd.f32 %v578, %v941
        %v943 = vpop.f32.mrb[0].mxu0
        %944 = vmatprep.mubr.f32.mxu0 0.0
        %945 = vmatmul.mubr.f32.gmra.mrb[0].mxu0 %v425
        %v946 = vpop.f32.mrb[0].mxu0
        %v947 = vadd.f32 %v578, %v946
        %v948 = vpop.f32.mrb[0].mxu0
        %949 = vmatprep.mubr.f32.mxu0 0.0
        %950 = vmatmul.mubr.f32.gmra.mrb[0].mxu0 %v426
        %v951 = vpop.f32.mrb[0].mxu0
        %v952 = vadd.f32 %v578, %v951
        %v953 = vpop.f32.mrb[0].mxu0
        %954 = vmatprep.mubr.f32.mxu0 0.0
        %955 = vmatmul.mubr.f32.gmra.mrb[0].mxu0 %v427
        %v956 = vpop.f32.mrb[0].mxu0
        %v957 = vadd.f32 %v578, %v956
        %v958 = vpop.f32.mrb[0].mxu0
        %959 = vmatprep.mubr.f32.mxu0 0.0
        %960 = vmatmul.mubr.f32.gmra.mrb[0].mxu0 %v428
        %v961 = vpop.f32.mrb[0].mxu0
        %v962 = vadd.f32 %v578, %v961
        %v963 = vpop.f32.mrb[0].mxu0
        %964 = vdwg.mxu0
        %v965 = vld [vmem:[#allocation8] sm:$0xff]
        %v966 = vld [vmem:[#allocation8 + $0x8] sm:$0xff]
        %v967 = vld [vmem:[#allocation8 + $0x10] sm:$0xff]
        %v968 = vld [vmem:[#allocation8 + $0x18] sm:$0xff]
        %v969 = vld [vmem:[#allocation8 + $0x20] sm:$0xff]
        %v970 = vld [vmem:[#allocation8 + $0x28] sm:$0xff]
        %v971 = vld [vmem:[#allocation8 + $0x30] sm:$0xff]
        %v972 = vld [vmem:[#allocation8 + $0x38] sm:$0xff]
        %v973 = vld [vmem:[#allocation8 + $0x40] sm:$0xff]
        %v974 = vld [vmem:[#allocation8 + $0x48] sm:$0xff]
        %v975 = vld [vmem:[#allocation8 + $0x50] sm:$0xff]
        %v976 = vld [vmem:[#allocation8 + $0x58] sm:$0xff]
        %v977 = vld [vmem:[#allocation8 + $0x60] sm:$0xff]
        %v978 = vld [vmem:[#allocation8 + $0x68] sm:$0xff]
        %v979 = vld [vmem:[#allocation8 + $0x70] sm:$0xff]
        %v980 = vld [vmem:[#allocation8 + $0x78] sm:$0xff]
        %v981 = vld [vmem:[#allocation8 + $0x80] sm:$0xff]
        %v982 = vld [vmem:[#allocation8 + $0x88] sm:$0xff]
        %v983 = vld [vmem:[#allocation8 + $0x90] sm:$0xff]
        %v984 = vld [vmem:[#allocation8 + $0x98] sm:$0xff]
        %v985 = vld [vmem:[#allocation8 + $0xa0] sm:$0xff]
        %v986 = vld [vmem:[#allocation8 + $0xa8] sm:$0xff]
        %v987 = vld [vmem:[#allocation8 + $0xb0] sm:$0xff]
        %v988 = vld [vmem:[#allocation8 + $0xb8] sm:$0xff]
        %v989 = vld [vmem:[#allocation8 + $0xc0] sm:$0xff]
        %v990 = vld [vmem:[#allocation8 + $0xc8] sm:$0xff]
        %v991 = vld [vmem:[#allocation8 + $0xd0] sm:$0xff]
        %v992 = vld [vmem:[#allocation8 + $0xd8] sm:$0xff]
        %v993 = vld [vmem:[#allocation8 + $0xe0] sm:$0xff]
        %v994 = vld [vmem:[#allocation8 + $0xe8] sm:$0xff]
        %v995 = vld [vmem:[#allocation8 + $0xf0] sm:$0xff]
        %v996 = vld [vmem:[#allocation8 + $0xf8] sm:$0xff]
        %v997 = vld [vmem:[%s5] sm:$0x1]
        %v999 = vlaneseq
        %v1000 = vshrl.u32 %v999, 7
        %v1001 = vsub.s32 0, %v1000
        %v1002 = vrot.slane %v997, %v1001
        %1004 = vmatprep.subr.mxu0 0.0
        %1005 = vmatpush1.msra.mxu0 %v965
        %1006 = vmatprep.subr.mxu0 0.0
        %1007 = vmatpush1.msra.mxu0 %v966
        %1008 = vmatprep.subr.mxu0 0.0
        %1009 = vmatpush1.msra.mxu0 %v967
        %1010 = vmatprep.subr.mxu0 0.0
        %1011 = vmatpush1.msra.mxu0 %v968
        %1012 = vmatprep.subr.mxu0 0.0
        %1013 = vmatpush1.msra.mxu0 %v969
        %1014 = vmatprep.subr.mxu0 0.0
        %1015 = vmatpush1.msra.mxu0 %v970
        %1016 = vmatprep.subr.mxu0 0.0
        %1017 = vmatpush1.msra.mxu0 %v971
        %1018 = vmatprep.subr.mxu0 0.0
        %1019 = vmatpush1.msra.mxu0 %v972
        %1020 = vmatprep.subr.mxu0 0.0
        %1021 = vmatpush1.msra.mxu0 %v973
        %1022 = vmatprep.subr.mxu0 0.0
        %1023 = vmatpush1.msra.mxu0 %v974
        %1024 = vmatprep.subr.mxu0 0.0
        %1025 = vmatpush1.msra.mxu0 %v975
        %1026 = vmatprep.subr.mxu0 0.0
        %1027 = vmatpush1.msra.mxu0 %v976
        %1028 = vmatprep.subr.mxu0 0.0
        %1029 = vmatpush1.msra.mxu0 %v977
        %1030 = vmatprep.subr.mxu0 0.0
        %1031 = vmatpush1.msra.mxu0 %v978
        %1032 = vmatprep.subr.mxu0 0.0
        %1033 = vmatpush1.msra.mxu0 %v979
        %1034 = vmatprep.subr.mxu0 0.0
        %1035 = vmatpush1.msra.mxu0 %v980
        %1036 = vmatprep.subr.mxu0 0.0
        %1037 = vmatpush1.msra.mxu0 %v981
        %1038 = vmatprep.subr.mxu0 0.0
        %1039 = vmatpush1.msra.mxu0 %v982
        %1040 = vmatprep.subr.mxu0 0.0
        %1041 = vmatpush1.msra.mxu0 %v983
        %1042 = vmatprep.subr.mxu0 0.0
        %1043 = vmatpush1.msra.mxu0 %v984
        %1044 = vmatprep.subr.mxu0 0.0
        %1045 = vmatpush1.msra.mxu0 %v985
        %1046 = vmatprep.subr.mxu0 0.0
        %1047 = vmatpush1.msra.mxu0 %v986
        %1048 = vmatprep.subr.mxu0 0.0
        %1049 = vmatpush1.msra.mxu0 %v987
        %1050 = vmatprep.subr.mxu0 0.0
        %1051 = vmatpush1.msra.mxu0 %v988
        %1052 = vmatprep.subr.mxu0 0.0
        %1053 = vmatpush1.msra.mxu0 %v989
        %1054 = vmatprep.subr.mxu0 0.0
        %1055 = vmatpush1.msra.mxu0 %v990
        %1056 = vmatprep.subr.mxu0 0.0
        %1057 = vmatpush1.msra.mxu0 %v991
        %1058 = vmatprep.subr.mxu0 0.0
        %1059 = vmatpush1.msra.mxu0 %v992
        %1060 = vmatprep.subr.mxu0 0.0
        %1061 = vmatpush1.msra.mxu0 %v993
        %1062 = vmatprep.subr.mxu0 0.0
        %1063 = vmatpush1.msra.mxu0 %v994
        %1064 = vmatprep.subr.mxu0 0.0
        %1065 = vmatpush1.msra.mxu0 %v995
        %1066 = vmatprep.subr.mxu0 0.0
        %1067 = vmatpush1.msra.mxu0 %v996
        %1068 = vmatprep.mubr.f32.mxu0 %v430
        %1069 = vmatmul.mubr.f32.gmra.mrb[0].mxu0 %v429
        %v1070 = vpop.f32.mrb[0].mxu0
        %v1071 = vadd.f32 %v1002, %v1070
        %v1072 = vpop.f32.mrb[0].mxu0
        %1073 = vmatprep.mubr.f32.mxu0 %v432
        %1074 = vmatmul.mubr.f32.gmra.mrb[0].mxu0 %v431
        %v1075 = vpop.f32.mrb[0].mxu0
        %v1076 = vadd.f32 %v1002, %v1075
        %v1077 = vpop.f32.mrb[0].mxu0
        %1078 = vmatprep.mubr.f32.mxu0 %v434
        %1079 = vmatmul.mubr.f32.gmra.mrb[0].mxu0 %v433
        %v1080 = vpop.f32.mrb[0].mxu0
        %v1081 = vadd.f32 %v1002, %v1080
        %v1082 = vpop.f32.mrb[0].mxu0
        %1083 = vmatprep.mubr.f32.mxu0 %v436
        %1084 = vmatmul.mubr.f32.gmra.mrb[0].mxu0 %v435
        %v1085 = vpop.f32.mrb[0].mxu0
        %v1086 = vadd.f32 %v1002, %v1085
        %v1087 = vpop.f32.mrb[0].mxu0
        %1088 = vmatprep.mubr.f32.mxu0 %v438
        %1089 = vmatmul.mubr.f32.gmra.mrb[0].mxu0 %v437
        %v1090 = vpop.f32.mrb[0].mxu0
        %v1091 = vadd.f32 %v1002, %v1090
        %v1092 = vpop.f32.mrb[0].mxu0
        %1093 = vmatprep.mubr.f32.mxu0 %v440
        %1094 = vmatmul.mubr.f32.gmra.mrb[0].mxu0 %v439
        %v1095 = vpop.f32.mrb[0].mxu0
        %v1096 = vadd.f32 %v1002, %v1095
        %v1097 = vpop.f32.mrb[0].mxu0
        %1098 = vmatprep.mubr.f32.mxu0 %v442
        %1099 = vmatmul.mubr.f32.gmra.mrb[0].mxu0 %v441
        %v1100 = vpop.f32.mrb[0].mxu0
        %v1101 = vadd.f32 %v1002, %v1100
        %v1102 = vpop.f32.mrb[0].mxu0
        %1103 = vmatprep.mubr.f32.mxu0 %v444
        %1104 = vmatmul.mubr.f32.gmra.mrb[0].mxu0 %v443
        %v1105 = vpop.f32.mrb[0].mxu0
        %v1106 = vadd.f32 %v1002, %v1105
        %v1107 = vpop.f32.mrb[0].mxu0
        %1108 = vmatprep.mubr.f32.mxu0 %v446
        %1109 = vmatmul.mubr.f32.gmra.mrb[0].mxu0 %v445
        %v1110 = vpop.f32.mrb[0].mxu0
        %v1111 = vadd.f32 %v1002, %v1110
        %v1112 = vpop.f32.mrb[0].mxu0
        %1113 = vmatprep.mubr.f32.mxu0 %v448
        %1114 = vmatmul.mubr.f32.gmra.mrb[0].mxu0 %v447
        %v1115 = vpop.f32.mrb[0].mxu0
        %v1116 = vadd.f32 %v1002, %v1115
        %v1117 = vpop.f32.mrb[0].mxu0
        %1118 = vmatprep.mubr.f32.mxu0 %v450
        %1119 = vmatmul.mubr.f32.gmra.mrb[0].mxu0 %v449
        %v1120 = vpop.f32.mrb[0].mxu0
        %v1121 = vadd.f32 %v1002, %v1120
        %v1122 = vpop.f32.mrb[0].mxu0
        %1123 = vmatprep.mubr.f32.mxu0 %v452
        %1124 = vmatmul.mubr.f32.gmra.mrb[0].mxu0 %v451
        %v1125 = vpop.f32.mrb[0].mxu0
        %v1126 = vadd.f32 %v1002, %v1125
        %v1127 = vpop.f32.mrb[0].mxu0
        %1128 = vmatprep.mubr.f32.mxu0 %v454
        %1129 = vmatmul.mubr.f32.gmra.mrb[0].mxu0 %v453
        %v1130 = vpop.f32.mrb[0].mxu0
        %v1131 = vadd.f32 %v1002, %v1130
        %v1132 = vpop.f32.mrb[0].mxu0
        %1133 = vmatprep.mubr.f32.mxu0 %v456
        %1134 = vmatmul.mubr.f32.gmra.mrb[0].mxu0 %v455
        %v1135 = vpop.f32.mrb[0].mxu0
        %v1136 = vadd.f32 %v1002, %v1135
        %v1137 = vpop.f32.mrb[0].mxu0
        %1138 = vmatprep.mubr.f32.mxu0 %v458
        %1139 = vmatmul.mubr.f32.gmra.mrb[0].mxu0 %v457
        %v1140 = vpop.f32.mrb[0].mxu0
        %v1141 = vadd.f32 %v1002, %v1140
        %v1142 = vpop.f32.mrb[0].mxu0
        %1143 = vmatprep.mubr.f32.mxu0 %v460
        %1144 = vmatmul.mubr.f32.gmra.mrb[0].mxu0 %v459
        %v1145 = vpop.f32.mrb[0].mxu0
        %v1146 = vadd.f32 %v1002, %v1145
        %v1147 = vpop.f32.mrb[0].mxu0
        %1148 = vmatprep.mubr.f32.mxu0 %v462
        %1149 = vmatmul.mubr.f32.gmra.mrb[0].mxu0 %v461
        %v1150 = vpop.f32.mrb[0].mxu0
        %v1151 = vadd.f32 %v1002, %v1150
        %v1152 = vpop.f32.mrb[0].mxu0
        %1153 = vmatprep.mubr.f32.mxu0 %v464
        %1154 = vmatmul.mubr.f32.gmra.mrb[0].mxu0 %v463
        %v1155 = vpop.f32.mrb[0].mxu0
        %v1156 = vadd.f32 %v1002, %v1155
        %v1157 = vpop.f32.mrb[0].mxu0
        %1158 = vmatprep.mubr.f32.mxu0 %v466
        %1159 = vmatmul.mubr.f32.gmra.mrb[0].mxu0 %v465
        %v1160 = vpop.f32.mrb[0].mxu0
        %v1161 = vadd.f32 %v1002, %v1160
        %v1162 = vpop.f32.mrb[0].mxu0
        %1163 = vmatprep.mubr.f32.mxu0 %v468
        %1164 = vmatmul.mubr.f32.gmra.mrb[0].mxu0 %v467
        %v1165 = vpop.f32.mrb[0].mxu0
        %v1166 = vadd.f32 %v1002, %v1165
        %v1167 = vpop.f32.mrb[0].mxu0
        %1168 = vmatprep.mubr.f32.mxu0 %v470
        %1169 = vmatmul.mubr.f32.gmra.mrb[0].mxu0 %v469
        %v1170 = vpop.f32.mrb[0].mxu0
        %v1171 = vadd.f32 %v1002, %v1170
        %v1172 = vpop.f32.mrb[0].mxu0
        %1173 = vmatprep.mubr.f32.mxu0 %v472
        %1174 = vmatmul.mubr.f32.gmra.mrb[0].mxu0 %v471
        %v1175 = vpop.f32.mrb[0].mxu0
        %v1176 = vadd.f32 %v1002, %v1175
        %v1177 = vpop.f32.mrb[0].mxu0
        %1178 = vmatprep.mubr.f32.mxu0 %v474
        %1179 = vmatmul.mubr.f32.gmra.mrb[0].mxu0 %v473
        %v1180 = vpop.f32.mrb[0].mxu0
        %v1181 = vadd.f32 %v1002, %v1180
        %v1182 = vpop.f32.mrb[0].mxu0
        %1183 = vmatprep.mubr.f32.mxu0 %v476
        %1184 = vmatmul.mubr.f32.gmra.mrb[0].mxu0 %v475
        %v1185 = vpop.f32.mrb[0].mxu0
        %v1186 = vadd.f32 %v1002, %v1185
        %v1187 = vpop.f32.mrb[0].mxu0
        %1188 = vmatprep.mubr.f32.mxu0 %v478
        %1189 = vmatmul.mubr.f32.gmra.mrb[0].mxu0 %v477
        %v1190 = vpop.f32.mrb[0].mxu0
        %v1191 = vadd.f32 %v1002, %v1190
        %v1192 = vpop.f32.mrb[0].mxu0
        %1193 = vmatprep.mubr.f32.mxu0 %v480
        %1194 = vmatmul.mubr.f32.gmra.mrb[0].mxu0 %v479
        %v1195 = vpop.f32.mrb[0].mxu0
        %v1196 = vadd.f32 %v1002, %v1195
        %v1197 = vpop.f32.mrb[0].mxu0
        %1198 = vmatprep.mubr.f32.mxu0 %v482
        %1199 = vmatmul.mubr.f32.gmra.mrb[0].mxu0 %v481
        %v1200 = vpop.f32.mrb[0].mxu0
        %v1201 = vadd.f32 %v1002, %v1200
        %v1202 = vpop.f32.mrb[0].mxu0
        %1203 = vmatprep.mubr.f32.mxu0 %v484
        %1204 = vmatmul.mubr.f32.gmra.mrb[0].mxu0 %v483
        %v1205 = vpop.f32.mrb[0].mxu0
        %v1206 = vadd.f32 %v1002, %v1205
        %v1207 = vpop.f32.mrb[0].mxu0
        %1208 = vmatprep.mubr.f32.mxu0 %v486
        %1209 = vmatmul.mubr.f32.gmra.mrb[0].mxu0 %v485
        %v1210 = vpop.f32.mrb[0].mxu0
        %v1211 = vadd.f32 %v1002, %v1210
        %v1212 = vpop.f32.mrb[0].mxu0
        %1213 = vmatprep.mubr.f32.mxu0 %v488
        %1214 = vmatmul.mubr.f32.gmra.mrb[0].mxu0 %v487
        %v1215 = vpop.f32.mrb[0].mxu0
        %v1216 = vadd.f32 %v1002, %v1215
        %v1217 = vpop.f32.mrb[0].mxu0
        %1218 = vmatprep.mubr.f32.mxu0 %v490
        %1219 = vmatmul.mubr.f32.gmra.mrb[0].mxu0 %v489
        %v1220 = vpop.f32.mrb[0].mxu0
        %v1221 = vadd.f32 %v1002, %v1220
        %v1222 = vpop.f32.mrb[0].mxu0
        %1223 = vmatprep.mubr.f32.mxu0 %v492
        %1224 = vmatmul.mubr.f32.gmra.mrb[0].mxu0 %v491
        %v1225 = vpop.f32.mrb[0].mxu0
        %v1226 = vadd.f32 %v1002, %v1225
        %v1227 = vpop.f32.mrb[0].mxu0
        %1228 = vmatprep.mubr.f32.mxu0 %v494
        %1229 = vmatmul.mubr.f32.gmra.mrb[0].mxu0 %v493
        %v1230 = vpop.f32.mrb[0].mxu0
        %v1231 = vadd.f32 %v1002, %v1230
        %v1232 = vpop.f32.mrb[0].mxu0
        %1233 = vmatprep.mubr.f32.mxu0 %v496
        %1234 = vmatmul.mubr.f32.gmra.mrb[0].mxu0 %v495
        %v1235 = vpop.f32.mrb[0].mxu0
        %v1236 = vadd.f32 %v1002, %v1235
        %v1237 = vpop.f32.mrb[0].mxu0
        %1238 = vmatprep.mubr.f32.mxu0 %v498
        %1239 = vmatmul.mubr.f32.gmra.mrb[0].mxu0 %v497
        %v1240 = vpop.f32.mrb[0].mxu0
        %v1241 = vadd.f32 %v1002, %v1240
        %v1242 = vpop.f32.mrb[0].mxu0
        %1243 = vmatprep.mubr.f32.mxu0 %v500
        %1244 = vmatmul.mubr.f32.gmra.mrb[0].mxu0 %v499
        %v1245 = vpop.f32.mrb[0].mxu0
        %v1246 = vadd.f32 %v1002, %v1245
        %v1247 = vpop.f32.mrb[0].mxu0
        %1248 = vmatprep.mubr.f32.mxu0 %v502
        %1249 = vmatmul.mubr.f32.gmra.mrb[0].mxu0 %v501
        %v1250 = vpop.f32.mrb[0].mxu0
        %v1251 = vadd.f32 %v1002, %v1250
        %v1252 = vpop.f32.mrb[0].mxu0
        %1253 = vmatprep.mubr.f32.mxu0 %v504
        %1254 = vmatmul.mubr.f32.gmra.mrb[0].mxu0 %v503
        %v1255 = vpop.f32.mrb[0].mxu0
        %v1256 = vadd.f32 %v1002, %v1255
        %v1257 = vpop.f32.mrb[0].mxu0
        %1258 = vmatprep.mubr.f32.mxu0 %v506
        %1259 = vmatmul.mubr.f32.gmra.mrb[0].mxu0 %v505
        %v1260 = vpop.f32.mrb[0].mxu0
        %v1261 = vadd.f32 %v1002, %v1260
        %v1262 = vpop.f32.mrb[0].mxu0
        %1263 = vmatprep.mubr.f32.mxu0 %v508
        %1264 = vmatmul.mubr.f32.gmra.mrb[0].mxu0 %v507
        %v1265 = vpop.f32.mrb[0].mxu0
        %v1266 = vadd.f32 %v1002, %v1265
        %v1267 = vpop.f32.mrb[0].mxu0
        %1268 = vmatprep.mubr.f32.mxu0 %v510
        %1269 = vmatmul.mubr.f32.gmra.mrb[0].mxu0 %v509
        %v1270 = vpop.f32.mrb[0].mxu0
        %v1271 = vadd.f32 %v1002, %v1270
        %v1272 = vpop.f32.mrb[0].mxu0
        %1273 = vmatprep.mubr.f32.mxu0 %v512
        %1274 = vmatmul.mubr.f32.gmra.mrb[0].mxu0 %v511
        %v1275 = vpop.f32.mrb[0].mxu0
        %v1276 = vadd.f32 %v1002, %v1275
        %v1277 = vpop.f32.mrb[0].mxu0
        %1278 = vmatprep.mubr.f32.mxu0 %v514
        %1279 = vmatmul.mubr.f32.gmra.mrb[0].mxu0 %v513
        %v1280 = vpop.f32.mrb[0].mxu0
        %v1281 = vadd.f32 %v1002, %v1280
        %v1282 = vpop.f32.mrb[0].mxu0
        %1283 = vmatprep.mubr.f32.mxu0 %v516
        %1284 = vmatmul.mubr.f32.gmra.mrb[0].mxu0 %v515
        %v1285 = vpop.f32.mrb[0].mxu0
        %v1286 = vadd.f32 %v1002, %v1285
        %v1287 = vpop.f32.mrb[0].mxu0
        %1288 = vmatprep.mubr.f32.mxu0 %v518
        %1289 = vmatmul.mubr.f32.gmra.mrb[0].mxu0 %v517
        %v1290 = vpop.f32.mrb[0].mxu0
        %v1291 = vadd.f32 %v1002, %v1290
        %v1292 = vpop.f32.mrb[0].mxu0
        %1293 = vmatprep.mubr.f32.mxu0 %v520
        %1294 = vmatmul.mubr.f32.gmra.mrb[0].mxu0 %v519
        %v1295 = vpop.f32.mrb[0].mxu0
        %v1296 = vadd.f32 %v1002, %v1295
        %v1297 = vpop.f32.mrb[0].mxu0
        %1298 = vmatprep.mubr.f32.mxu0 %v522
        %1299 = vmatmul.mubr.f32.gmra.mrb[0].mxu0 %v521
        %v1300 = vpop.f32.mrb[0].mxu0
        %v1301 = vadd.f32 %v1002, %v1300
        %v1302 = vpop.f32.mrb[0].mxu0
        %1303 = vmatprep.mubr.f32.mxu0 %v524
        %1304 = vmatmul.mubr.f32.gmra.mrb[0].mxu0 %v523
        %v1305 = vpop.f32.mrb[0].mxu0
        %v1306 = vadd.f32 %v1002, %v1305
        %v1307 = vpop.f32.mrb[0].mxu0
        %1308 = vmatprep.mubr.f32.mxu0 %v526
        %1309 = vmatmul.mubr.f32.gmra.mrb[0].mxu0 %v525
        %v1310 = vpop.f32.mrb[0].mxu0
        %v1311 = vadd.f32 %v1002, %v1310
        %v1312 = vpop.f32.mrb[0].mxu0
        %1313 = vmatprep.mubr.f32.mxu0 %v528
        %1314 = vmatmul.mubr.f32.gmra.mrb[0].mxu0 %v527
        %v1315 = vpop.f32.mrb[0].mxu0
        %v1316 = vadd.f32 %v1002, %v1315
        %v1317 = vpop.f32.mrb[0].mxu0
        %1318 = vmatprep.mubr.f32.mxu0 %v530
        %1319 = vmatmul.mubr.f32.gmra.mrb[0].mxu0 %v529
        %v1320 = vpop.f32.mrb[0].mxu0
        %v1321 = vadd.f32 %v1002, %v1320
        %v1322 = vpop.f32.mrb[0].mxu0
        %1323 = vmatprep.mubr.f32.mxu0 %v532
        %1324 = vmatmul.mubr.f32.gmra.mrb[0].mxu0 %v531
        %v1325 = vpop.f32.mrb[0].mxu0
        %v1326 = vadd.f32 %v1002, %v1325
        %v1327 = vpop.f32.mrb[0].mxu0
        %1328 = vmatprep.mubr.f32.mxu0 %v534
        %1329 = vmatmul.mubr.f32.gmra.mrb[0].mxu0 %v533
        %v1330 = vpop.f32.mrb[0].mxu0
        %v1331 = vadd.f32 %v1002, %v1330
        %v1332 = vpop.f32.mrb[0].mxu0
        %1333 = vmatprep.mubr.f32.mxu0 %v536
        %1334 = vmatmul.mubr.f32.gmra.mrb[0].mxu0 %v535
        %v1335 = vpop.f32.mrb[0].mxu0
        %v1336 = vadd.f32 %v1002, %v1335
        %v1337 = vpop.f32.mrb[0].mxu0
        %1338 = vmatprep.mubr.f32.mxu0 %v538
        %1339 = vmatmul.mubr.f32.gmra.mrb[0].mxu0 %v537
        %v1340 = vpop.f32.mrb[0].mxu0
        %v1341 = vadd.f32 %v1002, %v1340
        %v1342 = vpop.f32.mrb[0].mxu0
        %1343 = vmatprep.mubr.f32.mxu0 %v540
        %1344 = vmatmul.mubr.f32.gmra.mrb[0].mxu0 %v539
        %v1345 = vpop.f32.mrb[0].mxu0
        %v1346 = vadd.f32 %v1002, %v1345
        %v1347 = vpop.f32.mrb[0].mxu0
        %1348 = vmatprep.mubr.f32.mxu0 %v542
        %1349 = vmatmul.mubr.f32.gmra.mrb[0].mxu0 %v541
        %v1350 = vpop.f32.mrb[0].mxu0
        %v1351 = vadd.f32 %v1002, %v1350
        %v1352 = vpop.f32.mrb[0].mxu0
        %1353 = vmatprep.mubr.f32.mxu0 %v544
        %1354 = vmatmul.mubr.f32.gmra.mrb[0].mxu0 %v543
        %v1355 = vpop.f32.mrb[0].mxu0
        %v1356 = vadd.f32 %v1002, %v1355
        %v1357 = vpop.f32.mrb[0].mxu0
        %1358 = vmatprep.mubr.f32.mxu0 %v546
        %1359 = vmatmul.mubr.f32.gmra.mrb[0].mxu0 %v545
        %v1360 = vpop.f32.mrb[0].mxu0
        %v1361 = vadd.f32 %v1002, %v1360
        %v1362 = vpop.f32.mrb[0].mxu0
        %1363 = vmatprep.mubr.f32.mxu0 %v548
        %1364 = vmatmul.mubr.f32.gmra.mrb[0].mxu0 %v547
        %v1365 = vpop.f32.mrb[0].mxu0
        %v1366 = vadd.f32 %v1002, %v1365
        %v1367 = vpop.f32.mrb[0].mxu0
        %1368 = vmatprep.mubr.f32.mxu0 %v550
        %1369 = vmatmul.mubr.f32.gmra.mrb[0].mxu0 %v549
        %v1370 = vpop.f32.mrb[0].mxu0
        %v1371 = vadd.f32 %v1002, %v1370
        %v1372 = vpop.f32.mrb[0].mxu0
        %1373 = vmatprep.mubr.f32.mxu0 %v552
        %1374 = vmatmul.mubr.f32.gmra.mrb[0].mxu0 %v551
        %v1375 = vpop.f32.mrb[0].mxu0
        %v1376 = vadd.f32 %v1002, %v1375
        %v1377 = vpop.f32.mrb[0].mxu0
        %1378 = vmatprep.mubr.f32.mxu0 %v554
        %1379 = vmatmul.mubr.f32.gmra.mrb[0].mxu0 %v553
        %v1380 = vpop.f32.mrb[0].mxu0
        %v1381 = vadd.f32 %v1002, %v1380
        %v1382 = vpop.f32.mrb[0].mxu0
        %1383 = vmatprep.mubr.f32.mxu0 %v556
        %1384 = vmatmul.mubr.f32.gmra.mrb[0].mxu0 %v555
        %v1385 = vpop.f32.mrb[0].mxu0
        %v1386 = vadd.f32 %v1002, %v1385
        %v1387 = vpop.f32.mrb[0].mxu0
        %1388 = vdwg.mxu0
        %v1389 = vmul.f32 %v647, %v1071
        %v1390 = vmul.f32 %v652, %v1076
        %v1391 = vmul.f32 %v657, %v1081
        %v1392 = vmul.f32 %v662, %v1086
        %v1393 = vmul.f32 %v667, %v1091
        %v1394 = vmul.f32 %v672, %v1096
        %v1395 = vmul.f32 %v677, %v1101
        %v1396 = vmul.f32 %v682, %v1106
        %v1397 = vmul.f32 %v687, %v1111
        %v1398 = vmul.f32 %v692, %v1116
        %v1399 = vmul.f32 %v697, %v1121
        %v1400 = vmul.f32 %v702, %v1126
        %v1401 = vmul.f32 %v707, %v1131
        %v1402 = vmul.f32 %v712, %v1136
        %v1403 = vmul.f32 %v717, %v1141
        %v1404 = vmul.f32 %v722, %v1146
        %v1405 = vmul.f32 %v727, %v1151
        %v1406 = vmul.f32 %v732, %v1156
        %v1407 = vmul.f32 %v737, %v1161
        %v1408 = vmul.f32 %v742, %v1166
        %v1409 = vmul.f32 %v747, %v1171
        %v1410 = vmul.f32 %v752, %v1176
        %v1411 = vmul.f32 %v757, %v1181
        %v1412 = vmul.f32 %v762, %v1186
        %v1413 = vmul.f32 %v767, %v1191
        %v1414 = vmul.f32 %v772, %v1196
        %v1415 = vmul.f32 %v777, %v1201
        %v1416 = vmul.f32 %v782, %v1206
        %v1417 = vmul.f32 %v787, %v1211
        %v1418 = vmul.f32 %v792, %v1216
        %v1419 = vmul.f32 %v797, %v1221
        %v1420 = vmul.f32 %v802, %v1226
        %v1421 = vmul.f32 %v807, %v1231
        %v1422 = vmul.f32 %v812, %v1236
        %v1423 = vmul.f32 %v817, %v1241
        %v1424 = vmul.f32 %v822, %v1246
        %v1425 = vmul.f32 %v827, %v1251
        %v1426 = vmul.f32 %v832, %v1256
        %v1427 = vmul.f32 %v837, %v1261
        %v1428 = vmul.f32 %v842, %v1266
        %v1429 = vmul.f32 %v847, %v1271
        %v1430 = vmul.f32 %v852, %v1276
        %v1431 = vmul.f32 %v857, %v1281
        %v1432 = vmul.f32 %v862, %v1286
        %v1433 = vmul.f32 %v867, %v1291
        %v1434 = vmul.f32 %v872, %v1296
        %v1435 = vmul.f32 %v877, %v1301
        %v1436 = vmul.f32 %v882, %v1306
        %v1437 = vmul.f32 %v887, %v1311
        %v1438 = vmul.f32 %v892, %v1316
        %v1439 = vmul.f32 %v897, %v1321
        %v1440 = vmul.f32 %v902, %v1326
        %v1441 = vmul.f32 %v907, %v1331
        %v1442 = vmul.f32 %v912, %v1336
        %v1443 = vmul.f32 %v917, %v1341
        %v1444 = vmul.f32 %v922, %v1346
        %v1445 = vmul.f32 %v927, %v1351
        %v1446 = vmul.f32 %v932, %v1356
        %v1447 = vmul.f32 %v937, %v1361
        %v1448 = vmul.f32 %v942, %v1366
        %v1449 = vmul.f32 %v947, %v1371
        %v1450 = vmul.f32 %v952, %v1376
        %v1451 = vmul.f32 %v957, %v1381
        %v1452 = vmul.f32 %v962, %v1386
        %1453 = vadd.xlane.f32.xlu0 %v1389
        %v1454 = vpop.xlane.xlu0 %1453
        %1455 = vadd.xlane.f32.xlu0 %v1390
        %v1456 = vpop.xlane.xlu0 %1455
        %1457 = vadd.xlane.f32.xlu0 %v1391
        %v1458 = vpop.xlane.xlu0 %1457
        %1459 = vadd.xlane.f32.xlu0 %v1392
        %v1460 = vpop.xlane.xlu0 %1459
        %1461 = vadd.xlane.f32.xlu0 %v1393
        %v1462 = vpop.xlane.xlu0 %1461
        %1463 = vadd.xlane.f32.xlu0 %v1394
        %v1464 = vpop.xlane.xlu0 %1463
        %1465 = vadd.xlane.f32.xlu0 %v1395
        %v1466 = vpop.xlane.xlu0 %1465
        %1467 = vadd.xlane.f32.xlu0 %v1396
        %v1468 = vpop.xlane.xlu0 %1467
        %1469 = vadd.xlane.f32.xlu0 %v1397
        %v1470 = vpop.xlane.xlu0 %1469
        %1471 = vadd.xlane.f32.xlu0 %v1398
        %v1472 = vpop.xlane.xlu0 %1471
        %1473 = vadd.xlane.f32.xlu0 %v1399
        %v1474 = vpop.xlane.xlu0 %1473
        %1475 = vadd.xlane.f32.xlu0 %v1400
        %v1476 = vpop.xlane.xlu0 %1475
        %1477 = vadd.xlane.f32.xlu0 %v1401
        %v1478 = vpop.xlane.xlu0 %1477
        %1479 = vadd.xlane.f32.xlu0 %v1402
        %v1480 = vpop.xlane.xlu0 %1479
        %1481 = vadd.xlane.f32.xlu0 %v1403
        %v1482 = vpop.xlane.xlu0 %1481
        %1483 = vadd.xlane.f32.xlu0 %v1404
        %v1484 = vpop.xlane.xlu0 %1483
        %1485 = vadd.xlane.f32.xlu0 %v1405
        %v1486 = vpop.xlane.xlu0 %1485
        %1487 = vadd.xlane.f32.xlu0 %v1406
        %v1488 = vpop.xlane.xlu0 %1487
        %1489 = vadd.xlane.f32.xlu0 %v1407
        %v1490 = vpop.xlane.xlu0 %1489
        %1491 = vadd.xlane.f32.xlu0 %v1408
        %v1492 = vpop.xlane.xlu0 %1491
        %1493 = vadd.xlane.f32.xlu0 %v1409
        %v1494 = vpop.xlane.xlu0 %1493
        %1495 = vadd.xlane.f32.xlu0 %v1410
        %v1496 = vpop.xlane.xlu0 %1495
        %1497 = vadd.xlane.f32.xlu0 %v1411
        %v1498 = vpop.xlane.xlu0 %1497
        %1499 = vadd.xlane.f32.xlu0 %v1412
        %v1500 = vpop.xlane.xlu0 %1499
        %1501 = vadd.xlane.f32.xlu0 %v1413
        %v1502 = vpop.xlane.xlu0 %1501
        %1503 = vadd.xlane.f32.xlu0 %v1414
        %v1504 = vpop.xlane.xlu0 %1503
        %1505 = vadd.xlane.f32.xlu0 %v1415
        %v1506 = vpop.xlane.xlu0 %1505
        %1507 = vadd.xlane.f32.xlu0 %v1416
        %v1508 = vpop.xlane.xlu0 %1507
        %1509 = vadd.xlane.f32.xlu0 %v1417
        %v1510 = vpop.xlane.xlu0 %1509
        %1511 = vadd.xlane.f32.xlu0 %v1418
        %v1512 = vpop.xlane.xlu0 %1511
        %1513 = vadd.xlane.f32.xlu0 %v1419
        %v1514 = vpop.xlane.xlu0 %1513
        %1515 = vadd.xlane.f32.xlu0 %v1420
        %v1516 = vpop.xlane.xlu0 %1515
        %1517 = vadd.xlane.f32.xlu0 %v1421
        %v1518 = vpop.xlane.xlu0 %1517
        %1519 = vadd.xlane.f32.xlu0 %v1422
        %v1520 = vpop.xlane.xlu0 %1519
        %1521 = vadd.xlane.f32.xlu0 %v1423
        %v1522 = vpop.xlane.xlu0 %1521
        %1523 = vadd.xlane.f32.xlu0 %v1424
        %v1524 = vpop.xlane.xlu0 %1523
        %1525 = vadd.xlane.f32.xlu0 %v1425
        %v1526 = vpop.xlane.xlu0 %1525
        %1527 = vadd.xlane.f32.xlu0 %v1426
        %v1528 = vpop.xlane.xlu0 %1527
        %1529 = vadd.xlane.f32.xlu0 %v1427
        %v1530 = vpop.xlane.xlu0 %1529
        %1531 = vadd.xlane.f32.xlu0 %v1428
        %v1532 = vpop.xlane.xlu0 %1531
        %1533 = vadd.xlane.f32.xlu0 %v1429
        %v1534 = vpop.xlane.xlu0 %1533
        %1535 = vadd.xlane.f32.xlu0 %v1430
        %v1536 = vpop.xlane.xlu0 %1535
        %1537 = vadd.xlane.f32.xlu0 %v1431
        %v1538 = vpop.xlane.xlu0 %1537
        %1539 = vadd.xlane.f32.xlu0 %v1432
        %v1540 = vpop.xlane.xlu0 %1539
        %1541 = vadd.xlane.f32.xlu0 %v1433
        %v1542 = vpop.xlane.xlu0 %1541
        %1543 = vadd.xlane.f32.xlu0 %v1434
        %v1544 = vpop.xlane.xlu0 %1543
        %1545 = vadd.xlane.f32.xlu0 %v1435
        %v1546 = vpop.xlane.xlu0 %1545
        %1547 = vadd.xlane.f32.xlu0 %v1436
        %v1548 = vpop.xlane.xlu0 %1547
        %1549 = vadd.xlane.f32.xlu0 %v1437
        %v1550 = vpop.xlane.xlu0 %1549
        %1551 = vadd.xlane.f32.xlu0 %v1438
        %v1552 = vpop.xlane.xlu0 %1551
        %1553 = vadd.xlane.f32.xlu0 %v1439
        %v1554 = vpop.xlane.xlu0 %1553
        %1555 = vadd.xlane.f32.xlu0 %v1440
        %v1556 = vpop.xlane.xlu0 %1555
        %1557 = vadd.xlane.f32.xlu0 %v1441
        %v1558 = vpop.xlane.xlu0 %1557
        %1559 = vadd.xlane.f32.xlu0 %v1442
        %v1560 = vpop.xlane.xlu0 %1559
        %1561 = vadd.xlane.f32.xlu0 %v1443
        %v1562 = vpop.xlane.xlu0 %1561
        %1563 = vadd.xlane.f32.xlu0 %v1444
        %v1564 = vpop.xlane.xlu0 %1563
        %1565 = vadd.xlane.f32.xlu0 %v1445
        %v1566 = vpop.xlane.xlu0 %1565
        %1567 = vadd.xlane.f32.xlu0 %v1446
        %v1568 = vpop.xlane.xlu0 %1567
        %1569 = vadd.xlane.f32.xlu0 %v1447
        %v1570 = vpop.xlane.xlu0 %1569
        %1571 = vadd.xlane.f32.xlu0 %v1448
        %v1572 = vpop.xlane.xlu0 %1571
        %1573 = vadd.xlane.f32.xlu0 %v1449
        %v1574 = vpop.xlane.xlu0 %1573
        %1575 = vadd.xlane.f32.xlu0 %v1450
        %v1576 = vpop.xlane.xlu0 %1575
        %1577 = vadd.xlane.f32.xlu0 %v1451
        %v1578 = vpop.xlane.xlu0 %1577
        %1579 = vadd.xlane.f32.xlu0 %v1452
        %v1580 = vpop.xlane.xlu0 %1579
        %v1645 = vlaneseq
        %v1646 = vshrl.u32 %v1645, 7
        %v1647 = vsub.s32 0, %v1646
        %v1648 = vrot.slane %v1454, %v1647
        %v1649 = vlaneseq
        %v1650 = vshrl.u32 %v1649, 7
        %v1651 = vsub.s32 1, %v1650
        %v1652 = vrot.slane %v1454, %v1651
        %v1653 = vlaneseq
        %v1654 = vshrl.u32 %v1653, 7
        %v1655 = vsub.s32 2, %v1654
        %v1656 = vrot.slane %v1454, %v1655
        %v1657 = vlaneseq
        %v1658 = vshrl.u32 %v1657, 7
        %v1659 = vsub.s32 3, %v1658
        %v1660 = vrot.slane %v1454, %v1659
        %v1661 = vlaneseq
        %v1662 = vshrl.u32 %v1661, 7
        %v1663 = vsub.s32 4, %v1662
        %v1664 = vrot.slane %v1454, %v1663
        %v1665 = vlaneseq
        %v1666 = vshrl.u32 %v1665, 7
        %v1667 = vsub.s32 5, %v1666
        %v1668 = vrot.slane %v1454, %v1667
        %v1669 = vlaneseq
        %v1670 = vshrl.u32 %v1669, 7
        %v1671 = vsub.s32 6, %v1670
        %v1672 = vrot.slane %v1454, %v1671
        %v1673 = vlaneseq
        %v1674 = vshrl.u32 %v1673, 7
        %v1675 = vsub.s32 7, %v1674
        %v1676 = vrot.slane %v1454, %v1675
        %v1677 = vlaneseq
        %v1678 = vshrl.u32 %v1677, 7
        %v1679 = vsub.s32 0, %v1678
        %v1680 = vrot.slane %v1456, %v1679
        %v1681 = vlaneseq
        %v1682 = vshrl.u32 %v1681, 7
        %v1683 = vsub.s32 1, %v1682
        %v1684 = vrot.slane %v1456, %v1683
        %v1685 = vlaneseq
        %v1686 = vshrl.u32 %v1685, 7
        %v1687 = vsub.s32 2, %v1686
        %v1688 = vrot.slane %v1456, %v1687
        %v1689 = vlaneseq
        %v1690 = vshrl.u32 %v1689, 7
        %v1691 = vsub.s32 3, %v1690
        %v1692 = vrot.slane %v1456, %v1691
        %v1693 = vlaneseq
        %v1694 = vshrl.u32 %v1693, 7
        %v1695 = vsub.s32 4, %v1694
        %v1696 = vrot.slane %v1456, %v1695
        %v1697 = vlaneseq
        %v1698 = vshrl.u32 %v1697, 7
        %v1699 = vsub.s32 5, %v1698
        %v1700 = vrot.slane %v1456, %v1699
        %v1701 = vlaneseq
        %v1702 = vshrl.u32 %v1701, 7
        %v1703 = vsub.s32 6, %v1702
        %v1704 = vrot.slane %v1456, %v1703
        %v1705 = vlaneseq
        %v1706 = vshrl.u32 %v1705, 7
        %v1707 = vsub.s32 7, %v1706
        %v1708 = vrot.slane %v1456, %v1707
        %v1709 = vlaneseq
        %v1710 = vshrl.u32 %v1709, 7
        %v1711 = vsub.s32 0, %v1710
        %v1712 = vrot.slane %v1458, %v1711
        %v1713 = vlaneseq
        %v1714 = vshrl.u32 %v1713, 7
        %v1715 = vsub.s32 1, %v1714
        %v1716 = vrot.slane %v1458, %v1715
        %v1717 = vlaneseq
        %v1718 = vshrl.u32 %v1717, 7
        %v1719 = vsub.s32 2, %v1718
        %v1720 = vrot.slane %v1458, %v1719
        %v1721 = vlaneseq
        %v1722 = vshrl.u32 %v1721, 7
        %v1723 = vsub.s32 3, %v1722
        %v1724 = vrot.slane %v1458, %v1723
        %v1725 = vlaneseq
        %v1726 = vshrl.u32 %v1725, 7
        %v1727 = vsub.s32 4, %v1726
        %v1728 = vrot.slane %v1458, %v1727
        %v1729 = vlaneseq
        %v1730 = vshrl.u32 %v1729, 7
        %v1731 = vsub.s32 5, %v1730
        %v1732 = vrot.slane %v1458, %v1731
        %v1733 = vlaneseq
        %v1734 = vshrl.u32 %v1733, 7
        %v1735 = vsub.s32 6, %v1734
        %v1736 = vrot.slane %v1458, %v1735
        %v1737 = vlaneseq
        %v1738 = vshrl.u32 %v1737, 7
        %v1739 = vsub.s32 7, %v1738
        %v1740 = vrot.slane %v1458, %v1739
        %v1741 = vlaneseq
        %v1742 = vshrl.u32 %v1741, 7
        %v1743 = vsub.s32 0, %v1742
        %v1744 = vrot.slane %v1460, %v1743
        %v1745 = vlaneseq
        %v1746 = vshrl.u32 %v1745, 7
        %v1747 = vsub.s32 1, %v1746
        %v1748 = vrot.slane %v1460, %v1747
        %v1749 = vlaneseq
        %v1750 = vshrl.u32 %v1749, 7
        %v1751 = vsub.s32 2, %v1750
        %v1752 = vrot.slane %v1460, %v1751
        %v1753 = vlaneseq
        %v1754 = vshrl.u32 %v1753, 7
        %v1755 = vsub.s32 3, %v1754
        %v1756 = vrot.slane %v1460, %v1755
        %v1757 = vlaneseq
        %v1758 = vshrl.u32 %v1757, 7
        %v1759 = vsub.s32 4, %v1758
        %v1760 = vrot.slane %v1460, %v1759
        %v1761 = vlaneseq
        %v1762 = vshrl.u32 %v1761, 7
        %v1763 = vsub.s32 5, %v1762
        %v1764 = vrot.slane %v1460, %v1763
        %v1765 = vlaneseq
        %v1766 = vshrl.u32 %v1765, 7
        %v1767 = vsub.s32 6, %v1766
        %v1768 = vrot.slane %v1460, %v1767
        %v1769 = vlaneseq
        %v1770 = vshrl.u32 %v1769, 7
        %v1771 = vsub.s32 7, %v1770
        %v1772 = vrot.slane %v1460, %v1771
        %v1773 = vlaneseq
        %v1774 = vshrl.u32 %v1773, 7
        %v1775 = vsub.s32 0, %v1774
        %v1776 = vrot.slane %v1462, %v1775
        %v1777 = vlaneseq
        %v1778 = vshrl.u32 %v1777, 7
        %v1779 = vsub.s32 1, %v1778
        %v1780 = vrot.slane %v1462, %v1779
        %v1781 = vlaneseq
        %v1782 = vshrl.u32 %v1781, 7
        %v1783 = vsub.s32 2, %v1782
        %v1784 = vrot.slane %v1462, %v1783
        %v1785 = vlaneseq
        %v1786 = vshrl.u32 %v1785, 7
        %v1787 = vsub.s32 3, %v1786
        %v1788 = vrot.slane %v1462, %v1787
        %v1789 = vlaneseq
        %v1790 = vshrl.u32 %v1789, 7
        %v1791 = vsub.s32 4, %v1790
        %v1792 = vrot.slane %v1462, %v1791
        %v1793 = vlaneseq
        %v1794 = vshrl.u32 %v1793, 7
        %v1795 = vsub.s32 5, %v1794
        %v1796 = vrot.slane %v1462, %v1795
        %v1797 = vlaneseq
        %v1798 = vshrl.u32 %v1797, 7
        %v1799 = vsub.s32 6, %v1798
        %v1800 = vrot.slane %v1462, %v1799
        %v1801 = vlaneseq
        %v1802 = vshrl.u32 %v1801, 7
        %v1803 = vsub.s32 7, %v1802
        %v1804 = vrot.slane %v1462, %v1803
        %v1805 = vlaneseq
        %v1806 = vshrl.u32 %v1805, 7
        %v1807 = vsub.s32 0, %v1806
        %v1808 = vrot.slane %v1464, %v1807
        %v1809 = vlaneseq
        %v1810 = vshrl.u32 %v1809, 7
        %v1811 = vsub.s32 1, %v1810
        %v1812 = vrot.slane %v1464, %v1811
        %v1813 = vlaneseq
        %v1814 = vshrl.u32 %v1813, 7
        %v1815 = vsub.s32 2, %v1814
        %v1816 = vrot.slane %v1464, %v1815
        %v1817 = vlaneseq
        %v1818 = vshrl.u32 %v1817, 7
        %v1819 = vsub.s32 3, %v1818
        %v1820 = vrot.slane %v1464, %v1819
        %v1821 = vlaneseq
        %v1822 = vshrl.u32 %v1821, 7
        %v1823 = vsub.s32 4, %v1822
        %v1824 = vrot.slane %v1464, %v1823
        %v1825 = vlaneseq
        %v1826 = vshrl.u32 %v1825, 7
        %v1827 = vsub.s32 5, %v1826
        %v1828 = vrot.slane %v1464, %v1827
        %v1829 = vlaneseq
        %v1830 = vshrl.u32 %v1829, 7
        %v1831 = vsub.s32 6, %v1830
        %v1832 = vrot.slane %v1464, %v1831
        %v1833 = vlaneseq
        %v1834 = vshrl.u32 %v1833, 7
        %v1835 = vsub.s32 7, %v1834
        %v1836 = vrot.slane %v1464, %v1835
        %v1837 = vlaneseq
        %v1838 = vshrl.u32 %v1837, 7
        %v1839 = vsub.s32 0, %v1838
        %v1840 = vrot.slane %v1466, %v1839
        %v1841 = vlaneseq
        %v1842 = vshrl.u32 %v1841, 7
        %v1843 = vsub.s32 1, %v1842
        %v1844 = vrot.slane %v1466, %v1843
        %v1845 = vlaneseq
        %v1846 = vshrl.u32 %v1845, 7
        %v1847 = vsub.s32 2, %v1846
        %v1848 = vrot.slane %v1466, %v1847
        %v1849 = vlaneseq
        %v1850 = vshrl.u32 %v1849, 7
        %v1851 = vsub.s32 3, %v1850
        %v1852 = vrot.slane %v1466, %v1851
        %v1853 = vlaneseq
        %v1854 = vshrl.u32 %v1853, 7
        %v1855 = vsub.s32 4, %v1854
        %v1856 = vrot.slane %v1466, %v1855
        %v1857 = vlaneseq
        %v1858 = vshrl.u32 %v1857, 7
        %v1859 = vsub.s32 5, %v1858
        %v1860 = vrot.slane %v1466, %v1859
        %v1861 = vlaneseq
        %v1862 = vshrl.u32 %v1861, 7
        %v1863 = vsub.s32 6, %v1862
        %v1864 = vrot.slane %v1466, %v1863
        %v1865 = vlaneseq
        %v1866 = vshrl.u32 %v1865, 7
        %v1867 = vsub.s32 7, %v1866
        %v1868 = vrot.slane %v1466, %v1867
        %v1869 = vlaneseq
        %v1870 = vshrl.u32 %v1869, 7
        %v1871 = vsub.s32 0, %v1870
        %v1872 = vrot.slane %v1468, %v1871
        %v1873 = vlaneseq
        %v1874 = vshrl.u32 %v1873, 7
        %v1875 = vsub.s32 1, %v1874
        %v1876 = vrot.slane %v1468, %v1875
        %v1877 = vlaneseq
        %v1878 = vshrl.u32 %v1877, 7
        %v1879 = vsub.s32 2, %v1878
        %v1880 = vrot.slane %v1468, %v1879
        %v1881 = vlaneseq
        %v1882 = vshrl.u32 %v1881, 7
        %v1883 = vsub.s32 3, %v1882
        %v1884 = vrot.slane %v1468, %v1883
        %v1885 = vlaneseq
        %v1886 = vshrl.u32 %v1885, 7
        %v1887 = vsub.s32 4, %v1886
        %v1888 = vrot.slane %v1468, %v1887
        %v1889 = vlaneseq
        %v1890 = vshrl.u32 %v1889, 7
        %v1891 = vsub.s32 5, %v1890
        %v1892 = vrot.slane %v1468, %v1891
        %v1893 = vlaneseq
        %v1894 = vshrl.u32 %v1893, 7
        %v1895 = vsub.s32 6, %v1894
        %v1896 = vrot.slane %v1468, %v1895
        %v1897 = vlaneseq
        %v1898 = vshrl.u32 %v1897, 7
        %v1899 = vsub.s32 7, %v1898
        %v1900 = vrot.slane %v1468, %v1899
        %v1901 = vlaneseq
        %v1902 = vshrl.u32 %v1901, 7
        %v1903 = vsub.s32 0, %v1902
        %v1904 = vrot.slane %v1470, %v1903
        %v1905 = vlaneseq
        %v1906 = vshrl.u32 %v1905, 7
        %v1907 = vsub.s32 1, %v1906
        %v1908 = vrot.slane %v1470, %v1907
        %v1909 = vlaneseq
        %v1910 = vshrl.u32 %v1909, 7
        %v1911 = vsub.s32 2, %v1910
        %v1912 = vrot.slane %v1470, %v1911
        %v1913 = vlaneseq
        %v1914 = vshrl.u32 %v1913, 7
        %v1915 = vsub.s32 3, %v1914
        %v1916 = vrot.slane %v1470, %v1915
        %v1917 = vlaneseq
        %v1918 = vshrl.u32 %v1917, 7
        %v1919 = vsub.s32 4, %v1918
        %v1920 = vrot.slane %v1470, %v1919
        %v1921 = vlaneseq
        %v1922 = vshrl.u32 %v1921, 7
        %v1923 = vsub.s32 5, %v1922
        %v1924 = vrot.slane %v1470, %v1923
        %v1925 = vlaneseq
        %v1926 = vshrl.u32 %v1925, 7
        %v1927 = vsub.s32 6, %v1926
        %v1928 = vrot.slane %v1470, %v1927
        %v1929 = vlaneseq
        %v1930 = vshrl.u32 %v1929, 7
        %v1931 = vsub.s32 7, %v1930
        %v1932 = vrot.slane %v1470, %v1931
        %v1933 = vlaneseq
        %v1934 = vshrl.u32 %v1933, 7
        %v1935 = vsub.s32 0, %v1934
        %v1936 = vrot.slane %v1472, %v1935
        %v1937 = vlaneseq
        %v1938 = vshrl.u32 %v1937, 7
        %v1939 = vsub.s32 1, %v1938
        %v1940 = vrot.slane %v1472, %v1939
        %v1941 = vlaneseq
        %v1942 = vshrl.u32 %v1941, 7
        %v1943 = vsub.s32 2, %v1942
        %v1944 = vrot.slane %v1472, %v1943
        %v1945 = vlaneseq
        %v1946 = vshrl.u32 %v1945, 7
        %v1947 = vsub.s32 3, %v1946
        %v1948 = vrot.slane %v1472, %v1947
        %v1949 = vlaneseq
        %v1950 = vshrl.u32 %v1949, 7
        %v1951 = vsub.s32 4, %v1950
        %v1952 = vrot.slane %v1472, %v1951
        %v1953 = vlaneseq
        %v1954 = vshrl.u32 %v1953, 7
        %v1955 = vsub.s32 5, %v1954
        %v1956 = vrot.slane %v1472, %v1955
        %v1957 = vlaneseq
        %v1958 = vshrl.u32 %v1957, 7
        %v1959 = vsub.s32 6, %v1958
        %v1960 = vrot.slane %v1472, %v1959
        %v1961 = vlaneseq
        %v1962 = vshrl.u32 %v1961, 7
        %v1963 = vsub.s32 7, %v1962
        %v1964 = vrot.slane %v1472, %v1963
        %v1965 = vlaneseq
        %v1966 = vshrl.u32 %v1965, 7
        %v1967 = vsub.s32 0, %v1966
        %v1968 = vrot.slane %v1474, %v1967
        %v1969 = vlaneseq
        %v1970 = vshrl.u32 %v1969, 7
        %v1971 = vsub.s32 1, %v1970
        %v1972 = vrot.slane %v1474, %v1971
        %v1973 = vlaneseq
        %v1974 = vshrl.u32 %v1973, 7
        %v1975 = vsub.s32 2, %v1974
        %v1976 = vrot.slane %v1474, %v1975
        %v1977 = vlaneseq
        %v1978 = vshrl.u32 %v1977, 7
        %v1979 = vsub.s32 3, %v1978
        %v1980 = vrot.slane %v1474, %v1979
        %v1981 = vlaneseq
        %v1982 = vshrl.u32 %v1981, 7
        %v1983 = vsub.s32 4, %v1982
        %v1984 = vrot.slane %v1474, %v1983
        %v1985 = vlaneseq
        %v1986 = vshrl.u32 %v1985, 7
        %v1987 = vsub.s32 5, %v1986
        %v1988 = vrot.slane %v1474, %v1987
        %v1989 = vlaneseq
        %v1990 = vshrl.u32 %v1989, 7
        %v1991 = vsub.s32 6, %v1990
        %v1992 = vrot.slane %v1474, %v1991
        %v1993 = vlaneseq
        %v1994 = vshrl.u32 %v1993, 7
        %v1995 = vsub.s32 7, %v1994
        %v1996 = vrot.slane %v1474, %v1995
        %v1997 = vlaneseq
        %v1998 = vshrl.u32 %v1997, 7
        %v1999 = vsub.s32 0, %v1998
        %v2000 = vrot.slane %v1476, %v1999
        %v2001 = vlaneseq
        %v2002 = vshrl.u32 %v2001, 7
        %v2003 = vsub.s32 1, %v2002
        %v2004 = vrot.slane %v1476, %v2003
        %v2005 = vlaneseq
        %v2006 = vshrl.u32 %v2005, 7
        %v2007 = vsub.s32 2, %v2006
        %v2008 = vrot.slane %v1476, %v2007
        %v2009 = vlaneseq
        %v2010 = vshrl.u32 %v2009, 7
        %v2011 = vsub.s32 3, %v2010
        %v2012 = vrot.slane %v1476, %v2011
        %v2013 = vlaneseq
        %v2014 = vshrl.u32 %v2013, 7
        %v2015 = vsub.s32 4, %v2014
        %v2016 = vrot.slane %v1476, %v2015
        %v2017 = vlaneseq
        %v2018 = vshrl.u32 %v2017, 7
        %v2019 = vsub.s32 5, %v2018
        %v2020 = vrot.slane %v1476, %v2019
        %v2021 = vlaneseq
        %v2022 = vshrl.u32 %v2021, 7
        %v2023 = vsub.s32 6, %v2022
        %v2024 = vrot.slane %v1476, %v2023
        %v2025 = vlaneseq
        %v2026 = vshrl.u32 %v2025, 7
        %v2027 = vsub.s32 7, %v2026
        %v2028 = vrot.slane %v1476, %v2027
        %v2029 = vlaneseq
        %v2030 = vshrl.u32 %v2029, 7
        %v2031 = vsub.s32 0, %v2030
        %v2032 = vrot.slane %v1478, %v2031
        %v2033 = vlaneseq
        %v2034 = vshrl.u32 %v2033, 7
        %v2035 = vsub.s32 1, %v2034
        %v2036 = vrot.slane %v1478, %v2035
        %v2037 = vlaneseq
        %v2038 = vshrl.u32 %v2037, 7
        %v2039 = vsub.s32 2, %v2038
        %v2040 = vrot.slane %v1478, %v2039
        %v2041 = vlaneseq
        %v2042 = vshrl.u32 %v2041, 7
        %v2043 = vsub.s32 3, %v2042
        %v2044 = vrot.slane %v1478, %v2043
        %v2045 = vlaneseq
        %v2046 = vshrl.u32 %v2045, 7
        %v2047 = vsub.s32 4, %v2046
        %v2048 = vrot.slane %v1478, %v2047
        %v2049 = vlaneseq
        %v2050 = vshrl.u32 %v2049, 7
        %v2051 = vsub.s32 5, %v2050
        %v2052 = vrot.slane %v1478, %v2051
        %v2053 = vlaneseq
        %v2054 = vshrl.u32 %v2053, 7
        %v2055 = vsub.s32 6, %v2054
        %v2056 = vrot.slane %v1478, %v2055
        %v2057 = vlaneseq
        %v2058 = vshrl.u32 %v2057, 7
        %v2059 = vsub.s32 7, %v2058
        %v2060 = vrot.slane %v1478, %v2059
        %v2061 = vlaneseq
        %v2062 = vshrl.u32 %v2061, 7
        %v2063 = vsub.s32 0, %v2062
        %v2064 = vrot.slane %v1480, %v2063
        %v2065 = vlaneseq
        %v2066 = vshrl.u32 %v2065, 7
        %v2067 = vsub.s32 1, %v2066
        %v2068 = vrot.slane %v1480, %v2067
        %v2069 = vlaneseq
        %v2070 = vshrl.u32 %v2069, 7
        %v2071 = vsub.s32 2, %v2070
        %v2072 = vrot.slane %v1480, %v2071
        %v2073 = vlaneseq
        %v2074 = vshrl.u32 %v2073, 7
        %v2075 = vsub.s32 3, %v2074
        %v2076 = vrot.slane %v1480, %v2075
        %v2077 = vlaneseq
        %v2078 = vshrl.u32 %v2077, 7
        %v2079 = vsub.s32 4, %v2078
        %v2080 = vrot.slane %v1480, %v2079
        %v2081 = vlaneseq
        %v2082 = vshrl.u32 %v2081, 7
        %v2083 = vsub.s32 5, %v2082
        %v2084 = vrot.slane %v1480, %v2083
        %v2085 = vlaneseq
        %v2086 = vshrl.u32 %v2085, 7
        %v2087 = vsub.s32 6, %v2086
        %v2088 = vrot.slane %v1480, %v2087
        %v2089 = vlaneseq
        %v2090 = vshrl.u32 %v2089, 7
        %v2091 = vsub.s32 7, %v2090
        %v2092 = vrot.slane %v1480, %v2091
        %v2093 = vlaneseq
        %v2094 = vshrl.u32 %v2093, 7
        %v2095 = vsub.s32 0, %v2094
        %v2096 = vrot.slane %v1482, %v2095
        %v2097 = vlaneseq
        %v2098 = vshrl.u32 %v2097, 7
        %v2099 = vsub.s32 1, %v2098
        %v2100 = vrot.slane %v1482, %v2099
        %v2101 = vlaneseq
        %v2102 = vshrl.u32 %v2101, 7
        %v2103 = vsub.s32 2, %v2102
        %v2104 = vrot.slane %v1482, %v2103
        %v2105 = vlaneseq
        %v2106 = vshrl.u32 %v2105, 7
        %v2107 = vsub.s32 3, %v2106
        %v2108 = vrot.slane %v1482, %v2107
        %v2109 = vlaneseq
        %v2110 = vshrl.u32 %v2109, 7
        %v2111 = vsub.s32 4, %v2110
        %v2112 = vrot.slane %v1482, %v2111
        %v2113 = vlaneseq
        %v2114 = vshrl.u32 %v2113, 7
        %v2115 = vsub.s32 5, %v2114
        %v2116 = vrot.slane %v1482, %v2115
        %v2117 = vlaneseq
        %v2118 = vshrl.u32 %v2117, 7
        %v2119 = vsub.s32 6, %v2118
        %v2120 = vrot.slane %v1482, %v2119
        %v2121 = vlaneseq
        %v2122 = vshrl.u32 %v2121, 7
        %v2123 = vsub.s32 7, %v2122
        %v2124 = vrot.slane %v1482, %v2123
        %v2125 = vlaneseq
        %v2126 = vshrl.u32 %v2125, 7
        %v2127 = vsub.s32 0, %v2126
        %v2128 = vrot.slane %v1484, %v2127
        %v2129 = vlaneseq
        %v2130 = vshrl.u32 %v2129, 7
        %v2131 = vsub.s32 1, %v2130
        %v2132 = vrot.slane %v1484, %v2131
        %v2133 = vlaneseq
        %v2134 = vshrl.u32 %v2133, 7
        %v2135 = vsub.s32 2, %v2134
        %v2136 = vrot.slane %v1484, %v2135
        %v2137 = vlaneseq
        %v2138 = vshrl.u32 %v2137, 7
        %v2139 = vsub.s32 3, %v2138
        %v2140 = vrot.slane %v1484, %v2139
        %v2141 = vlaneseq
        %v2142 = vshrl.u32 %v2141, 7
        %v2143 = vsub.s32 4, %v2142
        %v2144 = vrot.slane %v1484, %v2143
        %v2145 = vlaneseq
        %v2146 = vshrl.u32 %v2145, 7
        %v2147 = vsub.s32 5, %v2146
        %v2148 = vrot.slane %v1484, %v2147
        %v2149 = vlaneseq
        %v2150 = vshrl.u32 %v2149, 7
        %v2151 = vsub.s32 6, %v2150
        %v2152 = vrot.slane %v1484, %v2151
        %v2153 = vlaneseq
        %v2154 = vshrl.u32 %v2153, 7
        %v2155 = vsub.s32 7, %v2154
        %v2156 = vrot.slane %v1484, %v2155
        %v2157 = vlaneseq
        %v2158 = vshrl.u32 %v2157, 7
        %v2159 = vsub.s32 0, %v2158
        %v2160 = vrot.slane %v1486, %v2159
        %v2161 = vlaneseq
        %v2162 = vshrl.u32 %v2161, 7
        %v2163 = vsub.s32 1, %v2162
        %v2164 = vrot.slane %v1486, %v2163
        %v2165 = vlaneseq
        %v2166 = vshrl.u32 %v2165, 7
        %v2167 = vsub.s32 2, %v2166
        %v2168 = vrot.slane %v1486, %v2167
        %v2169 = vlaneseq
        %v2170 = vshrl.u32 %v2169, 7
        %v2171 = vsub.s32 3, %v2170
        %v2172 = vrot.slane %v1486, %v2171
        %v2173 = vlaneseq
        %v2174 = vshrl.u32 %v2173, 7
        %v2175 = vsub.s32 4, %v2174
        %v2176 = vrot.slane %v1486, %v2175
        %v2177 = vlaneseq
        %v2178 = vshrl.u32 %v2177, 7
        %v2179 = vsub.s32 5, %v2178
        %v2180 = vrot.slane %v1486, %v2179
        %v2181 = vlaneseq
        %v2182 = vshrl.u32 %v2181, 7
        %v2183 = vsub.s32 6, %v2182
        %v2184 = vrot.slane %v1486, %v2183
        %v2185 = vlaneseq
        %v2186 = vshrl.u32 %v2185, 7
        %v2187 = vsub.s32 7, %v2186
        %v2188 = vrot.slane %v1486, %v2187
        %v2189 = vlaneseq
        %v2190 = vshrl.u32 %v2189, 7
        %v2191 = vsub.s32 0, %v2190
        %v2192 = vrot.slane %v1488, %v2191
        %v2193 = vlaneseq
        %v2194 = vshrl.u32 %v2193, 7
        %v2195 = vsub.s32 1, %v2194
        %v2196 = vrot.slane %v1488, %v2195
        %v2197 = vlaneseq
        %v2198 = vshrl.u32 %v2197, 7
        %v2199 = vsub.s32 2, %v2198
        %v2200 = vrot.slane %v1488, %v2199
        %v2201 = vlaneseq
        %v2202 = vshrl.u32 %v2201, 7
        %v2203 = vsub.s32 3, %v2202
        %v2204 = vrot.slane %v1488, %v2203
        %v2205 = vlaneseq
        %v2206 = vshrl.u32 %v2205, 7
        %v2207 = vsub.s32 4, %v2206
        %v2208 = vrot.slane %v1488, %v2207
        %v2209 = vlaneseq
        %v2210 = vshrl.u32 %v2209, 7
        %v2211 = vsub.s32 5, %v2210
        %v2212 = vrot.slane %v1488, %v2211
        %v2213 = vlaneseq
        %v2214 = vshrl.u32 %v2213, 7
        %v2215 = vsub.s32 6, %v2214
        %v2216 = vrot.slane %v1488, %v2215
        %v2217 = vlaneseq
        %v2218 = vshrl.u32 %v2217, 7
        %v2219 = vsub.s32 7, %v2218
        %v2220 = vrot.slane %v1488, %v2219
        %v2221 = vlaneseq
        %v2222 = vshrl.u32 %v2221, 7
        %v2223 = vsub.s32 0, %v2222
        %v2224 = vrot.slane %v1490, %v2223
        %v2225 = vlaneseq
        %v2226 = vshrl.u32 %v2225, 7
        %v2227 = vsub.s32 1, %v2226
        %v2228 = vrot.slane %v1490, %v2227
        %v2229 = vlaneseq
        %v2230 = vshrl.u32 %v2229, 7
        %v2231 = vsub.s32 2, %v2230
        %v2232 = vrot.slane %v1490, %v2231
        %v2233 = vlaneseq
        %v2234 = vshrl.u32 %v2233, 7
        %v2235 = vsub.s32 3, %v2234
        %v2236 = vrot.slane %v1490, %v2235
        %v2237 = vlaneseq
        %v2238 = vshrl.u32 %v2237, 7
        %v2239 = vsub.s32 4, %v2238
        %v2240 = vrot.slane %v1490, %v2239
        %v2241 = vlaneseq
        %v2242 = vshrl.u32 %v2241, 7
        %v2243 = vsub.s32 5, %v2242
        %v2244 = vrot.slane %v1490, %v2243
        %v2245 = vlaneseq
        %v2246 = vshrl.u32 %v2245, 7
        %v2247 = vsub.s32 6, %v2246
        %v2248 = vrot.slane %v1490, %v2247
        %v2249 = vlaneseq
        %v2250 = vshrl.u32 %v2249, 7
        %v2251 = vsub.s32 7, %v2250
        %v2252 = vrot.slane %v1490, %v2251
        %v2253 = vlaneseq
        %v2254 = vshrl.u32 %v2253, 7
        %v2255 = vsub.s32 0, %v2254
        %v2256 = vrot.slane %v1492, %v2255
        %v2257 = vlaneseq
        %v2258 = vshrl.u32 %v2257, 7
        %v2259 = vsub.s32 1, %v2258
        %v2260 = vrot.slane %v1492, %v2259
        %v2261 = vlaneseq
        %v2262 = vshrl.u32 %v2261, 7
        %v2263 = vsub.s32 2, %v2262
        %v2264 = vrot.slane %v1492, %v2263
        %v2265 = vlaneseq
        %v2266 = vshrl.u32 %v2265, 7
        %v2267 = vsub.s32 3, %v2266
        %v2268 = vrot.slane %v1492, %v2267
        %v2269 = vlaneseq
        %v2270 = vshrl.u32 %v2269, 7
        %v2271 = vsub.s32 4, %v2270
        %v2272 = vrot.slane %v1492, %v2271
        %v2273 = vlaneseq
        %v2274 = vshrl.u32 %v2273, 7
        %v2275 = vsub.s32 5, %v2274
        %v2276 = vrot.slane %v1492, %v2275
        %v2277 = vlaneseq
        %v2278 = vshrl.u32 %v2277, 7
        %v2279 = vsub.s32 6, %v2278
        %v2280 = vrot.slane %v1492, %v2279
        %v2281 = vlaneseq
        %v2282 = vshrl.u32 %v2281, 7
        %v2283 = vsub.s32 7, %v2282
        %v2284 = vrot.slane %v1492, %v2283
        %v2285 = vlaneseq
        %v2286 = vshrl.u32 %v2285, 7
        %v2287 = vsub.s32 0, %v2286
        %v2288 = vrot.slane %v1494, %v2287
        %v2289 = vlaneseq
        %v2290 = vshrl.u32 %v2289, 7
        %v2291 = vsub.s32 1, %v2290
        %v2292 = vrot.slane %v1494, %v2291
        %v2293 = vlaneseq
        %v2294 = vshrl.u32 %v2293, 7
        %v2295 = vsub.s32 2, %v2294
        %v2296 = vrot.slane %v1494, %v2295
        %v2297 = vlaneseq
        %v2298 = vshrl.u32 %v2297, 7
        %v2299 = vsub.s32 3, %v2298
        %v2300 = vrot.slane %v1494, %v2299
        %v2301 = vlaneseq
        %v2302 = vshrl.u32 %v2301, 7
        %v2303 = vsub.s32 4, %v2302
        %v2304 = vrot.slane %v1494, %v2303
        %v2305 = vlaneseq
        %v2306 = vshrl.u32 %v2305, 7
        %v2307 = vsub.s32 5, %v2306
        %v2308 = vrot.slane %v1494, %v2307
        %v2309 = vlaneseq
        %v2310 = vshrl.u32 %v2309, 7
        %v2311 = vsub.s32 6, %v2310
        %v2312 = vrot.slane %v1494, %v2311
        %v2313 = vlaneseq
        %v2314 = vshrl.u32 %v2313, 7
        %v2315 = vsub.s32 7, %v2314
        %v2316 = vrot.slane %v1494, %v2315
        %v2317 = vlaneseq
        %v2318 = vshrl.u32 %v2317, 7
        %v2319 = vsub.s32 0, %v2318
        %v2320 = vrot.slane %v1496, %v2319
        %v2321 = vlaneseq
        %v2322 = vshrl.u32 %v2321, 7
        %v2323 = vsub.s32 1, %v2322
        %v2324 = vrot.slane %v1496, %v2323
        %v2325 = vlaneseq
        %v2326 = vshrl.u32 %v2325, 7
        %v2327 = vsub.s32 2, %v2326
        %v2328 = vrot.slane %v1496, %v2327
        %v2329 = vlaneseq
        %v2330 = vshrl.u32 %v2329, 7
        %v2331 = vsub.s32 3, %v2330
        %v2332 = vrot.slane %v1496, %v2331
        %v2333 = vlaneseq
        %v2334 = vshrl.u32 %v2333, 7
        %v2335 = vsub.s32 4, %v2334
        %v2336 = vrot.slane %v1496, %v2335
        %v2337 = vlaneseq
        %v2338 = vshrl.u32 %v2337, 7
        %v2339 = vsub.s32 5, %v2338
        %v2340 = vrot.slane %v1496, %v2339
        %v2341 = vlaneseq
        %v2342 = vshrl.u32 %v2341, 7
        %v2343 = vsub.s32 6, %v2342
        %v2344 = vrot.slane %v1496, %v2343
        %v2345 = vlaneseq
        %v2346 = vshrl.u32 %v2345, 7
        %v2347 = vsub.s32 7, %v2346
        %v2348 = vrot.slane %v1496, %v2347
        %v2349 = vlaneseq
        %v2350 = vshrl.u32 %v2349, 7
        %v2351 = vsub.s32 0, %v2350
        %v2352 = vrot.slane %v1498, %v2351
        %v2353 = vlaneseq
        %v2354 = vshrl.u32 %v2353, 7
        %v2355 = vsub.s32 1, %v2354
        %v2356 = vrot.slane %v1498, %v2355
        %v2357 = vlaneseq
        %v2358 = vshrl.u32 %v2357, 7
        %v2359 = vsub.s32 2, %v2358
        %v2360 = vrot.slane %v1498, %v2359
        %v2361 = vlaneseq
        %v2362 = vshrl.u32 %v2361, 7
        %v2363 = vsub.s32 3, %v2362
        %v2364 = vrot.slane %v1498, %v2363
        %v2365 = vlaneseq
        %v2366 = vshrl.u32 %v2365, 7
        %v2367 = vsub.s32 4, %v2366
        %v2368 = vrot.slane %v1498, %v2367
        %v2369 = vlaneseq
        %v2370 = vshrl.u32 %v2369, 7
        %v2371 = vsub.s32 5, %v2370
        %v2372 = vrot.slane %v1498, %v2371
        %v2373 = vlaneseq
        %v2374 = vshrl.u32 %v2373, 7
        %v2375 = vsub.s32 6, %v2374
        %v2376 = vrot.slane %v1498, %v2375
        %v2377 = vlaneseq
        %v2378 = vshrl.u32 %v2377, 7
        %v2379 = vsub.s32 7, %v2378
        %v2380 = vrot.slane %v1498, %v2379
        %v2381 = vlaneseq
        %v2382 = vshrl.u32 %v2381, 7
        %v2383 = vsub.s32 0, %v2382
        %v2384 = vrot.slane %v1500, %v2383
        %v2385 = vlaneseq
        %v2386 = vshrl.u32 %v2385, 7
        %v2387 = vsub.s32 1, %v2386
        %v2388 = vrot.slane %v1500, %v2387
        %v2389 = vlaneseq
        %v2390 = vshrl.u32 %v2389, 7
        %v2391 = vsub.s32 2, %v2390
        %v2392 = vrot.slane %v1500, %v2391
        %v2393 = vlaneseq
        %v2394 = vshrl.u32 %v2393, 7
        %v2395 = vsub.s32 3, %v2394
        %v2396 = vrot.slane %v1500, %v2395
        %v2397 = vlaneseq
        %v2398 = vshrl.u32 %v2397, 7
        %v2399 = vsub.s32 4, %v2398
        %v2400 = vrot.slane %v1500, %v2399
        %v2401 = vlaneseq
        %v2402 = vshrl.u32 %v2401, 7
        %v2403 = vsub.s32 5, %v2402
        %v2404 = vrot.slane %v1500, %v2403
        %v2405 = vlaneseq
        %v2406 = vshrl.u32 %v2405, 7
        %v2407 = vsub.s32 6, %v2406
        %v2408 = vrot.slane %v1500, %v2407
        %v2409 = vlaneseq
        %v2410 = vshrl.u32 %v2409, 7
        %v2411 = vsub.s32 7, %v2410
        %v2412 = vrot.slane %v1500, %v2411
        %v2413 = vlaneseq
        %v2414 = vshrl.u32 %v2413, 7
        %v2415 = vsub.s32 0, %v2414
        %v2416 = vrot.slane %v1502, %v2415
        %v2417 = vlaneseq
        %v2418 = vshrl.u32 %v2417, 7
        %v2419 = vsub.s32 1, %v2418
        %v2420 = vrot.slane %v1502, %v2419
        %v2421 = vlaneseq
        %v2422 = vshrl.u32 %v2421, 7
        %v2423 = vsub.s32 2, %v2422
        %v2424 = vrot.slane %v1502, %v2423
        %v2425 = vlaneseq
        %v2426 = vshrl.u32 %v2425, 7
        %v2427 = vsub.s32 3, %v2426
        %v2428 = vrot.slane %v1502, %v2427
        %v2429 = vlaneseq
        %v2430 = vshrl.u32 %v2429, 7
        %v2431 = vsub.s32 4, %v2430
        %v2432 = vrot.slane %v1502, %v2431
        %v2433 = vlaneseq
        %v2434 = vshrl.u32 %v2433, 7
        %v2435 = vsub.s32 5, %v2434
        %v2436 = vrot.slane %v1502, %v2435
        %v2437 = vlaneseq
        %v2438 = vshrl.u32 %v2437, 7
        %v2439 = vsub.s32 6, %v2438
        %v2440 = vrot.slane %v1502, %v2439
        %v2441 = vlaneseq
        %v2442 = vshrl.u32 %v2441, 7
        %v2443 = vsub.s32 7, %v2442
        %v2444 = vrot.slane %v1502, %v2443
        %v2445 = vlaneseq
        %v2446 = vshrl.u32 %v2445, 7
        %v2447 = vsub.s32 0, %v2446
        %v2448 = vrot.slane %v1504, %v2447
        %v2449 = vlaneseq
        %v2450 = vshrl.u32 %v2449, 7
        %v2451 = vsub.s32 1, %v2450
        %v2452 = vrot.slane %v1504, %v2451
        %v2453 = vlaneseq
        %v2454 = vshrl.u32 %v2453, 7
        %v2455 = vsub.s32 2, %v2454
        %v2456 = vrot.slane %v1504, %v2455
        %v2457 = vlaneseq
        %v2458 = vshrl.u32 %v2457, 7
        %v2459 = vsub.s32 3, %v2458
        %v2460 = vrot.slane %v1504, %v2459
        %v2461 = vlaneseq
        %v2462 = vshrl.u32 %v2461, 7
        %v2463 = vsub.s32 4, %v2462
        %v2464 = vrot.slane %v1504, %v2463
        %v2465 = vlaneseq
        %v2466 = vshrl.u32 %v2465, 7
        %v2467 = vsub.s32 5, %v2466
        %v2468 = vrot.slane %v1504, %v2467
        %v2469 = vlaneseq
        %v2470 = vshrl.u32 %v2469, 7
        %v2471 = vsub.s32 6, %v2470
        %v2472 = vrot.slane %v1504, %v2471
        %v2473 = vlaneseq
        %v2474 = vshrl.u32 %v2473, 7
        %v2475 = vsub.s32 7, %v2474
        %v2476 = vrot.slane %v1504, %v2475
        %v2477 = vlaneseq
        %v2478 = vshrl.u32 %v2477, 7
        %v2479 = vsub.s32 0, %v2478
        %v2480 = vrot.slane %v1506, %v2479
        %v2481 = vlaneseq
        %v2482 = vshrl.u32 %v2481, 7
        %v2483 = vsub.s32 1, %v2482
        %v2484 = vrot.slane %v1506, %v2483
        %v2485 = vlaneseq
        %v2486 = vshrl.u32 %v2485, 7
        %v2487 = vsub.s32 2, %v2486
        %v2488 = vrot.slane %v1506, %v2487
        %v2489 = vlaneseq
        %v2490 = vshrl.u32 %v2489, 7
        %v2491 = vsub.s32 3, %v2490
        %v2492 = vrot.slane %v1506, %v2491
        %v2493 = vlaneseq
        %v2494 = vshrl.u32 %v2493, 7
        %v2495 = vsub.s32 4, %v2494
        %v2496 = vrot.slane %v1506, %v2495
        %v2497 = vlaneseq
        %v2498 = vshrl.u32 %v2497, 7
        %v2499 = vsub.s32 5, %v2498
        %v2500 = vrot.slane %v1506, %v2499
        %v2501 = vlaneseq
        %v2502 = vshrl.u32 %v2501, 7
        %v2503 = vsub.s32 6, %v2502
        %v2504 = vrot.slane %v1506, %v2503
        %v2505 = vlaneseq
        %v2506 = vshrl.u32 %v2505, 7
        %v2507 = vsub.s32 7, %v2506
        %v2508 = vrot.slane %v1506, %v2507
        %v2509 = vlaneseq
        %v2510 = vshrl.u32 %v2509, 7
        %v2511 = vsub.s32 0, %v2510
        %v2512 = vrot.slane %v1508, %v2511
        %v2513 = vlaneseq
        %v2514 = vshrl.u32 %v2513, 7
        %v2515 = vsub.s32 1, %v2514
        %v2516 = vrot.slane %v1508, %v2515
        %v2517 = vlaneseq
        %v2518 = vshrl.u32 %v2517, 7
        %v2519 = vsub.s32 2, %v2518
        %v2520 = vrot.slane %v1508, %v2519
        %v2521 = vlaneseq
        %v2522 = vshrl.u32 %v2521, 7
        %v2523 = vsub.s32 3, %v2522
        %v2524 = vrot.slane %v1508, %v2523
        %v2525 = vlaneseq
        %v2526 = vshrl.u32 %v2525, 7
        %v2527 = vsub.s32 4, %v2526
        %v2528 = vrot.slane %v1508, %v2527
        %v2529 = vlaneseq
        %v2530 = vshrl.u32 %v2529, 7
        %v2531 = vsub.s32 5, %v2530
        %v2532 = vrot.slane %v1508, %v2531
        %v2533 = vlaneseq
        %v2534 = vshrl.u32 %v2533, 7
        %v2535 = vsub.s32 6, %v2534
        %v2536 = vrot.slane %v1508, %v2535
        %v2537 = vlaneseq
        %v2538 = vshrl.u32 %v2537, 7
        %v2539 = vsub.s32 7, %v2538
        %v2540 = vrot.slane %v1508, %v2539
        %v2541 = vlaneseq
        %v2542 = vshrl.u32 %v2541, 7
        %v2543 = vsub.s32 0, %v2542
        %v2544 = vrot.slane %v1510, %v2543
        %v2545 = vlaneseq
        %v2546 = vshrl.u32 %v2545, 7
        %v2547 = vsub.s32 1, %v2546
        %v2548 = vrot.slane %v1510, %v2547
        %v2549 = vlaneseq
        %v2550 = vshrl.u32 %v2549, 7
        %v2551 = vsub.s32 2, %v2550
        %v2552 = vrot.slane %v1510, %v2551
        %v2553 = vlaneseq
        %v2554 = vshrl.u32 %v2553, 7
        %v2555 = vsub.s32 3, %v2554
        %v2556 = vrot.slane %v1510, %v2555
        %v2557 = vlaneseq
        %v2558 = vshrl.u32 %v2557, 7
        %v2559 = vsub.s32 4, %v2558
        %v2560 = vrot.slane %v1510, %v2559
        %v2561 = vlaneseq
        %v2562 = vshrl.u32 %v2561, 7
        %v2563 = vsub.s32 5, %v2562
        %v2564 = vrot.slane %v1510, %v2563
        %v2565 = vlaneseq
        %v2566 = vshrl.u32 %v2565, 7
        %v2567 = vsub.s32 6, %v2566
        %v2568 = vrot.slane %v1510, %v2567
        %v2569 = vlaneseq
        %v2570 = vshrl.u32 %v2569, 7
        %v2571 = vsub.s32 7, %v2570
        %v2572 = vrot.slane %v1510, %v2571
        %v2573 = vlaneseq
        %v2574 = vshrl.u32 %v2573, 7
        %v2575 = vsub.s32 0, %v2574
        %v2576 = vrot.slane %v1512, %v2575
        %v2577 = vlaneseq
        %v2578 = vshrl.u32 %v2577, 7
        %v2579 = vsub.s32 1, %v2578
        %v2580 = vrot.slane %v1512, %v2579
        %v2581 = vlaneseq
        %v2582 = vshrl.u32 %v2581, 7
        %v2583 = vsub.s32 2, %v2582
        %v2584 = vrot.slane %v1512, %v2583
        %v2585 = vlaneseq
        %v2586 = vshrl.u32 %v2585, 7
        %v2587 = vsub.s32 3, %v2586
        %v2588 = vrot.slane %v1512, %v2587
        %v2589 = vlaneseq
        %v2590 = vshrl.u32 %v2589, 7
        %v2591 = vsub.s32 4, %v2590
        %v2592 = vrot.slane %v1512, %v2591
        %v2593 = vlaneseq
        %v2594 = vshrl.u32 %v2593, 7
        %v2595 = vsub.s32 5, %v2594
        %v2596 = vrot.slane %v1512, %v2595
        %v2597 = vlaneseq
        %v2598 = vshrl.u32 %v2597, 7
        %v2599 = vsub.s32 6, %v2598
        %v2600 = vrot.slane %v1512, %v2599
        %v2601 = vlaneseq
        %v2602 = vshrl.u32 %v2601, 7
        %v2603 = vsub.s32 7, %v2602
        %v2604 = vrot.slane %v1512, %v2603
        %v2605 = vlaneseq
        %v2606 = vshrl.u32 %v2605, 7
        %v2607 = vsub.s32 0, %v2606
        %v2608 = vrot.slane %v1514, %v2607
        %v2609 = vlaneseq
        %v2610 = vshrl.u32 %v2609, 7
        %v2611 = vsub.s32 1, %v2610
        %v2612 = vrot.slane %v1514, %v2611
        %v2613 = vlaneseq
        %v2614 = vshrl.u32 %v2613, 7
        %v2615 = vsub.s32 2, %v2614
        %v2616 = vrot.slane %v1514, %v2615
        %v2617 = vlaneseq
        %v2618 = vshrl.u32 %v2617, 7
        %v2619 = vsub.s32 3, %v2618
        %v2620 = vrot.slane %v1514, %v2619
        %v2621 = vlaneseq
        %v2622 = vshrl.u32 %v2621, 7
        %v2623 = vsub.s32 4, %v2622
        %v2624 = vrot.slane %v1514, %v2623
        %v2625 = vlaneseq
        %v2626 = vshrl.u32 %v2625, 7
        %v2627 = vsub.s32 5, %v2626
        %v2628 = vrot.slane %v1514, %v2627
        %v2629 = vlaneseq
        %v2630 = vshrl.u32 %v2629, 7
        %v2631 = vsub.s32 6, %v2630
        %v2632 = vrot.slane %v1514, %v2631
        %v2633 = vlaneseq
        %v2634 = vshrl.u32 %v2633, 7
        %v2635 = vsub.s32 7, %v2634
        %v2636 = vrot.slane %v1514, %v2635
        %v2637 = vlaneseq
        %v2638 = vshrl.u32 %v2637, 7
        %v2639 = vsub.s32 0, %v2638
        %v2640 = vrot.slane %v1516, %v2639
        %v2641 = vlaneseq
        %v2642 = vshrl.u32 %v2641, 7
        %v2643 = vsub.s32 1, %v2642
        %v2644 = vrot.slane %v1516, %v2643
        %v2645 = vlaneseq
        %v2646 = vshrl.u32 %v2645, 7
        %v2647 = vsub.s32 2, %v2646
        %v2648 = vrot.slane %v1516, %v2647
        %v2649 = vlaneseq
        %v2650 = vshrl.u32 %v2649, 7
        %v2651 = vsub.s32 3, %v2650
        %v2652 = vrot.slane %v1516, %v2651
        %v2653 = vlaneseq
        %v2654 = vshrl.u32 %v2653, 7
        %v2655 = vsub.s32 4, %v2654
        %v2656 = vrot.slane %v1516, %v2655
        %v2657 = vlaneseq
        %v2658 = vshrl.u32 %v2657, 7
        %v2659 = vsub.s32 5, %v2658
        %v2660 = vrot.slane %v1516, %v2659
        %v2661 = vlaneseq
        %v2662 = vshrl.u32 %v2661, 7
        %v2663 = vsub.s32 6, %v2662
        %v2664 = vrot.slane %v1516, %v2663
        %v2665 = vlaneseq
        %v2666 = vshrl.u32 %v2665, 7
        %v2667 = vsub.s32 7, %v2666
        %v2668 = vrot.slane %v1516, %v2667
        %v2669 = vlaneseq
        %v2670 = vshrl.u32 %v2669, 7
        %v2671 = vsub.s32 0, %v2670
        %v2672 = vrot.slane %v1518, %v2671
        %v2673 = vlaneseq
        %v2674 = vshrl.u32 %v2673, 7
        %v2675 = vsub.s32 1, %v2674
        %v2676 = vrot.slane %v1518, %v2675
        %v2677 = vlaneseq
        %v2678 = vshrl.u32 %v2677, 7
        %v2679 = vsub.s32 2, %v2678
        %v2680 = vrot.slane %v1518, %v2679
        %v2681 = vlaneseq
        %v2682 = vshrl.u32 %v2681, 7
        %v2683 = vsub.s32 3, %v2682
        %v2684 = vrot.slane %v1518, %v2683
        %v2685 = vlaneseq
        %v2686 = vshrl.u32 %v2685, 7
        %v2687 = vsub.s32 4, %v2686
        %v2688 = vrot.slane %v1518, %v2687
        %v2689 = vlaneseq
        %v2690 = vshrl.u32 %v2689, 7
        %v2691 = vsub.s32 5, %v2690
        %v2692 = vrot.slane %v1518, %v2691
        %v2693 = vlaneseq
        %v2694 = vshrl.u32 %v2693, 7
        %v2695 = vsub.s32 6, %v2694
        %v2696 = vrot.slane %v1518, %v2695
        %v2697 = vlaneseq
        %v2698 = vshrl.u32 %v2697, 7
        %v2699 = vsub.s32 7, %v2698
        %v2700 = vrot.slane %v1518, %v2699
        %v2701 = vlaneseq
        %v2702 = vshrl.u32 %v2701, 7
        %v2703 = vsub.s32 0, %v2702
        %v2704 = vrot.slane %v1520, %v2703
        %v2705 = vlaneseq
        %v2706 = vshrl.u32 %v2705, 7
        %v2707 = vsub.s32 1, %v2706
        %v2708 = vrot.slane %v1520, %v2707
        %v2709 = vlaneseq
        %v2710 = vshrl.u32 %v2709, 7
        %v2711 = vsub.s32 2, %v2710
        %v2712 = vrot.slane %v1520, %v2711
        %v2713 = vlaneseq
        %v2714 = vshrl.u32 %v2713, 7
        %v2715 = vsub.s32 3, %v2714
        %v2716 = vrot.slane %v1520, %v2715
        %v2717 = vlaneseq
        %v2718 = vshrl.u32 %v2717, 7
        %v2719 = vsub.s32 4, %v2718
        %v2720 = vrot.slane %v1520, %v2719
        %v2721 = vlaneseq
        %v2722 = vshrl.u32 %v2721, 7
        %v2723 = vsub.s32 5, %v2722
        %v2724 = vrot.slane %v1520, %v2723
        %v2725 = vlaneseq
        %v2726 = vshrl.u32 %v2725, 7
        %v2727 = vsub.s32 6, %v2726
        %v2728 = vrot.slane %v1520, %v2727
        %v2729 = vlaneseq
        %v2730 = vshrl.u32 %v2729, 7
        %v2731 = vsub.s32 7, %v2730
        %v2732 = vrot.slane %v1520, %v2731
        %v2733 = vlaneseq
        %v2734 = vshrl.u32 %v2733, 7
        %v2735 = vsub.s32 0, %v2734
        %v2736 = vrot.slane %v1522, %v2735
        %v2737 = vlaneseq
        %v2738 = vshrl.u32 %v2737, 7
        %v2739 = vsub.s32 1, %v2738
        %v2740 = vrot.slane %v1522, %v2739
        %v2741 = vlaneseq
        %v2742 = vshrl.u32 %v2741, 7
        %v2743 = vsub.s32 2, %v2742
        %v2744 = vrot.slane %v1522, %v2743
        %v2745 = vlaneseq
        %v2746 = vshrl.u32 %v2745, 7
        %v2747 = vsub.s32 3, %v2746
        %v2748 = vrot.slane %v1522, %v2747
        %v2749 = vlaneseq
        %v2750 = vshrl.u32 %v2749, 7
        %v2751 = vsub.s32 4, %v2750
        %v2752 = vrot.slane %v1522, %v2751
        %v2753 = vlaneseq
        %v2754 = vshrl.u32 %v2753, 7
        %v2755 = vsub.s32 5, %v2754
        %v2756 = vrot.slane %v1522, %v2755
        %v2757 = vlaneseq
        %v2758 = vshrl.u32 %v2757, 7
        %v2759 = vsub.s32 6, %v2758
        %v2760 = vrot.slane %v1522, %v2759
        %v2761 = vlaneseq
        %v2762 = vshrl.u32 %v2761, 7
        %v2763 = vsub.s32 7, %v2762
        %v2764 = vrot.slane %v1522, %v2763
        %v2765 = vlaneseq
        %v2766 = vshrl.u32 %v2765, 7
        %v2767 = vsub.s32 0, %v2766
        %v2768 = vrot.slane %v1524, %v2767
        %v2769 = vlaneseq
        %v2770 = vshrl.u32 %v2769, 7
        %v2771 = vsub.s32 1, %v2770
        %v2772 = vrot.slane %v1524, %v2771
        %v2773 = vlaneseq
        %v2774 = vshrl.u32 %v2773, 7
        %v2775 = vsub.s32 2, %v2774
        %v2776 = vrot.slane %v1524, %v2775
        %v2777 = vlaneseq
        %v2778 = vshrl.u32 %v2777, 7
        %v2779 = vsub.s32 3, %v2778
        %v2780 = vrot.slane %v1524, %v2779
        %v2781 = vlaneseq
        %v2782 = vshrl.u32 %v2781, 7
        %v2783 = vsub.s32 4, %v2782
        %v2784 = vrot.slane %v1524, %v2783
        %v2785 = vlaneseq
        %v2786 = vshrl.u32 %v2785, 7
        %v2787 = vsub.s32 5, %v2786
        %v2788 = vrot.slane %v1524, %v2787
        %v2789 = vlaneseq
        %v2790 = vshrl.u32 %v2789, 7
        %v2791 = vsub.s32 6, %v2790
        %v2792 = vrot.slane %v1524, %v2791
        %v2793 = vlaneseq
        %v2794 = vshrl.u32 %v2793, 7
        %v2795 = vsub.s32 7, %v2794
        %v2796 = vrot.slane %v1524, %v2795
        %v2797 = vlaneseq
        %v2798 = vshrl.u32 %v2797, 7
        %v2799 = vsub.s32 0, %v2798
        %v2800 = vrot.slane %v1526, %v2799
        %v2801 = vlaneseq
        %v2802 = vshrl.u32 %v2801, 7
        %v2803 = vsub.s32 1, %v2802
        %v2804 = vrot.slane %v1526, %v2803
        %v2805 = vlaneseq
        %v2806 = vshrl.u32 %v2805, 7
        %v2807 = vsub.s32 2, %v2806
        %v2808 = vrot.slane %v1526, %v2807
        %v2809 = vlaneseq
        %v2810 = vshrl.u32 %v2809, 7
        %v2811 = vsub.s32 3, %v2810
        %v2812 = vrot.slane %v1526, %v2811
        %v2813 = vlaneseq
        %v2814 = vshrl.u32 %v2813, 7
        %v2815 = vsub.s32 4, %v2814
        %v2816 = vrot.slane %v1526, %v2815
        %v2817 = vlaneseq
        %v2818 = vshrl.u32 %v2817, 7
        %v2819 = vsub.s32 5, %v2818
        %v2820 = vrot.slane %v1526, %v2819
        %v2821 = vlaneseq
        %v2822 = vshrl.u32 %v2821, 7
        %v2823 = vsub.s32 6, %v2822
        %v2824 = vrot.slane %v1526, %v2823
        %v2825 = vlaneseq
        %v2826 = vshrl.u32 %v2825, 7
        %v2827 = vsub.s32 7, %v2826
        %v2828 = vrot.slane %v1526, %v2827
        %v2829 = vlaneseq
        %v2830 = vshrl.u32 %v2829, 7
        %v2831 = vsub.s32 0, %v2830
        %v2832 = vrot.slane %v1528, %v2831
        %v2833 = vlaneseq
        %v2834 = vshrl.u32 %v2833, 7
        %v2835 = vsub.s32 1, %v2834
        %v2836 = vrot.slane %v1528, %v2835
        %v2837 = vlaneseq
        %v2838 = vshrl.u32 %v2837, 7
        %v2839 = vsub.s32 2, %v2838
        %v2840 = vrot.slane %v1528, %v2839
        %v2841 = vlaneseq
        %v2842 = vshrl.u32 %v2841, 7
        %v2843 = vsub.s32 3, %v2842
        %v2844 = vrot.slane %v1528, %v2843
        %v2845 = vlaneseq
        %v2846 = vshrl.u32 %v2845, 7
        %v2847 = vsub.s32 4, %v2846
        %v2848 = vrot.slane %v1528, %v2847
        %v2849 = vlaneseq
        %v2850 = vshrl.u32 %v2849, 7
        %v2851 = vsub.s32 5, %v2850
        %v2852 = vrot.slane %v1528, %v2851
        %v2853 = vlaneseq
        %v2854 = vshrl.u32 %v2853, 7
        %v2855 = vsub.s32 6, %v2854
        %v2856 = vrot.slane %v1528, %v2855
        %v2857 = vlaneseq
        %v2858 = vshrl.u32 %v2857, 7
        %v2859 = vsub.s32 7, %v2858
        %v2860 = vrot.slane %v1528, %v2859
        %v2861 = vlaneseq
        %v2862 = vshrl.u32 %v2861, 7
        %v2863 = vsub.s32 0, %v2862
        %v2864 = vrot.slane %v1530, %v2863
        %v2865 = vlaneseq
        %v2866 = vshrl.u32 %v2865, 7
        %v2867 = vsub.s32 1, %v2866
        %v2868 = vrot.slane %v1530, %v2867
        %v2869 = vlaneseq
        %v2870 = vshrl.u32 %v2869, 7
        %v2871 = vsub.s32 2, %v2870
        %v2872 = vrot.slane %v1530, %v2871
        %v2873 = vlaneseq
        %v2874 = vshrl.u32 %v2873, 7
        %v2875 = vsub.s32 3, %v2874
        %v2876 = vrot.slane %v1530, %v2875
        %v2877 = vlaneseq
        %v2878 = vshrl.u32 %v2877, 7
        %v2879 = vsub.s32 4, %v2878
        %v2880 = vrot.slane %v1530, %v2879
        %v2881 = vlaneseq
        %v2882 = vshrl.u32 %v2881, 7
        %v2883 = vsub.s32 5, %v2882
        %v2884 = vrot.slane %v1530, %v2883
        %v2885 = vlaneseq
        %v2886 = vshrl.u32 %v2885, 7
        %v2887 = vsub.s32 6, %v2886
        %v2888 = vrot.slane %v1530, %v2887
        %v2889 = vlaneseq
        %v2890 = vshrl.u32 %v2889, 7
        %v2891 = vsub.s32 7, %v2890
        %v2892 = vrot.slane %v1530, %v2891
        %v2893 = vlaneseq
        %v2894 = vshrl.u32 %v2893, 7
        %v2895 = vsub.s32 0, %v2894
        %v2896 = vrot.slane %v1532, %v2895
        %v2897 = vlaneseq
        %v2898 = vshrl.u32 %v2897, 7
        %v2899 = vsub.s32 1, %v2898
        %v2900 = vrot.slane %v1532, %v2899
        %v2901 = vlaneseq
        %v2902 = vshrl.u32 %v2901, 7
        %v2903 = vsub.s32 2, %v2902
        %v2904 = vrot.slane %v1532, %v2903
        %v2905 = vlaneseq
        %v2906 = vshrl.u32 %v2905, 7
        %v2907 = vsub.s32 3, %v2906
        %v2908 = vrot.slane %v1532, %v2907
        %v2909 = vlaneseq
        %v2910 = vshrl.u32 %v2909, 7
        %v2911 = vsub.s32 4, %v2910
        %v2912 = vrot.slane %v1532, %v2911
        %v2913 = vlaneseq
        %v2914 = vshrl.u32 %v2913, 7
        %v2915 = vsub.s32 5, %v2914
        %v2916 = vrot.slane %v1532, %v2915
        %v2917 = vlaneseq
        %v2918 = vshrl.u32 %v2917, 7
        %v2919 = vsub.s32 6, %v2918
        %v2920 = vrot.slane %v1532, %v2919
        %v2921 = vlaneseq
        %v2922 = vshrl.u32 %v2921, 7
        %v2923 = vsub.s32 7, %v2922
        %v2924 = vrot.slane %v1532, %v2923
        %v2925 = vlaneseq
        %v2926 = vshrl.u32 %v2925, 7
        %v2927 = vsub.s32 0, %v2926
        %v2928 = vrot.slane %v1534, %v2927
        %v2929 = vlaneseq
        %v2930 = vshrl.u32 %v2929, 7
        %v2931 = vsub.s32 1, %v2930
        %v2932 = vrot.slane %v1534, %v2931
        %v2933 = vlaneseq
        %v2934 = vshrl.u32 %v2933, 7
        %v2935 = vsub.s32 2, %v2934
        %v2936 = vrot.slane %v1534, %v2935
        %v2937 = vlaneseq
        %v2938 = vshrl.u32 %v2937, 7
        %v2939 = vsub.s32 3, %v2938
        %v2940 = vrot.slane %v1534, %v2939
        %v2941 = vlaneseq
        %v2942 = vshrl.u32 %v2941, 7
        %v2943 = vsub.s32 4, %v2942
        %v2944 = vrot.slane %v1534, %v2943
        %v2945 = vlaneseq
        %v2946 = vshrl.u32 %v2945, 7
        %v2947 = vsub.s32 5, %v2946
        %v2948 = vrot.slane %v1534, %v2947
        %v2949 = vlaneseq
        %v2950 = vshrl.u32 %v2949, 7
        %v2951 = vsub.s32 6, %v2950
        %v2952 = vrot.slane %v1534, %v2951
        %v2953 = vlaneseq
        %v2954 = vshrl.u32 %v2953, 7
        %v2955 = vsub.s32 7, %v2954
        %v2956 = vrot.slane %v1534, %v2955
        %v2957 = vlaneseq
        %v2958 = vshrl.u32 %v2957, 7
        %v2959 = vsub.s32 0, %v2958
        %v2960 = vrot.slane %v1536, %v2959
        %v2961 = vlaneseq
        %v2962 = vshrl.u32 %v2961, 7
        %v2963 = vsub.s32 1, %v2962
        %v2964 = vrot.slane %v1536, %v2963
        %v2965 = vlaneseq
        %v2966 = vshrl.u32 %v2965, 7
        %v2967 = vsub.s32 2, %v2966
        %v2968 = vrot.slane %v1536, %v2967
        %v2969 = vlaneseq
        %v2970 = vshrl.u32 %v2969, 7
        %v2971 = vsub.s32 3, %v2970
        %v2972 = vrot.slane %v1536, %v2971
        %v2973 = vlaneseq
        %v2974 = vshrl.u32 %v2973, 7
        %v2975 = vsub.s32 4, %v2974
        %v2976 = vrot.slane %v1536, %v2975
        %v2977 = vlaneseq
        %v2978 = vshrl.u32 %v2977, 7
        %v2979 = vsub.s32 5, %v2978
        %v2980 = vrot.slane %v1536, %v2979
        %v2981 = vlaneseq
        %v2982 = vshrl.u32 %v2981, 7
        %v2983 = vsub.s32 6, %v2982
        %v2984 = vrot.slane %v1536, %v2983
        %v2985 = vlaneseq
        %v2986 = vshrl.u32 %v2985, 7
        %v2987 = vsub.s32 7, %v2986
        %v2988 = vrot.slane %v1536, %v2987
        %v2989 = vlaneseq
        %v2990 = vshrl.u32 %v2989, 7
        %v2991 = vsub.s32 0, %v2990
        %v2992 = vrot.slane %v1538, %v2991
        %v2993 = vlaneseq
        %v2994 = vshrl.u32 %v2993, 7
        %v2995 = vsub.s32 1, %v2994
        %v2996 = vrot.slane %v1538, %v2995
        %v2997 = vlaneseq
        %v2998 = vshrl.u32 %v2997, 7
        %v2999 = vsub.s32 2, %v2998
        %v3000 = vrot.slane %v1538, %v2999
        %v3001 = vlaneseq
        %v3002 = vshrl.u32 %v3001, 7
        %v3003 = vsub.s32 3, %v3002
        %v3004 = vrot.slane %v1538, %v3003
        %v3005 = vlaneseq
        %v3006 = vshrl.u32 %v3005, 7
        %v3007 = vsub.s32 4, %v3006
        %v3008 = vrot.slane %v1538, %v3007
        %v3009 = vlaneseq
        %v3010 = vshrl.u32 %v3009, 7
        %v3011 = vsub.s32 5, %v3010
        %v3012 = vrot.slane %v1538, %v3011
        %v3013 = vlaneseq
        %v3014 = vshrl.u32 %v3013, 7
        %v3015 = vsub.s32 6, %v3014
        %v3016 = vrot.slane %v1538, %v3015
        %v3017 = vlaneseq
        %v3018 = vshrl.u32 %v3017, 7
        %v3019 = vsub.s32 7, %v3018
        %v3020 = vrot.slane %v1538, %v3019
        %v3021 = vlaneseq
        %v3022 = vshrl.u32 %v3021, 7
        %v3023 = vsub.s32 0, %v3022
        %v3024 = vrot.slane %v1540, %v3023
        %v3025 = vlaneseq
        %v3026 = vshrl.u32 %v3025, 7
        %v3027 = vsub.s32 1, %v3026
        %v3028 = vrot.slane %v1540, %v3027
        %v3029 = vlaneseq
        %v3030 = vshrl.u32 %v3029, 7
        %v3031 = vsub.s32 2, %v3030
        %v3032 = vrot.slane %v1540, %v3031
        %v3033 = vlaneseq
        %v3034 = vshrl.u32 %v3033, 7
        %v3035 = vsub.s32 3, %v3034
        %v3036 = vrot.slane %v1540, %v3035
        %v3037 = vlaneseq
        %v3038 = vshrl.u32 %v3037, 7
        %v3039 = vsub.s32 4, %v3038
        %v3040 = vrot.slane %v1540, %v3039
        %v3041 = vlaneseq
        %v3042 = vshrl.u32 %v3041, 7
        %v3043 = vsub.s32 5, %v3042
        %v3044 = vrot.slane %v1540, %v3043
        %v3045 = vlaneseq
        %v3046 = vshrl.u32 %v3045, 7
        %v3047 = vsub.s32 6, %v3046
        %v3048 = vrot.slane %v1540, %v3047
        %v3049 = vlaneseq
        %v3050 = vshrl.u32 %v3049, 7
        %v3051 = vsub.s32 7, %v3050
        %v3052 = vrot.slane %v1540, %v3051
        %v3053 = vlaneseq
        %v3054 = vshrl.u32 %v3053, 7
        %v3055 = vsub.s32 0, %v3054
        %v3056 = vrot.slane %v1542, %v3055
        %v3057 = vlaneseq
        %v3058 = vshrl.u32 %v3057, 7
        %v3059 = vsub.s32 1, %v3058
        %v3060 = vrot.slane %v1542, %v3059
        %v3061 = vlaneseq
        %v3062 = vshrl.u32 %v3061, 7
        %v3063 = vsub.s32 2, %v3062
        %v3064 = vrot.slane %v1542, %v3063
        %v3065 = vlaneseq
        %v3066 = vshrl.u32 %v3065, 7
        %v3067 = vsub.s32 3, %v3066
        %v3068 = vrot.slane %v1542, %v3067
        %v3069 = vlaneseq
        %v3070 = vshrl.u32 %v3069, 7
        %v3071 = vsub.s32 4, %v3070
        %v3072 = vrot.slane %v1542, %v3071
        %v3073 = vlaneseq
        %v3074 = vshrl.u32 %v3073, 7
        %v3075 = vsub.s32 5, %v3074
        %v3076 = vrot.slane %v1542, %v3075
        %v3077 = vlaneseq
        %v3078 = vshrl.u32 %v3077, 7
        %v3079 = vsub.s32 6, %v3078
        %v3080 = vrot.slane %v1542, %v3079
        %v3081 = vlaneseq
        %v3082 = vshrl.u32 %v3081, 7
        %v3083 = vsub.s32 7, %v3082
        %v3084 = vrot.slane %v1542, %v3083
        %v3085 = vlaneseq
        %v3086 = vshrl.u32 %v3085, 7
        %v3087 = vsub.s32 0, %v3086
        %v3088 = vrot.slane %v1544, %v3087
        %v3089 = vlaneseq
        %v3090 = vshrl.u32 %v3089, 7
        %v3091 = vsub.s32 1, %v3090
        %v3092 = vrot.slane %v1544, %v3091
        %v3093 = vlaneseq
        %v3094 = vshrl.u32 %v3093, 7
        %v3095 = vsub.s32 2, %v3094
        %v3096 = vrot.slane %v1544, %v3095
        %v3097 = vlaneseq
        %v3098 = vshrl.u32 %v3097, 7
        %v3099 = vsub.s32 3, %v3098
        %v3100 = vrot.slane %v1544, %v3099
        %v3101 = vlaneseq
        %v3102 = vshrl.u32 %v3101, 7
        %v3103 = vsub.s32 4, %v3102
        %v3104 = vrot.slane %v1544, %v3103
        %v3105 = vlaneseq
        %v3106 = vshrl.u32 %v3105, 7
        %v3107 = vsub.s32 5, %v3106
        %v3108 = vrot.slane %v1544, %v3107
        %v3109 = vlaneseq
        %v3110 = vshrl.u32 %v3109, 7
        %v3111 = vsub.s32 6, %v3110
        %v3112 = vrot.slane %v1544, %v3111
        %v3113 = vlaneseq
        %v3114 = vshrl.u32 %v3113, 7
        %v3115 = vsub.s32 7, %v3114
        %v3116 = vrot.slane %v1544, %v3115
        %v3117 = vlaneseq
        %v3118 = vshrl.u32 %v3117, 7
        %v3119 = vsub.s32 0, %v3118
        %v3120 = vrot.slane %v1546, %v3119
        %v3121 = vlaneseq
        %v3122 = vshrl.u32 %v3121, 7
        %v3123 = vsub.s32 1, %v3122
        %v3124 = vrot.slane %v1546, %v3123
        %v3125 = vlaneseq
        %v3126 = vshrl.u32 %v3125, 7
        %v3127 = vsub.s32 2, %v3126
        %v3128 = vrot.slane %v1546, %v3127
        %v3129 = vlaneseq
        %v3130 = vshrl.u32 %v3129, 7
        %v3131 = vsub.s32 3, %v3130
        %v3132 = vrot.slane %v1546, %v3131
        %v3133 = vlaneseq
        %v3134 = vshrl.u32 %v3133, 7
        %v3135 = vsub.s32 4, %v3134
        %v3136 = vrot.slane %v1546, %v3135
        %v3137 = vlaneseq
        %v3138 = vshrl.u32 %v3137, 7
        %v3139 = vsub.s32 5, %v3138
        %v3140 = vrot.slane %v1546, %v3139
        %v3141 = vlaneseq
        %v3142 = vshrl.u32 %v3141, 7
        %v3143 = vsub.s32 6, %v3142
        %v3144 = vrot.slane %v1546, %v3143
        %v3145 = vlaneseq
        %v3146 = vshrl.u32 %v3145, 7
        %v3147 = vsub.s32 7, %v3146
        %v3148 = vrot.slane %v1546, %v3147
        %v3149 = vlaneseq
        %v3150 = vshrl.u32 %v3149, 7
        %v3151 = vsub.s32 0, %v3150
        %v3152 = vrot.slane %v1548, %v3151
        %v3153 = vlaneseq
        %v3154 = vshrl.u32 %v3153, 7
        %v3155 = vsub.s32 1, %v3154
        %v3156 = vrot.slane %v1548, %v3155
        %v3157 = vlaneseq
        %v3158 = vshrl.u32 %v3157, 7
        %v3159 = vsub.s32 2, %v3158
        %v3160 = vrot.slane %v1548, %v3159
        %v3161 = vlaneseq
        %v3162 = vshrl.u32 %v3161, 7
        %v3163 = vsub.s32 3, %v3162
        %v3164 = vrot.slane %v1548, %v3163
        %v3165 = vlaneseq
        %v3166 = vshrl.u32 %v3165, 7
        %v3167 = vsub.s32 4, %v3166
        %v3168 = vrot.slane %v1548, %v3167
        %v3169 = vlaneseq
        %v3170 = vshrl.u32 %v3169, 7
        %v3171 = vsub.s32 5, %v3170
        %v3172 = vrot.slane %v1548, %v3171
        %v3173 = vlaneseq
        %v3174 = vshrl.u32 %v3173, 7
        %v3175 = vsub.s32 6, %v3174
        %v3176 = vrot.slane %v1548, %v3175
        %v3177 = vlaneseq
        %v3178 = vshrl.u32 %v3177, 7
        %v3179 = vsub.s32 7, %v3178
        %v3180 = vrot.slane %v1548, %v3179
        %v3181 = vlaneseq
        %v3182 = vshrl.u32 %v3181, 7
        %v3183 = vsub.s32 0, %v3182
        %v3184 = vrot.slane %v1550, %v3183
        %v3185 = vlaneseq
        %v3186 = vshrl.u32 %v3185, 7
        %v3187 = vsub.s32 1, %v3186
        %v3188 = vrot.slane %v1550, %v3187
        %v3189 = vlaneseq
        %v3190 = vshrl.u32 %v3189, 7
        %v3191 = vsub.s32 2, %v3190
        %v3192 = vrot.slane %v1550, %v3191
        %v3193 = vlaneseq
        %v3194 = vshrl.u32 %v3193, 7
        %v3195 = vsub.s32 3, %v3194
        %v3196 = vrot.slane %v1550, %v3195
        %v3197 = vlaneseq
        %v3198 = vshrl.u32 %v3197, 7
        %v3199 = vsub.s32 4, %v3198
        %v3200 = vrot.slane %v1550, %v3199
        %v3201 = vlaneseq
        %v3202 = vshrl.u32 %v3201, 7
        %v3203 = vsub.s32 5, %v3202
        %v3204 = vrot.slane %v1550, %v3203
        %v3205 = vlaneseq
        %v3206 = vshrl.u32 %v3205, 7
        %v3207 = vsub.s32 6, %v3206
        %v3208 = vrot.slane %v1550, %v3207
        %v3209 = vlaneseq
        %v3210 = vshrl.u32 %v3209, 7
        %v3211 = vsub.s32 7, %v3210
        %v3212 = vrot.slane %v1550, %v3211
        %v3213 = vlaneseq
        %v3214 = vshrl.u32 %v3213, 7
        %v3215 = vsub.s32 0, %v3214
        %v3216 = vrot.slane %v1552, %v3215
        %v3217 = vlaneseq
        %v3218 = vshrl.u32 %v3217, 7
        %v3219 = vsub.s32 1, %v3218
        %v3220 = vrot.slane %v1552, %v3219
        %v3221 = vlaneseq
        %v3222 = vshrl.u32 %v3221, 7
        %v3223 = vsub.s32 2, %v3222
        %v3224 = vrot.slane %v1552, %v3223
        %v3225 = vlaneseq
        %v3226 = vshrl.u32 %v3225, 7
        %v3227 = vsub.s32 3, %v3226
        %v3228 = vrot.slane %v1552, %v3227
        %v3229 = vlaneseq
        %v3230 = vshrl.u32 %v3229, 7
        %v3231 = vsub.s32 4, %v3230
        %v3232 = vrot.slane %v1552, %v3231
        %v3233 = vlaneseq
        %v3234 = vshrl.u32 %v3233, 7
        %v3235 = vsub.s32 5, %v3234
        %v3236 = vrot.slane %v1552, %v3235
        %v3237 = vlaneseq
        %v3238 = vshrl.u32 %v3237, 7
        %v3239 = vsub.s32 6, %v3238
        %v3240 = vrot.slane %v1552, %v3239
        %v3241 = vlaneseq
        %v3242 = vshrl.u32 %v3241, 7
        %v3243 = vsub.s32 7, %v3242
        %v3244 = vrot.slane %v1552, %v3243
        %v3245 = vlaneseq
        %v3246 = vshrl.u32 %v3245, 7
        %v3247 = vsub.s32 0, %v3246
        %v3248 = vrot.slane %v1554, %v3247
        %v3249 = vlaneseq
        %v3250 = vshrl.u32 %v3249, 7
        %v3251 = vsub.s32 1, %v3250
        %v3252 = vrot.slane %v1554, %v3251
        %v3253 = vlaneseq
        %v3254 = vshrl.u32 %v3253, 7
        %v3255 = vsub.s32 2, %v3254
        %v3256 = vrot.slane %v1554, %v3255
        %v3257 = vlaneseq
        %v3258 = vshrl.u32 %v3257, 7
        %v3259 = vsub.s32 3, %v3258
        %v3260 = vrot.slane %v1554, %v3259
        %v3261 = vlaneseq
        %v3262 = vshrl.u32 %v3261, 7
        %v3263 = vsub.s32 4, %v3262
        %v3264 = vrot.slane %v1554, %v3263
        %v3265 = vlaneseq
        %v3266 = vshrl.u32 %v3265, 7
        %v3267 = vsub.s32 5, %v3266
        %v3268 = vrot.slane %v1554, %v3267
        %v3269 = vlaneseq
        %v3270 = vshrl.u32 %v3269, 7
        %v3271 = vsub.s32 6, %v3270
        %v3272 = vrot.slane %v1554, %v3271
        %v3273 = vlaneseq
        %v3274 = vshrl.u32 %v3273, 7
        %v3275 = vsub.s32 7, %v3274
        %v3276 = vrot.slane %v1554, %v3275
        %v3277 = vlaneseq
        %v3278 = vshrl.u32 %v3277, 7
        %v3279 = vsub.s32 0, %v3278
        %v3280 = vrot.slane %v1556, %v3279
        %v3281 = vlaneseq
        %v3282 = vshrl.u32 %v3281, 7
        %v3283 = vsub.s32 1, %v3282
        %v3284 = vrot.slane %v1556, %v3283
        %v3285 = vlaneseq
        %v3286 = vshrl.u32 %v3285, 7
        %v3287 = vsub.s32 2, %v3286
        %v3288 = vrot.slane %v1556, %v3287
        %v3289 = vlaneseq
        %v3290 = vshrl.u32 %v3289, 7
        %v3291 = vsub.s32 3, %v3290
        %v3292 = vrot.slane %v1556, %v3291
        %v3293 = vlaneseq
        %v3294 = vshrl.u32 %v3293, 7
        %v3295 = vsub.s32 4, %v3294
        %v3296 = vrot.slane %v1556, %v3295
        %v3297 = vlaneseq
        %v3298 = vshrl.u32 %v3297, 7
        %v3299 = vsub.s32 5, %v3298
        %v3300 = vrot.slane %v1556, %v3299
        %v3301 = vlaneseq
        %v3302 = vshrl.u32 %v3301, 7
        %v3303 = vsub.s32 6, %v3302
        %v3304 = vrot.slane %v1556, %v3303
        %v3305 = vlaneseq
        %v3306 = vshrl.u32 %v3305, 7
        %v3307 = vsub.s32 7, %v3306
        %v3308 = vrot.slane %v1556, %v3307
        %v3309 = vlaneseq
        %v3310 = vshrl.u32 %v3309, 7
        %v3311 = vsub.s32 0, %v3310
        %v3312 = vrot.slane %v1558, %v3311
        %v3313 = vlaneseq
        %v3314 = vshrl.u32 %v3313, 7
        %v3315 = vsub.s32 1, %v3314
        %v3316 = vrot.slane %v1558, %v3315
        %v3317 = vlaneseq
        %v3318 = vshrl.u32 %v3317, 7
        %v3319 = vsub.s32 2, %v3318
        %v3320 = vrot.slane %v1558, %v3319
        %v3321 = vlaneseq
        %v3322 = vshrl.u32 %v3321, 7
        %v3323 = vsub.s32 3, %v3322
        %v3324 = vrot.slane %v1558, %v3323
        %v3325 = vlaneseq
        %v3326 = vshrl.u32 %v3325, 7
        %v3327 = vsub.s32 4, %v3326
        %v3328 = vrot.slane %v1558, %v3327
        %v3329 = vlaneseq
        %v3330 = vshrl.u32 %v3329, 7
        %v3331 = vsub.s32 5, %v3330
        %v3332 = vrot.slane %v1558, %v3331
        %v3333 = vlaneseq
        %v3334 = vshrl.u32 %v3333, 7
        %v3335 = vsub.s32 6, %v3334
        %v3336 = vrot.slane %v1558, %v3335
        %v3337 = vlaneseq
        %v3338 = vshrl.u32 %v3337, 7
        %v3339 = vsub.s32 7, %v3338
        %v3340 = vrot.slane %v1558, %v3339
        %v3341 = vlaneseq
        %v3342 = vshrl.u32 %v3341, 7
        %v3343 = vsub.s32 0, %v3342
        %v3344 = vrot.slane %v1560, %v3343
        %v3345 = vlaneseq
        %v3346 = vshrl.u32 %v3345, 7
        %v3347 = vsub.s32 1, %v3346
        %v3348 = vrot.slane %v1560, %v3347
        %v3349 = vlaneseq
        %v3350 = vshrl.u32 %v3349, 7
        %v3351 = vsub.s32 2, %v3350
        %v3352 = vrot.slane %v1560, %v3351
        %v3353 = vlaneseq
        %v3354 = vshrl.u32 %v3353, 7
        %v3355 = vsub.s32 3, %v3354
        %v3356 = vrot.slane %v1560, %v3355
        %v3357 = vlaneseq
        %v3358 = vshrl.u32 %v3357, 7
        %v3359 = vsub.s32 4, %v3358
        %v3360 = vrot.slane %v1560, %v3359
        %v3361 = vlaneseq
        %v3362 = vshrl.u32 %v3361, 7
        %v3363 = vsub.s32 5, %v3362
        %v3364 = vrot.slane %v1560, %v3363
        %v3365 = vlaneseq
        %v3366 = vshrl.u32 %v3365, 7
        %v3367 = vsub.s32 6, %v3366
        %v3368 = vrot.slane %v1560, %v3367
        %v3369 = vlaneseq
        %v3370 = vshrl.u32 %v3369, 7
        %v3371 = vsub.s32 7, %v3370
        %v3372 = vrot.slane %v1560, %v3371
        %v3373 = vlaneseq
        %v3374 = vshrl.u32 %v3373, 7
        %v3375 = vsub.s32 0, %v3374
        %v3376 = vrot.slane %v1562, %v3375
        %v3377 = vlaneseq
        %v3378 = vshrl.u32 %v3377, 7
        %v3379 = vsub.s32 1, %v3378
        %v3380 = vrot.slane %v1562, %v3379
        %v3381 = vlaneseq
        %v3382 = vshrl.u32 %v3381, 7
        %v3383 = vsub.s32 2, %v3382
        %v3384 = vrot.slane %v1562, %v3383
        %v3385 = vlaneseq
        %v3386 = vshrl.u32 %v3385, 7
        %v3387 = vsub.s32 3, %v3386
        %v3388 = vrot.slane %v1562, %v3387
        %v3389 = vlaneseq
        %v3390 = vshrl.u32 %v3389, 7
        %v3391 = vsub.s32 4, %v3390
        %v3392 = vrot.slane %v1562, %v3391
        %v3393 = vlaneseq
        %v3394 = vshrl.u32 %v3393, 7
        %v3395 = vsub.s32 5, %v3394
        %v3396 = vrot.slane %v1562, %v3395
        %v3397 = vlaneseq
        %v3398 = vshrl.u32 %v3397, 7
        %v3399 = vsub.s32 6, %v3398
        %v3400 = vrot.slane %v1562, %v3399
        %v3401 = vlaneseq
        %v3402 = vshrl.u32 %v3401, 7
        %v3403 = vsub.s32 7, %v3402
        %v3404 = vrot.slane %v1562, %v3403
        %v3405 = vlaneseq
        %v3406 = vshrl.u32 %v3405, 7
        %v3407 = vsub.s32 0, %v3406
        %v3408 = vrot.slane %v1564, %v3407
        %v3409 = vlaneseq
        %v3410 = vshrl.u32 %v3409, 7
        %v3411 = vsub.s32 1, %v3410
        %v3412 = vrot.slane %v1564, %v3411
        %v3413 = vlaneseq
        %v3414 = vshrl.u32 %v3413, 7
        %v3415 = vsub.s32 2, %v3414
        %v3416 = vrot.slane %v1564, %v3415
        %v3417 = vlaneseq
        %v3418 = vshrl.u32 %v3417, 7
        %v3419 = vsub.s32 3, %v3418
        %v3420 = vrot.slane %v1564, %v3419
        %v3421 = vlaneseq
        %v3422 = vshrl.u32 %v3421, 7
        %v3423 = vsub.s32 4, %v3422
        %v3424 = vrot.slane %v1564, %v3423
        %v3425 = vlaneseq
        %v3426 = vshrl.u32 %v3425, 7
        %v3427 = vsub.s32 5, %v3426
        %v3428 = vrot.slane %v1564, %v3427
        %v3429 = vlaneseq
        %v3430 = vshrl.u32 %v3429, 7
        %v3431 = vsub.s32 6, %v3430
        %v3432 = vrot.slane %v1564, %v3431
        %v3433 = vlaneseq
        %v3434 = vshrl.u32 %v3433, 7
        %v3435 = vsub.s32 7, %v3434
        %v3436 = vrot.slane %v1564, %v3435
        %v3437 = vlaneseq
        %v3438 = vshrl.u32 %v3437, 7
        %v3439 = vsub.s32 0, %v3438
        %v3440 = vrot.slane %v1566, %v3439
        %v3441 = vlaneseq
        %v3442 = vshrl.u32 %v3441, 7
        %v3443 = vsub.s32 1, %v3442
        %v3444 = vrot.slane %v1566, %v3443
        %v3445 = vlaneseq
        %v3446 = vshrl.u32 %v3445, 7
        %v3447 = vsub.s32 2, %v3446
        %v3448 = vrot.slane %v1566, %v3447
        %v3449 = vlaneseq
        %v3450 = vshrl.u32 %v3449, 7
        %v3451 = vsub.s32 3, %v3450
        %v3452 = vrot.slane %v1566, %v3451
        %v3453 = vlaneseq
        %v3454 = vshrl.u32 %v3453, 7
        %v3455 = vsub.s32 4, %v3454
        %v3456 = vrot.slane %v1566, %v3455
        %v3457 = vlaneseq
        %v3458 = vshrl.u32 %v3457, 7
        %v3459 = vsub.s32 5, %v3458
        %v3460 = vrot.slane %v1566, %v3459
        %v3461 = vlaneseq
        %v3462 = vshrl.u32 %v3461, 7
        %v3463 = vsub.s32 6, %v3462
        %v3464 = vrot.slane %v1566, %v3463
        %v3465 = vlaneseq
        %v3466 = vshrl.u32 %v3465, 7
        %v3467 = vsub.s32 7, %v3466
        %v3468 = vrot.slane %v1566, %v3467
        %v3469 = vlaneseq
        %v3470 = vshrl.u32 %v3469, 7
        %v3471 = vsub.s32 0, %v3470
        %v3472 = vrot.slane %v1568, %v3471
        %v3473 = vlaneseq
        %v3474 = vshrl.u32 %v3473, 7
        %v3475 = vsub.s32 1, %v3474
        %v3476 = vrot.slane %v1568, %v3475
        %v3477 = vlaneseq
        %v3478 = vshrl.u32 %v3477, 7
        %v3479 = vsub.s32 2, %v3478
        %v3480 = vrot.slane %v1568, %v3479
        %v3481 = vlaneseq
        %v3482 = vshrl.u32 %v3481, 7
        %v3483 = vsub.s32 3, %v3482
        %v3484 = vrot.slane %v1568, %v3483
        %v3485 = vlaneseq
        %v3486 = vshrl.u32 %v3485, 7
        %v3487 = vsub.s32 4, %v3486
        %v3488 = vrot.slane %v1568, %v3487
        %v3489 = vlaneseq
        %v3490 = vshrl.u32 %v3489, 7
        %v3491 = vsub.s32 5, %v3490
        %v3492 = vrot.slane %v1568, %v3491
        %v3493 = vlaneseq
        %v3494 = vshrl.u32 %v3493, 7
        %v3495 = vsub.s32 6, %v3494
        %v3496 = vrot.slane %v1568, %v3495
        %v3497 = vlaneseq
        %v3498 = vshrl.u32 %v3497, 7
        %v3499 = vsub.s32 7, %v3498
        %v3500 = vrot.slane %v1568, %v3499
        %v3501 = vlaneseq
        %v3502 = vshrl.u32 %v3501, 7
        %v3503 = vsub.s32 0, %v3502
        %v3504 = vrot.slane %v1570, %v3503
        %v3505 = vlaneseq
        %v3506 = vshrl.u32 %v3505, 7
        %v3507 = vsub.s32 1, %v3506
        %v3508 = vrot.slane %v1570, %v3507
        %v3509 = vlaneseq
        %v3510 = vshrl.u32 %v3509, 7
        %v3511 = vsub.s32 2, %v3510
        %v3512 = vrot.slane %v1570, %v3511
        %v3513 = vlaneseq
        %v3514 = vshrl.u32 %v3513, 7
        %v3515 = vsub.s32 3, %v3514
        %v3516 = vrot.slane %v1570, %v3515
        %v3517 = vlaneseq
        %v3518 = vshrl.u32 %v3517, 7
        %v3519 = vsub.s32 4, %v3518
        %v3520 = vrot.slane %v1570, %v3519
        %v3521 = vlaneseq
        %v3522 = vshrl.u32 %v3521, 7
        %v3523 = vsub.s32 5, %v3522
        %v3524 = vrot.slane %v1570, %v3523
        %v3525 = vlaneseq
        %v3526 = vshrl.u32 %v3525, 7
        %v3527 = vsub.s32 6, %v3526
        %v3528 = vrot.slane %v1570, %v3527
        %v3529 = vlaneseq
        %v3530 = vshrl.u32 %v3529, 7
        %v3531 = vsub.s32 7, %v3530
        %v3532 = vrot.slane %v1570, %v3531
        %v3533 = vlaneseq
        %v3534 = vshrl.u32 %v3533, 7
        %v3535 = vsub.s32 0, %v3534
        %v3536 = vrot.slane %v1572, %v3535
        %v3537 = vlaneseq
        %v3538 = vshrl.u32 %v3537, 7
        %v3539 = vsub.s32 1, %v3538
        %v3540 = vrot.slane %v1572, %v3539
        %v3541 = vlaneseq
        %v3542 = vshrl.u32 %v3541, 7
        %v3543 = vsub.s32 2, %v3542
        %v3544 = vrot.slane %v1572, %v3543
        %v3545 = vlaneseq
        %v3546 = vshrl.u32 %v3545, 7
        %v3547 = vsub.s32 3, %v3546
        %v3548 = vrot.slane %v1572, %v3547
        %v3549 = vlaneseq
        %v3550 = vshrl.u32 %v3549, 7
        %v3551 = vsub.s32 4, %v3550
        %v3552 = vrot.slane %v1572, %v3551
        %v3553 = vlaneseq
        %v3554 = vshrl.u32 %v3553, 7
        %v3555 = vsub.s32 5, %v3554
        %v3556 = vrot.slane %v1572, %v3555
        %v3557 = vlaneseq
        %v3558 = vshrl.u32 %v3557, 7
        %v3559 = vsub.s32 6, %v3558
        %v3560 = vrot.slane %v1572, %v3559
        %v3561 = vlaneseq
        %v3562 = vshrl.u32 %v3561, 7
        %v3563 = vsub.s32 7, %v3562
        %v3564 = vrot.slane %v1572, %v3563
        %v3565 = vlaneseq
        %v3566 = vshrl.u32 %v3565, 7
        %v3567 = vsub.s32 0, %v3566
        %v3568 = vrot.slane %v1574, %v3567
        %v3569 = vlaneseq
        %v3570 = vshrl.u32 %v3569, 7
        %v3571 = vsub.s32 1, %v3570
        %v3572 = vrot.slane %v1574, %v3571
        %v3573 = vlaneseq
        %v3574 = vshrl.u32 %v3573, 7
        %v3575 = vsub.s32 2, %v3574
        %v3576 = vrot.slane %v1574, %v3575
        %v3577 = vlaneseq
        %v3578 = vshrl.u32 %v3577, 7
        %v3579 = vsub.s32 3, %v3578
        %v3580 = vrot.slane %v1574, %v3579
        %v3581 = vlaneseq
        %v3582 = vshrl.u32 %v3581, 7
        %v3583 = vsub.s32 4, %v3582
        %v3584 = vrot.slane %v1574, %v3583
        %v3585 = vlaneseq
        %v3586 = vshrl.u32 %v3585, 7
        %v3587 = vsub.s32 5, %v3586
        %v3588 = vrot.slane %v1574, %v3587
        %v3589 = vlaneseq
        %v3590 = vshrl.u32 %v3589, 7
        %v3591 = vsub.s32 6, %v3590
        %v3592 = vrot.slane %v1574, %v3591
        %v3593 = vlaneseq
        %v3594 = vshrl.u32 %v3593, 7
        %v3595 = vsub.s32 7, %v3594
        %v3596 = vrot.slane %v1574, %v3595
        %v3597 = vlaneseq
        %v3598 = vshrl.u32 %v3597, 7
        %v3599 = vsub.s32 0, %v3598
        %v3600 = vrot.slane %v1576, %v3599
        %v3601 = vlaneseq
        %v3602 = vshrl.u32 %v3601, 7
        %v3603 = vsub.s32 1, %v3602
        %v3604 = vrot.slane %v1576, %v3603
        %v3605 = vlaneseq
        %v3606 = vshrl.u32 %v3605, 7
        %v3607 = vsub.s32 2, %v3606
        %v3608 = vrot.slane %v1576, %v3607
        %v3609 = vlaneseq
        %v3610 = vshrl.u32 %v3609, 7
        %v3611 = vsub.s32 3, %v3610
        %v3612 = vrot.slane %v1576, %v3611
        %v3613 = vlaneseq
        %v3614 = vshrl.u32 %v3613, 7
        %v3615 = vsub.s32 4, %v3614
        %v3616 = vrot.slane %v1576, %v3615
        %v3617 = vlaneseq
        %v3618 = vshrl.u32 %v3617, 7
        %v3619 = vsub.s32 5, %v3618
        %v3620 = vrot.slane %v1576, %v3619
        %v3621 = vlaneseq
        %v3622 = vshrl.u32 %v3621, 7
        %v3623 = vsub.s32 6, %v3622
        %v3624 = vrot.slane %v1576, %v3623
        %v3625 = vlaneseq
        %v3626 = vshrl.u32 %v3625, 7
        %v3627 = vsub.s32 7, %v3626
        %v3628 = vrot.slane %v1576, %v3627
        %v3629 = vlaneseq
        %v3630 = vshrl.u32 %v3629, 7
        %v3631 = vsub.s32 0, %v3630
        %v3632 = vrot.slane %v1578, %v3631
        %v3633 = vlaneseq
        %v3634 = vshrl.u32 %v3633, 7
        %v3635 = vsub.s32 1, %v3634
        %v3636 = vrot.slane %v1578, %v3635
        %v3637 = vlaneseq
        %v3638 = vshrl.u32 %v3637, 7
        %v3639 = vsub.s32 2, %v3638
        %v3640 = vrot.slane %v1578, %v3639
        %v3641 = vlaneseq
        %v3642 = vshrl.u32 %v3641, 7
        %v3643 = vsub.s32 3, %v3642
        %v3644 = vrot.slane %v1578, %v3643
        %v3645 = vlaneseq
        %v3646 = vshrl.u32 %v3645, 7
        %v3647 = vsub.s32 4, %v3646
        %v3648 = vrot.slane %v1578, %v3647
        %v3649 = vlaneseq
        %v3650 = vshrl.u32 %v3649, 7
        %v3651 = vsub.s32 5, %v3650
        %v3652 = vrot.slane %v1578, %v3651
        %v3653 = vlaneseq
        %v3654 = vshrl.u32 %v3653, 7
        %v3655 = vsub.s32 6, %v3654
        %v3656 = vrot.slane %v1578, %v3655
        %v3657 = vlaneseq
        %v3658 = vshrl.u32 %v3657, 7
        %v3659 = vsub.s32 7, %v3658
        %v3660 = vrot.slane %v1578, %v3659
        %v3661 = vlaneseq
        %v3662 = vshrl.u32 %v3661, 7
        %v3663 = vsub.s32 0, %v3662
        %v3664 = vrot.slane %v1580, %v3663
        %v3665 = vlaneseq
        %v3666 = vshrl.u32 %v3665, 7
        %v3667 = vsub.s32 1, %v3666
        %v3668 = vrot.slane %v1580, %v3667
        %v3669 = vlaneseq
        %v3670 = vshrl.u32 %v3669, 7
        %v3671 = vsub.s32 2, %v3670
        %v3672 = vrot.slane %v1580, %v3671
        %v3673 = vlaneseq
        %v3674 = vshrl.u32 %v3673, 7
        %v3675 = vsub.s32 3, %v3674
        %v3676 = vrot.slane %v1580, %v3675
        %v3677 = vlaneseq
        %v3678 = vshrl.u32 %v3677, 7
        %v3679 = vsub.s32 4, %v3678
        %v3680 = vrot.slane %v1580, %v3679
        %v3681 = vlaneseq
        %v3682 = vshrl.u32 %v3681, 7
        %v3683 = vsub.s32 5, %v3682
        %v3684 = vrot.slane %v1580, %v3683
        %v3685 = vlaneseq
        %v3686 = vshrl.u32 %v3685, 7
        %v3687 = vsub.s32 6, %v3686
        %v3688 = vrot.slane %v1580, %v3687
        %v3689 = vlaneseq
        %v3690 = vshrl.u32 %v3689, 7
        %v3691 = vsub.s32 7, %v3690
        %v3692 = vrot.slane %v1580, %v3691
        %v3693 = vcombine.low %v1648, %v1652
        %v3694 = vcombine.low %v1656, %v1660
        %v3695 = vcombine.low %v1664, %v1668
        %v3696 = vcombine.low %v1672, %v1676
        %v3698 = vunpack.c.l.s4 1966171168
        %v3699 = vunpack.c.0.s8 %v3698
        %v3700 = vlaneseq
        %v3701 = vshrl.u32 %v3700, 7
        %v3702 = vsub.s32 %v3699, %v3701
        %v3703 = vrot.slane %v3693, %v3702
        %v3705 = vunpack.c.l.s4 1966171168
        %v3706 = vunpack.c.0.s8 %v3705
        %v3707 = vlaneseq
        %v3708 = vshrl.u32 %v3707, 7
        %v3709 = vsub.s32 %v3706, %v3708
        %v3710 = vrot.slane %v3694, %v3709
        %v3712 = vunpack.c.l.s4 1966171168
        %v3713 = vunpack.c.0.s8 %v3712
        %v3714 = vlaneseq
        %v3715 = vshrl.u32 %v3714, 7
        %v3716 = vsub.s32 %v3713, %v3715
        %v3717 = vrot.slane %v3695, %v3716
        %v3719 = vunpack.c.l.s4 1966171168
        %v3720 = vunpack.c.0.s8 %v3719
        %v3721 = vlaneseq
        %v3722 = vshrl.u32 %v3721, 7
        %v3723 = vsub.s32 %v3720, %v3722
        %v3724 = vrot.slane %v3696, %v3723
        %v3725 = vcombine.low %v3703, %v3710
        %v3726 = vcombine.low %v3717, %v3724
        %v3728 = vunpack.c.l.s4 1966171168
        %v3729 = vunpack.c.0.s8 %v3728
        %v3730 = vlaneseq
        %v3731 = vshrl.u32 %v3730, 7
        %v3732 = vsub.s32 %v3729, %v3731
        %v3733 = vrot.slane %v3725, %v3732
        %v3735 = vunpack.c.l.s4 1966171168
        %v3736 = vunpack.c.0.s8 %v3735
        %v3737 = vlaneseq
        %v3738 = vshrl.u32 %v3737, 7
        %v3739 = vsub.s32 %v3736, %v3738
        %v3740 = vrot.slane %v3726, %v3739
        %v3741 = vcombine.low %v3733, %v3740
        %v3742 = vcombine.low %v1680, %v1684
        %v3743 = vcombine.low %v1688, %v1692
        %v3744 = vcombine.low %v1696, %v1700
        %v3745 = vcombine.low %v1704, %v1708
        %v3747 = vunpack.c.l.s4 1966171168
        %v3748 = vunpack.c.0.s8 %v3747
        %v3749 = vlaneseq
        %v3750 = vshrl.u32 %v3749, 7
        %v3751 = vsub.s32 %v3748, %v3750
        %v3752 = vrot.slane %v3742, %v3751
        %v3754 = vunpack.c.l.s4 1966171168
        %v3755 = vunpack.c.0.s8 %v3754
        %v3756 = vlaneseq
        %v3757 = vshrl.u32 %v3756, 7
        %v3758 = vsub.s32 %v3755, %v3757
        %v3759 = vrot.slane %v3743, %v3758
        %v3761 = vunpack.c.l.s4 1966171168
        %v3762 = vunpack.c.0.s8 %v3761
        %v3763 = vlaneseq
        %v3764 = vshrl.u32 %v3763, 7
        %v3765 = vsub.s32 %v3762, %v3764
        %v3766 = vrot.slane %v3744, %v3765
        %v3768 = vunpack.c.l.s4 1966171168
        %v3769 = vunpack.c.0.s8 %v3768
        %v3770 = vlaneseq
        %v3771 = vshrl.u32 %v3770, 7
        %v3772 = vsub.s32 %v3769, %v3771
        %v3773 = vrot.slane %v3745, %v3772
        %v3774 = vcombine.low %v3752, %v3759
        %v3775 = vcombine.low %v3766, %v3773
        %v3777 = vunpack.c.l.s4 1966171168
        %v3778 = vunpack.c.0.s8 %v3777
        %v3779 = vlaneseq
        %v3780 = vshrl.u32 %v3779, 7
        %v3781 = vsub.s32 %v3778, %v3780
        %v3782 = vrot.slane %v3774, %v3781
        %v3784 = vunpack.c.l.s4 1966171168
        %v3785 = vunpack.c.0.s8 %v3784
        %v3786 = vlaneseq
        %v3787 = vshrl.u32 %v3786, 7
        %v3788 = vsub.s32 %v3785, %v3787
        %v3789 = vrot.slane %v3775, %v3788
        %v3790 = vcombine.low %v3782, %v3789
        %v3791 = vcombine.low %v1712, %v1716
        %v3792 = vcombine.low %v1720, %v1724
        %v3793 = vcombine.low %v1728, %v1732
        %v3794 = vcombine.low %v1736, %v1740
        %v3796 = vunpack.c.l.s4 1966171168
        %v3797 = vunpack.c.0.s8 %v3796
        %v3798 = vlaneseq
        %v3799 = vshrl.u32 %v3798, 7
        %v3800 = vsub.s32 %v3797, %v3799
        %v3801 = vrot.slane %v3791, %v3800
        %v3803 = vunpack.c.l.s4 1966171168
        %v3804 = vunpack.c.0.s8 %v3803
        %v3805 = vlaneseq
        %v3806 = vshrl.u32 %v3805, 7
        %v3807 = vsub.s32 %v3804, %v3806
        %v3808 = vrot.slane %v3792, %v3807
        %v3810 = vunpack.c.l.s4 1966171168
        %v3811 = vunpack.c.0.s8 %v3810
        %v3812 = vlaneseq
        %v3813 = vshrl.u32 %v3812, 7
        %v3814 = vsub.s32 %v3811, %v3813
        %v3815 = vrot.slane %v3793, %v3814
        %v3817 = vunpack.c.l.s4 1966171168
        %v3818 = vunpack.c.0.s8 %v3817
        %v3819 = vlaneseq
        %v3820 = vshrl.u32 %v3819, 7
        %v3821 = vsub.s32 %v3818, %v3820
        %v3822 = vrot.slane %v3794, %v3821
        %v3823 = vcombine.low %v3801, %v3808
        %v3824 = vcombine.low %v3815, %v3822
        %v3826 = vunpack.c.l.s4 1966171168
        %v3827 = vunpack.c.0.s8 %v3826
        %v3828 = vlaneseq
        %v3829 = vshrl.u32 %v3828, 7
        %v3830 = vsub.s32 %v3827, %v3829
        %v3831 = vrot.slane %v3823, %v3830
        %v3833 = vunpack.c.l.s4 1966171168
        %v3834 = vunpack.c.0.s8 %v3833
        %v3835 = vlaneseq
        %v3836 = vshrl.u32 %v3835, 7
        %v3837 = vsub.s32 %v3834, %v3836
        %v3838 = vrot.slane %v3824, %v3837
        %v3839 = vcombine.low %v3831, %v3838
        %v3840 = vcombine.low %v1744, %v1748
        %v3841 = vcombine.low %v1752, %v1756
        %v3842 = vcombine.low %v1760, %v1764
        %v3843 = vcombine.low %v1768, %v1772
        %v3845 = vunpack.c.l.s4 1966171168
        %v3846 = vunpack.c.0.s8 %v3845
        %v3847 = vlaneseq
        %v3848 = vshrl.u32 %v3847, 7
        %v3849 = vsub.s32 %v3846, %v3848
        %v3850 = vrot.slane %v3840, %v3849
        %v3852 = vunpack.c.l.s4 1966171168
        %v3853 = vunpack.c.0.s8 %v3852
        %v3854 = vlaneseq
        %v3855 = vshrl.u32 %v3854, 7
        %v3856 = vsub.s32 %v3853, %v3855
        %v3857 = vrot.slane %v3841, %v3856
        %v3859 = vunpack.c.l.s4 1966171168
        %v3860 = vunpack.c.0.s8 %v3859
        %v3861 = vlaneseq
        %v3862 = vshrl.u32 %v3861, 7
        %v3863 = vsub.s32 %v3860, %v3862
        %v3864 = vrot.slane %v3842, %v3863
        %v3866 = vunpack.c.l.s4 1966171168
        %v3867 = vunpack.c.0.s8 %v3866
        %v3868 = vlaneseq
        %v3869 = vshrl.u32 %v3868, 7
        %v3870 = vsub.s32 %v3867, %v3869
        %v3871 = vrot.slane %v3843, %v3870
        %v3872 = vcombine.low %v3850, %v3857
        %v3873 = vcombine.low %v3864, %v3871
        %v3875 = vunpack.c.l.s4 1966171168
        %v3876 = vunpack.c.0.s8 %v3875
        %v3877 = vlaneseq
        %v3878 = vshrl.u32 %v3877, 7
        %v3879 = vsub.s32 %v3876, %v3878
        %v3880 = vrot.slane %v3872, %v3879
        %v3882 = vunpack.c.l.s4 1966171168
        %v3883 = vunpack.c.0.s8 %v3882
        %v3884 = vlaneseq
        %v3885 = vshrl.u32 %v3884, 7
        %v3886 = vsub.s32 %v3883, %v3885
        %v3887 = vrot.slane %v3873, %v3886
        %v3888 = vcombine.low %v3880, %v3887
        %v3889 = vcombine.low %v1776, %v1780
        %v3890 = vcombine.low %v1784, %v1788
        %v3891 = vcombine.low %v1792, %v1796
        %v3892 = vcombine.low %v1800, %v1804
        %v3894 = vunpack.c.l.s4 1966171168
        %v3895 = vunpack.c.0.s8 %v3894
        %v3896 = vlaneseq
        %v3897 = vshrl.u32 %v3896, 7
        %v3898 = vsub.s32 %v3895, %v3897
        %v3899 = vrot.slane %v3889, %v3898
        %v3901 = vunpack.c.l.s4 1966171168
        %v3902 = vunpack.c.0.s8 %v3901
        %v3903 = vlaneseq
        %v3904 = vshrl.u32 %v3903, 7
        %v3905 = vsub.s32 %v3902, %v3904
        %v3906 = vrot.slane %v3890, %v3905
        %v3908 = vunpack.c.l.s4 1966171168
        %v3909 = vunpack.c.0.s8 %v3908
        %v3910 = vlaneseq
        %v3911 = vshrl.u32 %v3910, 7
        %v3912 = vsub.s32 %v3909, %v3911
        %v3913 = vrot.slane %v3891, %v3912
        %v3915 = vunpack.c.l.s4 1966171168
        %v3916 = vunpack.c.0.s8 %v3915
        %v3917 = vlaneseq
        %v3918 = vshrl.u32 %v3917, 7
        %v3919 = vsub.s32 %v3916, %v3918
        %v3920 = vrot.slane %v3892, %v3919
        %v3921 = vcombine.low %v3899, %v3906
        %v3922 = vcombine.low %v3913, %v3920
        %v3924 = vunpack.c.l.s4 1966171168
        %v3925 = vunpack.c.0.s8 %v3924
        %v3926 = vlaneseq
        %v3927 = vshrl.u32 %v3926, 7
        %v3928 = vsub.s32 %v3925, %v3927
        %v3929 = vrot.slane %v3921, %v3928
        %v3931 = vunpack.c.l.s4 1966171168
        %v3932 = vunpack.c.0.s8 %v3931
        %v3933 = vlaneseq
        %v3934 = vshrl.u32 %v3933, 7
        %v3935 = vsub.s32 %v3932, %v3934
        %v3936 = vrot.slane %v3922, %v3935
        %v3937 = vcombine.low %v3929, %v3936
        %v3938 = vcombine.low %v1808, %v1812
        %v3939 = vcombine.low %v1816, %v1820
        %v3940 = vcombine.low %v1824, %v1828
        %v3941 = vcombine.low %v1832, %v1836
        %v3943 = vunpack.c.l.s4 1966171168
        %v3944 = vunpack.c.0.s8 %v3943
        %v3945 = vlaneseq
        %v3946 = vshrl.u32 %v3945, 7
        %v3947 = vsub.s32 %v3944, %v3946
        %v3948 = vrot.slane %v3938, %v3947
        %v3950 = vunpack.c.l.s4 1966171168
        %v3951 = vunpack.c.0.s8 %v3950
        %v3952 = vlaneseq
        %v3953 = vshrl.u32 %v3952, 7
        %v3954 = vsub.s32 %v3951, %v3953
        %v3955 = vrot.slane %v3939, %v3954
        %v3957 = vunpack.c.l.s4 1966171168
        %v3958 = vunpack.c.0.s8 %v3957
        %v3959 = vlaneseq
        %v3960 = vshrl.u32 %v3959, 7
        %v3961 = vsub.s32 %v3958, %v3960
        %v3962 = vrot.slane %v3940, %v3961
        %v3964 = vunpack.c.l.s4 1966171168
        %v3965 = vunpack.c.0.s8 %v3964
        %v3966 = vlaneseq
        %v3967 = vshrl.u32 %v3966, 7
        %v3968 = vsub.s32 %v3965, %v3967
        %v3969 = vrot.slane %v3941, %v3968
        %v3970 = vcombine.low %v3948, %v3955
        %v3971 = vcombine.low %v3962, %v3969
        %v3973 = vunpack.c.l.s4 1966171168
        %v3974 = vunpack.c.0.s8 %v3973
        %v3975 = vlaneseq
        %v3976 = vshrl.u32 %v3975, 7
        %v3977 = vsub.s32 %v3974, %v3976
        %v3978 = vrot.slane %v3970, %v3977
        %v3980 = vunpack.c.l.s4 1966171168
        %v3981 = vunpack.c.0.s8 %v3980
        %v3982 = vlaneseq
        %v3983 = vshrl.u32 %v3982, 7
        %v3984 = vsub.s32 %v3981, %v3983
        %v3985 = vrot.slane %v3971, %v3984
        %v3986 = vcombine.low %v3978, %v3985
        %v3987 = vcombine.low %v1840, %v1844
        %v3988 = vcombine.low %v1848, %v1852
        %v3989 = vcombine.low %v1856, %v1860
        %v3990 = vcombine.low %v1864, %v1868
        %v3992 = vunpack.c.l.s4 1966171168
        %v3993 = vunpack.c.0.s8 %v3992
        %v3994 = vlaneseq
        %v3995 = vshrl.u32 %v3994, 7
        %v3996 = vsub.s32 %v3993, %v3995
        %v3997 = vrot.slane %v3987, %v3996
        %v3999 = vunpack.c.l.s4 1966171168
        %v4000 = vunpack.c.0.s8 %v3999
        %v4001 = vlaneseq
        %v4002 = vshrl.u32 %v4001, 7
        %v4003 = vsub.s32 %v4000, %v4002
        %v4004 = vrot.slane %v3988, %v4003
        %v4006 = vunpack.c.l.s4 1966171168
        %v4007 = vunpack.c.0.s8 %v4006
        %v4008 = vlaneseq
        %v4009 = vshrl.u32 %v4008, 7
        %v4010 = vsub.s32 %v4007, %v4009
        %v4011 = vrot.slane %v3989, %v4010
        %v4013 = vunpack.c.l.s4 1966171168
        %v4014 = vunpack.c.0.s8 %v4013
        %v4015 = vlaneseq
        %v4016 = vshrl.u32 %v4015, 7
        %v4017 = vsub.s32 %v4014, %v4016
        %v4018 = vrot.slane %v3990, %v4017
        %v4019 = vcombine.low %v3997, %v4004
        %v4020 = vcombine.low %v4011, %v4018
        %v4022 = vunpack.c.l.s4 1966171168
        %v4023 = vunpack.c.0.s8 %v4022
        %v4024 = vlaneseq
        %v4025 = vshrl.u32 %v4024, 7
        %v4026 = vsub.s32 %v4023, %v4025
        %v4027 = vrot.slane %v4019, %v4026
        %v4029 = vunpack.c.l.s4 1966171168
        %v4030 = vunpack.c.0.s8 %v4029
        %v4031 = vlaneseq
        %v4032 = vshrl.u32 %v4031, 7
        %v4033 = vsub.s32 %v4030, %v4032
        %v4034 = vrot.slane %v4020, %v4033
        %v4035 = vcombine.low %v4027, %v4034
        %v4036 = vcombine.low %v1872, %v1876
        %v4037 = vcombine.low %v1880, %v1884
        %v4038 = vcombine.low %v1888, %v1892
        %v4039 = vcombine.low %v1896, %v1900
        %v4041 = vunpack.c.l.s4 1966171168
        %v4042 = vunpack.c.0.s8 %v4041
        %v4043 = vlaneseq
        %v4044 = vshrl.u32 %v4043, 7
        %v4045 = vsub.s32 %v4042, %v4044
        %v4046 = vrot.slane %v4036, %v4045
        %v4048 = vunpack.c.l.s4 1966171168
        %v4049 = vunpack.c.0.s8 %v4048
        %v4050 = vlaneseq
        %v4051 = vshrl.u32 %v4050, 7
        %v4052 = vsub.s32 %v4049, %v4051
        %v4053 = vrot.slane %v4037, %v4052
        %v4055 = vunpack.c.l.s4 1966171168
        %v4056 = vunpack.c.0.s8 %v4055
        %v4057 = vlaneseq
        %v4058 = vshrl.u32 %v4057, 7
        %v4059 = vsub.s32 %v4056, %v4058
        %v4060 = vrot.slane %v4038, %v4059
        %v4062 = vunpack.c.l.s4 1966171168
        %v4063 = vunpack.c.0.s8 %v4062
        %v4064 = vlaneseq
        %v4065 = vshrl.u32 %v4064, 7
        %v4066 = vsub.s32 %v4063, %v4065
        %v4067 = vrot.slane %v4039, %v4066
        %v4068 = vcombine.low %v4046, %v4053
        %v4069 = vcombine.low %v4060, %v4067
        %v4071 = vunpack.c.l.s4 1966171168
        %v4072 = vunpack.c.0.s8 %v4071
        %v4073 = vlaneseq
        %v4074 = vshrl.u32 %v4073, 7
        %v4075 = vsub.s32 %v4072, %v4074
        %v4076 = vrot.slane %v4068, %v4075
        %v4078 = vunpack.c.l.s4 1966171168
        %v4079 = vunpack.c.0.s8 %v4078
        %v4080 = vlaneseq
        %v4081 = vshrl.u32 %v4080, 7
        %v4082 = vsub.s32 %v4079, %v4081
        %v4083 = vrot.slane %v4069, %v4082
        %v4084 = vcombine.low %v4076, %v4083
        %v4085 = vcombine.low %v1904, %v1908
        %v4086 = vcombine.low %v1912, %v1916
        %v4087 = vcombine.low %v1920, %v1924
        %v4088 = vcombine.low %v1928, %v1932
        %v4090 = vunpack.c.l.s4 1966171168
        %v4091 = vunpack.c.0.s8 %v4090
        %v4092 = vlaneseq
        %v4093 = vshrl.u32 %v4092, 7
        %v4094 = vsub.s32 %v4091, %v4093
        %v4095 = vrot.slane %v4085, %v4094
        %v4097 = vunpack.c.l.s4 1966171168
        %v4098 = vunpack.c.0.s8 %v4097
        %v4099 = vlaneseq
        %v4100 = vshrl.u32 %v4099, 7
        %v4101 = vsub.s32 %v4098, %v4100
        %v4102 = vrot.slane %v4086, %v4101
        %v4104 = vunpack.c.l.s4 1966171168
        %v4105 = vunpack.c.0.s8 %v4104
        %v4106 = vlaneseq
        %v4107 = vshrl.u32 %v4106, 7
        %v4108 = vsub.s32 %v4105, %v4107
        %v4109 = vrot.slane %v4087, %v4108
        %v4111 = vunpack.c.l.s4 1966171168
        %v4112 = vunpack.c.0.s8 %v4111
        %v4113 = vlaneseq
        %v4114 = vshrl.u32 %v4113, 7
        %v4115 = vsub.s32 %v4112, %v4114
        %v4116 = vrot.slane %v4088, %v4115
        %v4117 = vcombine.low %v4095, %v4102
        %v4118 = vcombine.low %v4109, %v4116
        %v4120 = vunpack.c.l.s4 1966171168
        %v4121 = vunpack.c.0.s8 %v4120
        %v4122 = vlaneseq
        %v4123 = vshrl.u32 %v4122, 7
        %v4124 = vsub.s32 %v4121, %v4123
        %v4125 = vrot.slane %v4117, %v4124
        %v4127 = vunpack.c.l.s4 1966171168
        %v4128 = vunpack.c.0.s8 %v4127
        %v4129 = vlaneseq
        %v4130 = vshrl.u32 %v4129, 7
        %v4131 = vsub.s32 %v4128, %v4130
        %v4132 = vrot.slane %v4118, %v4131
        %v4133 = vcombine.low %v4125, %v4132
        %v4134 = vcombine.low %v1936, %v1940
        %v4135 = vcombine.low %v1944, %v1948
        %v4136 = vcombine.low %v1952, %v1956
        %v4137 = vcombine.low %v1960, %v1964
        %v4139 = vunpack.c.l.s4 1966171168
        %v4140 = vunpack.c.0.s8 %v4139
        %v4141 = vlaneseq
        %v4142 = vshrl.u32 %v4141, 7
        %v4143 = vsub.s32 %v4140, %v4142
        %v4144 = vrot.slane %v4134, %v4143
        %v4146 = vunpack.c.l.s4 1966171168
        %v4147 = vunpack.c.0.s8 %v4146
        %v4148 = vlaneseq
        %v4149 = vshrl.u32 %v4148, 7
        %v4150 = vsub.s32 %v4147, %v4149
        %v4151 = vrot.slane %v4135, %v4150
        %v4153 = vunpack.c.l.s4 1966171168
        %v4154 = vunpack.c.0.s8 %v4153
        %v4155 = vlaneseq
        %v4156 = vshrl.u32 %v4155, 7
        %v4157 = vsub.s32 %v4154, %v4156
        %v4158 = vrot.slane %v4136, %v4157
        %v4160 = vunpack.c.l.s4 1966171168
        %v4161 = vunpack.c.0.s8 %v4160
        %v4162 = vlaneseq
        %v4163 = vshrl.u32 %v4162, 7
        %v4164 = vsub.s32 %v4161, %v4163
        %v4165 = vrot.slane %v4137, %v4164
        %v4166 = vcombine.low %v4144, %v4151
        %v4167 = vcombine.low %v4158, %v4165
        %v4169 = vunpack.c.l.s4 1966171168
        %v4170 = vunpack.c.0.s8 %v4169
        %v4171 = vlaneseq
        %v4172 = vshrl.u32 %v4171, 7
        %v4173 = vsub.s32 %v4170, %v4172
        %v4174 = vrot.slane %v4166, %v4173
        %v4176 = vunpack.c.l.s4 1966171168
        %v4177 = vunpack.c.0.s8 %v4176
        %v4178 = vlaneseq
        %v4179 = vshrl.u32 %v4178, 7
        %v4180 = vsub.s32 %v4177, %v4179
        %v4181 = vrot.slane %v4167, %v4180
        %v4182 = vcombine.low %v4174, %v4181
        %v4183 = vcombine.low %v1968, %v1972
        %v4184 = vcombine.low %v1976, %v1980
        %v4185 = vcombine.low %v1984, %v1988
        %v4186 = vcombine.low %v1992, %v1996
        %v4188 = vunpack.c.l.s4 1966171168
        %v4189 = vunpack.c.0.s8 %v4188
        %v4190 = vlaneseq
        %v4191 = vshrl.u32 %v4190, 7
        %v4192 = vsub.s32 %v4189, %v4191
        %v4193 = vrot.slane %v4183, %v4192
        %v4195 = vunpack.c.l.s4 1966171168
        %v4196 = vunpack.c.0.s8 %v4195
        %v4197 = vlaneseq
        %v4198 = vshrl.u32 %v4197, 7
        %v4199 = vsub.s32 %v4196, %v4198
        %v4200 = vrot.slane %v4184, %v4199
        %v4202 = vunpack.c.l.s4 1966171168
        %v4203 = vunpack.c.0.s8 %v4202
        %v4204 = vlaneseq
        %v4205 = vshrl.u32 %v4204, 7
        %v4206 = vsub.s32 %v4203, %v4205
        %v4207 = vrot.slane %v4185, %v4206
        %v4209 = vunpack.c.l.s4 1966171168
        %v4210 = vunpack.c.0.s8 %v4209
        %v4211 = vlaneseq
        %v4212 = vshrl.u32 %v4211, 7
        %v4213 = vsub.s32 %v4210, %v4212
        %v4214 = vrot.slane %v4186, %v4213
        %v4215 = vcombine.low %v4193, %v4200
        %v4216 = vcombine.low %v4207, %v4214
        %v4218 = vunpack.c.l.s4 1966171168
        %v4219 = vunpack.c.0.s8 %v4218
        %v4220 = vlaneseq
        %v4221 = vshrl.u32 %v4220, 7
        %v4222 = vsub.s32 %v4219, %v4221
        %v4223 = vrot.slane %v4215, %v4222
        %v4225 = vunpack.c.l.s4 1966171168
        %v4226 = vunpack.c.0.s8 %v4225
        %v4227 = vlaneseq
        %v4228 = vshrl.u32 %v4227, 7
        %v4229 = vsub.s32 %v4226, %v4228
        %v4230 = vrot.slane %v4216, %v4229
        %v4231 = vcombine.low %v4223, %v4230
        %v4232 = vcombine.low %v2000, %v2004
        %v4233 = vcombine.low %v2008, %v2012
        %v4234 = vcombine.low %v2016, %v2020
        %v4235 = vcombine.low %v2024, %v2028
        %v4237 = vunpack.c.l.s4 1966171168
        %v4238 = vunpack.c.0.s8 %v4237
        %v4239 = vlaneseq
        %v4240 = vshrl.u32 %v4239, 7
        %v4241 = vsub.s32 %v4238, %v4240
        %v4242 = vrot.slane %v4232, %v4241
        %v4244 = vunpack.c.l.s4 1966171168
        %v4245 = vunpack.c.0.s8 %v4244
        %v4246 = vlaneseq
        %v4247 = vshrl.u32 %v4246, 7
        %v4248 = vsub.s32 %v4245, %v4247
        %v4249 = vrot.slane %v4233, %v4248
        %v4251 = vunpack.c.l.s4 1966171168
        %v4252 = vunpack.c.0.s8 %v4251
        %v4253 = vlaneseq
        %v4254 = vshrl.u32 %v4253, 7
        %v4255 = vsub.s32 %v4252, %v4254
        %v4256 = vrot.slane %v4234, %v4255
        %v4258 = vunpack.c.l.s4 1966171168
        %v4259 = vunpack.c.0.s8 %v4258
        %v4260 = vlaneseq
        %v4261 = vshrl.u32 %v4260, 7
        %v4262 = vsub.s32 %v4259, %v4261
        %v4263 = vrot.slane %v4235, %v4262
        %v4264 = vcombine.low %v4242, %v4249
        %v4265 = vcombine.low %v4256, %v4263
        %v4267 = vunpack.c.l.s4 1966171168
        %v4268 = vunpack.c.0.s8 %v4267
        %v4269 = vlaneseq
        %v4270 = vshrl.u32 %v4269, 7
        %v4271 = vsub.s32 %v4268, %v4270
        %v4272 = vrot.slane %v4264, %v4271
        %v4274 = vunpack.c.l.s4 1966171168
        %v4275 = vunpack.c.0.s8 %v4274
        %v4276 = vlaneseq
        %v4277 = vshrl.u32 %v4276, 7
        %v4278 = vsub.s32 %v4275, %v4277
        %v4279 = vrot.slane %v4265, %v4278
        %v4280 = vcombine.low %v4272, %v4279
        %v4281 = vcombine.low %v2032, %v2036
        %v4282 = vcombine.low %v2040, %v2044
        %v4283 = vcombine.low %v2048, %v2052
        %v4284 = vcombine.low %v2056, %v2060
        %v4286 = vunpack.c.l.s4 1966171168
        %v4287 = vunpack.c.0.s8 %v4286
        %v4288 = vlaneseq
        %v4289 = vshrl.u32 %v4288, 7
        %v4290 = vsub.s32 %v4287, %v4289
        %v4291 = vrot.slane %v4281, %v4290
        %v4293 = vunpack.c.l.s4 1966171168
        %v4294 = vunpack.c.0.s8 %v4293
        %v4295 = vlaneseq
        %v4296 = vshrl.u32 %v4295, 7
        %v4297 = vsub.s32 %v4294, %v4296
        %v4298 = vrot.slane %v4282, %v4297
        %v4300 = vunpack.c.l.s4 1966171168
        %v4301 = vunpack.c.0.s8 %v4300
        %v4302 = vlaneseq
        %v4303 = vshrl.u32 %v4302, 7
        %v4304 = vsub.s32 %v4301, %v4303
        %v4305 = vrot.slane %v4283, %v4304
        %v4307 = vunpack.c.l.s4 1966171168
        %v4308 = vunpack.c.0.s8 %v4307
        %v4309 = vlaneseq
        %v4310 = vshrl.u32 %v4309, 7
        %v4311 = vsub.s32 %v4308, %v4310
        %v4312 = vrot.slane %v4284, %v4311
        %v4313 = vcombine.low %v4291, %v4298
        %v4314 = vcombine.low %v4305, %v4312
        %v4316 = vunpack.c.l.s4 1966171168
        %v4317 = vunpack.c.0.s8 %v4316
        %v4318 = vlaneseq
        %v4319 = vshrl.u32 %v4318, 7
        %v4320 = vsub.s32 %v4317, %v4319
        %v4321 = vrot.slane %v4313, %v4320
        %v4323 = vunpack.c.l.s4 1966171168
        %v4324 = vunpack.c.0.s8 %v4323
        %v4325 = vlaneseq
        %v4326 = vshrl.u32 %v4325, 7
        %v4327 = vsub.s32 %v4324, %v4326
        %v4328 = vrot.slane %v4314, %v4327
        %v4329 = vcombine.low %v4321, %v4328
        %v4330 = vcombine.low %v2064, %v2068
        %v4331 = vcombine.low %v2072, %v2076
        %v4332 = vcombine.low %v2080, %v2084
        %v4333 = vcombine.low %v2088, %v2092
        %v4335 = vunpack.c.l.s4 1966171168
        %v4336 = vunpack.c.0.s8 %v4335
        %v4337 = vlaneseq
        %v4338 = vshrl.u32 %v4337, 7
        %v4339 = vsub.s32 %v4336, %v4338
        %v4340 = vrot.slane %v4330, %v4339
        %v4342 = vunpack.c.l.s4 1966171168
        %v4343 = vunpack.c.0.s8 %v4342
        %v4344 = vlaneseq
        %v4345 = vshrl.u32 %v4344, 7
        %v4346 = vsub.s32 %v4343, %v4345
        %v4347 = vrot.slane %v4331, %v4346
        %v4349 = vunpack.c.l.s4 1966171168
        %v4350 = vunpack.c.0.s8 %v4349
        %v4351 = vlaneseq
        %v4352 = vshrl.u32 %v4351, 7
        %v4353 = vsub.s32 %v4350, %v4352
        %v4354 = vrot.slane %v4332, %v4353
        %v4356 = vunpack.c.l.s4 1966171168
        %v4357 = vunpack.c.0.s8 %v4356
        %v4358 = vlaneseq
        %v4359 = vshrl.u32 %v4358, 7
        %v4360 = vsub.s32 %v4357, %v4359
        %v4361 = vrot.slane %v4333, %v4360
        %v4362 = vcombine.low %v4340, %v4347
        %v4363 = vcombine.low %v4354, %v4361
        %v4365 = vunpack.c.l.s4 1966171168
        %v4366 = vunpack.c.0.s8 %v4365
        %v4367 = vlaneseq
        %v4368 = vshrl.u32 %v4367, 7
        %v4369 = vsub.s32 %v4366, %v4368
        %v4370 = vrot.slane %v4362, %v4369
        %v4372 = vunpack.c.l.s4 1966171168
        %v4373 = vunpack.c.0.s8 %v4372
        %v4374 = vlaneseq
        %v4375 = vshrl.u32 %v4374, 7
        %v4376 = vsub.s32 %v4373, %v4375
        %v4377 = vrot.slane %v4363, %v4376
        %v4378 = vcombine.low %v4370, %v4377
        %v4379 = vcombine.low %v2096, %v2100
        %v4380 = vcombine.low %v2104, %v2108
        %v4381 = vcombine.low %v2112, %v2116
        %v4382 = vcombine.low %v2120, %v2124
        %v4384 = vunpack.c.l.s4 1966171168
        %v4385 = vunpack.c.0.s8 %v4384
        %v4386 = vlaneseq
        %v4387 = vshrl.u32 %v4386, 7
        %v4388 = vsub.s32 %v4385, %v4387
        %v4389 = vrot.slane %v4379, %v4388
        %v4391 = vunpack.c.l.s4 1966171168
        %v4392 = vunpack.c.0.s8 %v4391
        %v4393 = vlaneseq
        %v4394 = vshrl.u32 %v4393, 7
        %v4395 = vsub.s32 %v4392, %v4394
        %v4396 = vrot.slane %v4380, %v4395
        %v4398 = vunpack.c.l.s4 1966171168
        %v4399 = vunpack.c.0.s8 %v4398
        %v4400 = vlaneseq
        %v4401 = vshrl.u32 %v4400, 7
        %v4402 = vsub.s32 %v4399, %v4401
        %v4403 = vrot.slane %v4381, %v4402
        %v4405 = vunpack.c.l.s4 1966171168
        %v4406 = vunpack.c.0.s8 %v4405
        %v4407 = vlaneseq
        %v4408 = vshrl.u32 %v4407, 7
        %v4409 = vsub.s32 %v4406, %v4408
        %v4410 = vrot.slane %v4382, %v4409
        %v4411 = vcombine.low %v4389, %v4396
        %v4412 = vcombine.low %v4403, %v4410
        %v4414 = vunpack.c.l.s4 1966171168
        %v4415 = vunpack.c.0.s8 %v4414
        %v4416 = vlaneseq
        %v4417 = vshrl.u32 %v4416, 7
        %v4418 = vsub.s32 %v4415, %v4417
        %v4419 = vrot.slane %v4411, %v4418
        %v4421 = vunpack.c.l.s4 1966171168
        %v4422 = vunpack.c.0.s8 %v4421
        %v4423 = vlaneseq
        %v4424 = vshrl.u32 %v4423, 7
        %v4425 = vsub.s32 %v4422, %v4424
        %v4426 = vrot.slane %v4412, %v4425
        %v4427 = vcombine.low %v4419, %v4426
        %v4428 = vcombine.low %v2128, %v2132
        %v4429 = vcombine.low %v2136, %v2140
        %v4430 = vcombine.low %v2144, %v2148
        %v4431 = vcombine.low %v2152, %v2156
        %v4433 = vunpack.c.l.s4 1966171168
        %v4434 = vunpack.c.0.s8 %v4433
        %v4435 = vlaneseq
        %v4436 = vshrl.u32 %v4435, 7
        %v4437 = vsub.s32 %v4434, %v4436
        %v4438 = vrot.slane %v4428, %v4437
        %v4440 = vunpack.c.l.s4 1966171168
        %v4441 = vunpack.c.0.s8 %v4440
        %v4442 = vlaneseq
        %v4443 = vshrl.u32 %v4442, 7
        %v4444 = vsub.s32 %v4441, %v4443
        %v4445 = vrot.slane %v4429, %v4444
        %v4447 = vunpack.c.l.s4 1966171168
        %v4448 = vunpack.c.0.s8 %v4447
        %v4449 = vlaneseq
        %v4450 = vshrl.u32 %v4449, 7
        %v4451 = vsub.s32 %v4448, %v4450
        %v4452 = vrot.slane %v4430, %v4451
        %v4454 = vunpack.c.l.s4 1966171168
        %v4455 = vunpack.c.0.s8 %v4454
        %v4456 = vlaneseq
        %v4457 = vshrl.u32 %v4456, 7
        %v4458 = vsub.s32 %v4455, %v4457
        %v4459 = vrot.slane %v4431, %v4458
        %v4460 = vcombine.low %v4438, %v4445
        %v4461 = vcombine.low %v4452, %v4459
        %v4463 = vunpack.c.l.s4 1966171168
        %v4464 = vunpack.c.0.s8 %v4463
        %v4465 = vlaneseq
        %v4466 = vshrl.u32 %v4465, 7
        %v4467 = vsub.s32 %v4464, %v4466
        %v4468 = vrot.slane %v4460, %v4467
        %v4470 = vunpack.c.l.s4 1966171168
        %v4471 = vunpack.c.0.s8 %v4470
        %v4472 = vlaneseq
        %v4473 = vshrl.u32 %v4472, 7
        %v4474 = vsub.s32 %v4471, %v4473
        %v4475 = vrot.slane %v4461, %v4474
        %v4476 = vcombine.low %v4468, %v4475
        %v4477 = vcombine.low %v2160, %v2164
        %v4478 = vcombine.low %v2168, %v2172
        %v4479 = vcombine.low %v2176, %v2180
        %v4480 = vcombine.low %v2184, %v2188
        %v4482 = vunpack.c.l.s4 1966171168
        %v4483 = vunpack.c.0.s8 %v4482
        %v4484 = vlaneseq
        %v4485 = vshrl.u32 %v4484, 7
        %v4486 = vsub.s32 %v4483, %v4485
        %v4487 = vrot.slane %v4477, %v4486
        %v4489 = vunpack.c.l.s4 1966171168
        %v4490 = vunpack.c.0.s8 %v4489
        %v4491 = vlaneseq
        %v4492 = vshrl.u32 %v4491, 7
        %v4493 = vsub.s32 %v4490, %v4492
        %v4494 = vrot.slane %v4478, %v4493
        %v4496 = vunpack.c.l.s4 1966171168
        %v4497 = vunpack.c.0.s8 %v4496
        %v4498 = vlaneseq
        %v4499 = vshrl.u32 %v4498, 7
        %v4500 = vsub.s32 %v4497, %v4499
        %v4501 = vrot.slane %v4479, %v4500
        %v4503 = vunpack.c.l.s4 1966171168
        %v4504 = vunpack.c.0.s8 %v4503
        %v4505 = vlaneseq
        %v4506 = vshrl.u32 %v4505, 7
        %v4507 = vsub.s32 %v4504, %v4506
        %v4508 = vrot.slane %v4480, %v4507
        %v4509 = vcombine.low %v4487, %v4494
        %v4510 = vcombine.low %v4501, %v4508
        %v4512 = vunpack.c.l.s4 1966171168
        %v4513 = vunpack.c.0.s8 %v4512
        %v4514 = vlaneseq
        %v4515 = vshrl.u32 %v4514, 7
        %v4516 = vsub.s32 %v4513, %v4515
        %v4517 = vrot.slane %v4509, %v4516
        %v4519 = vunpack.c.l.s4 1966171168
        %v4520 = vunpack.c.0.s8 %v4519
        %v4521 = vlaneseq
        %v4522 = vshrl.u32 %v4521, 7
        %v4523 = vsub.s32 %v4520, %v4522
        %v4524 = vrot.slane %v4510, %v4523
        %v4525 = vcombine.low %v4517, %v4524
        %v4526 = vcombine.low %v2192, %v2196
        %v4527 = vcombine.low %v2200, %v2204
        %v4528 = vcombine.low %v2208, %v2212
        %v4529 = vcombine.low %v2216, %v2220
        %v4531 = vunpack.c.l.s4 1966171168
        %v4532 = vunpack.c.0.s8 %v4531
        %v4533 = vlaneseq
        %v4534 = vshrl.u32 %v4533, 7
        %v4535 = vsub.s32 %v4532, %v4534
        %v4536 = vrot.slane %v4526, %v4535
        %v4538 = vunpack.c.l.s4 1966171168
        %v4539 = vunpack.c.0.s8 %v4538
        %v4540 = vlaneseq
        %v4541 = vshrl.u32 %v4540, 7
        %v4542 = vsub.s32 %v4539, %v4541
        %v4543 = vrot.slane %v4527, %v4542
        %v4545 = vunpack.c.l.s4 1966171168
        %v4546 = vunpack.c.0.s8 %v4545
        %v4547 = vlaneseq
        %v4548 = vshrl.u32 %v4547, 7
        %v4549 = vsub.s32 %v4546, %v4548
        %v4550 = vrot.slane %v4528, %v4549
        %v4552 = vunpack.c.l.s4 1966171168
        %v4553 = vunpack.c.0.s8 %v4552
        %v4554 = vlaneseq
        %v4555 = vshrl.u32 %v4554, 7
        %v4556 = vsub.s32 %v4553, %v4555
        %v4557 = vrot.slane %v4529, %v4556
        %v4558 = vcombine.low %v4536, %v4543
        %v4559 = vcombine.low %v4550, %v4557
        %v4561 = vunpack.c.l.s4 1966171168
        %v4562 = vunpack.c.0.s8 %v4561
        %v4563 = vlaneseq
        %v4564 = vshrl.u32 %v4563, 7
        %v4565 = vsub.s32 %v4562, %v4564
        %v4566 = vrot.slane %v4558, %v4565
        %v4568 = vunpack.c.l.s4 1966171168
        %v4569 = vunpack.c.0.s8 %v4568
        %v4570 = vlaneseq
        %v4571 = vshrl.u32 %v4570, 7
        %v4572 = vsub.s32 %v4569, %v4571
        %v4573 = vrot.slane %v4559, %v4572
        %v4574 = vcombine.low %v4566, %v4573
        %v4575 = vcombine.low %v2224, %v2228
        %v4576 = vcombine.low %v2232, %v2236
        %v4577 = vcombine.low %v2240, %v2244
        %v4578 = vcombine.low %v2248, %v2252
        %v4580 = vunpack.c.l.s4 1966171168
        %v4581 = vunpack.c.0.s8 %v4580
        %v4582 = vlaneseq
        %v4583 = vshrl.u32 %v4582, 7
        %v4584 = vsub.s32 %v4581, %v4583
        %v4585 = vrot.slane %v4575, %v4584
        %v4587 = vunpack.c.l.s4 1966171168
        %v4588 = vunpack.c.0.s8 %v4587
        %v4589 = vlaneseq
        %v4590 = vshrl.u32 %v4589, 7
        %v4591 = vsub.s32 %v4588, %v4590
        %v4592 = vrot.slane %v4576, %v4591
        %v4594 = vunpack.c.l.s4 1966171168
        %v4595 = vunpack.c.0.s8 %v4594
        %v4596 = vlaneseq
        %v4597 = vshrl.u32 %v4596, 7
        %v4598 = vsub.s32 %v4595, %v4597
        %v4599 = vrot.slane %v4577, %v4598
        %v4601 = vunpack.c.l.s4 1966171168
        %v4602 = vunpack.c.0.s8 %v4601
        %v4603 = vlaneseq
        %v4604 = vshrl.u32 %v4603, 7
        %v4605 = vsub.s32 %v4602, %v4604
        %v4606 = vrot.slane %v4578, %v4605
        %v4607 = vcombine.low %v4585, %v4592
        %v4608 = vcombine.low %v4599, %v4606
        %v4610 = vunpack.c.l.s4 1966171168
        %v4611 = vunpack.c.0.s8 %v4610
        %v4612 = vlaneseq
        %v4613 = vshrl.u32 %v4612, 7
        %v4614 = vsub.s32 %v4611, %v4613
        %v4615 = vrot.slane %v4607, %v4614
        %v4617 = vunpack.c.l.s4 1966171168
        %v4618 = vunpack.c.0.s8 %v4617
        %v4619 = vlaneseq
        %v4620 = vshrl.u32 %v4619, 7
        %v4621 = vsub.s32 %v4618, %v4620
        %v4622 = vrot.slane %v4608, %v4621
        %v4623 = vcombine.low %v4615, %v4622
        %v4624 = vcombine.low %v2256, %v2260
        %v4625 = vcombine.low %v2264, %v2268
        %v4626 = vcombine.low %v2272, %v2276
        %v4627 = vcombine.low %v2280, %v2284
        %v4629 = vunpack.c.l.s4 1966171168
        %v4630 = vunpack.c.0.s8 %v4629
        %v4631 = vlaneseq
        %v4632 = vshrl.u32 %v4631, 7
        %v4633 = vsub.s32 %v4630, %v4632
        %v4634 = vrot.slane %v4624, %v4633
        %v4636 = vunpack.c.l.s4 1966171168
        %v4637 = vunpack.c.0.s8 %v4636
        %v4638 = vlaneseq
        %v4639 = vshrl.u32 %v4638, 7
        %v4640 = vsub.s32 %v4637, %v4639
        %v4641 = vrot.slane %v4625, %v4640
        %v4643 = vunpack.c.l.s4 1966171168
        %v4644 = vunpack.c.0.s8 %v4643
        %v4645 = vlaneseq
        %v4646 = vshrl.u32 %v4645, 7
        %v4647 = vsub.s32 %v4644, %v4646
        %v4648 = vrot.slane %v4626, %v4647
        %v4650 = vunpack.c.l.s4 1966171168
        %v4651 = vunpack.c.0.s8 %v4650
        %v4652 = vlaneseq
        %v4653 = vshrl.u32 %v4652, 7
        %v4654 = vsub.s32 %v4651, %v4653
        %v4655 = vrot.slane %v4627, %v4654
        %v4656 = vcombine.low %v4634, %v4641
        %v4657 = vcombine.low %v4648, %v4655
        %v4659 = vunpack.c.l.s4 1966171168
        %v4660 = vunpack.c.0.s8 %v4659
        %v4661 = vlaneseq
        %v4662 = vshrl.u32 %v4661, 7
        %v4663 = vsub.s32 %v4660, %v4662
        %v4664 = vrot.slane %v4656, %v4663
        %v4666 = vunpack.c.l.s4 1966171168
        %v4667 = vunpack.c.0.s8 %v4666
        %v4668 = vlaneseq
        %v4669 = vshrl.u32 %v4668, 7
        %v4670 = vsub.s32 %v4667, %v4669
        %v4671 = vrot.slane %v4657, %v4670
        %v4672 = vcombine.low %v4664, %v4671
        %v4673 = vcombine.low %v2288, %v2292
        %v4674 = vcombine.low %v2296, %v2300
        %v4675 = vcombine.low %v2304, %v2308
        %v4676 = vcombine.low %v2312, %v2316
        %v4678 = vunpack.c.l.s4 1966171168
        %v4679 = vunpack.c.0.s8 %v4678
        %v4680 = vlaneseq
        %v4681 = vshrl.u32 %v4680, 7
        %v4682 = vsub.s32 %v4679, %v4681
        %v4683 = vrot.slane %v4673, %v4682
        %v4685 = vunpack.c.l.s4 1966171168
        %v4686 = vunpack.c.0.s8 %v4685
        %v4687 = vlaneseq
        %v4688 = vshrl.u32 %v4687, 7
        %v4689 = vsub.s32 %v4686, %v4688
        %v4690 = vrot.slane %v4674, %v4689
        %v4692 = vunpack.c.l.s4 1966171168
        %v4693 = vunpack.c.0.s8 %v4692
        %v4694 = vlaneseq
        %v4695 = vshrl.u32 %v4694, 7
        %v4696 = vsub.s32 %v4693, %v4695
        %v4697 = vrot.slane %v4675, %v4696
        %v4699 = vunpack.c.l.s4 1966171168
        %v4700 = vunpack.c.0.s8 %v4699
        %v4701 = vlaneseq
        %v4702 = vshrl.u32 %v4701, 7
        %v4703 = vsub.s32 %v4700, %v4702
        %v4704 = vrot.slane %v4676, %v4703
        %v4705 = vcombine.low %v4683, %v4690
        %v4706 = vcombine.low %v4697, %v4704
        %v4708 = vunpack.c.l.s4 1966171168
        %v4709 = vunpack.c.0.s8 %v4708
        %v4710 = vlaneseq
        %v4711 = vshrl.u32 %v4710, 7
        %v4712 = vsub.s32 %v4709, %v4711
        %v4713 = vrot.slane %v4705, %v4712
        %v4715 = vunpack.c.l.s4 1966171168
        %v4716 = vunpack.c.0.s8 %v4715
        %v4717 = vlaneseq
        %v4718 = vshrl.u32 %v4717, 7
        %v4719 = vsub.s32 %v4716, %v4718
        %v4720 = vrot.slane %v4706, %v4719
        %v4721 = vcombine.low %v4713, %v4720
        %v4722 = vcombine.low %v2320, %v2324
        %v4723 = vcombine.low %v2328, %v2332
        %v4724 = vcombine.low %v2336, %v2340
        %v4725 = vcombine.low %v2344, %v2348
        %v4727 = vunpack.c.l.s4 1966171168
        %v4728 = vunpack.c.0.s8 %v4727
        %v4729 = vlaneseq
        %v4730 = vshrl.u32 %v4729, 7
        %v4731 = vsub.s32 %v4728, %v4730
        %v4732 = vrot.slane %v4722, %v4731
        %v4734 = vunpack.c.l.s4 1966171168
        %v4735 = vunpack.c.0.s8 %v4734
        %v4736 = vlaneseq
        %v4737 = vshrl.u32 %v4736, 7
        %v4738 = vsub.s32 %v4735, %v4737
        %v4739 = vrot.slane %v4723, %v4738
        %v4741 = vunpack.c.l.s4 1966171168
        %v4742 = vunpack.c.0.s8 %v4741
        %v4743 = vlaneseq
        %v4744 = vshrl.u32 %v4743, 7
        %v4745 = vsub.s32 %v4742, %v4744
        %v4746 = vrot.slane %v4724, %v4745
        %v4748 = vunpack.c.l.s4 1966171168
        %v4749 = vunpack.c.0.s8 %v4748
        %v4750 = vlaneseq
        %v4751 = vshrl.u32 %v4750, 7
        %v4752 = vsub.s32 %v4749, %v4751
        %v4753 = vrot.slane %v4725, %v4752
        %v4754 = vcombine.low %v4732, %v4739
        %v4755 = vcombine.low %v4746, %v4753
        %v4757 = vunpack.c.l.s4 1966171168
        %v4758 = vunpack.c.0.s8 %v4757
        %v4759 = vlaneseq
        %v4760 = vshrl.u32 %v4759, 7
        %v4761 = vsub.s32 %v4758, %v4760
        %v4762 = vrot.slane %v4754, %v4761
        %v4764 = vunpack.c.l.s4 1966171168
        %v4765 = vunpack.c.0.s8 %v4764
        %v4766 = vlaneseq
        %v4767 = vshrl.u32 %v4766, 7
        %v4768 = vsub.s32 %v4765, %v4767
        %v4769 = vrot.slane %v4755, %v4768
        %v4770 = vcombine.low %v4762, %v4769
        %v4771 = vcombine.low %v2352, %v2356
        %v4772 = vcombine.low %v2360, %v2364
        %v4773 = vcombine.low %v2368, %v2372
        %v4774 = vcombine.low %v2376, %v2380
        %v4776 = vunpack.c.l.s4 1966171168
        %v4777 = vunpack.c.0.s8 %v4776
        %v4778 = vlaneseq
        %v4779 = vshrl.u32 %v4778, 7
        %v4780 = vsub.s32 %v4777, %v4779
        %v4781 = vrot.slane %v4771, %v4780
        %v4783 = vunpack.c.l.s4 1966171168
        %v4784 = vunpack.c.0.s8 %v4783
        %v4785 = vlaneseq
        %v4786 = vshrl.u32 %v4785, 7
        %v4787 = vsub.s32 %v4784, %v4786
        %v4788 = vrot.slane %v4772, %v4787
        %v4790 = vunpack.c.l.s4 1966171168
        %v4791 = vunpack.c.0.s8 %v4790
        %v4792 = vlaneseq
        %v4793 = vshrl.u32 %v4792, 7
        %v4794 = vsub.s32 %v4791, %v4793
        %v4795 = vrot.slane %v4773, %v4794
        %v4797 = vunpack.c.l.s4 1966171168
        %v4798 = vunpack.c.0.s8 %v4797
        %v4799 = vlaneseq
        %v4800 = vshrl.u32 %v4799, 7
        %v4801 = vsub.s32 %v4798, %v4800
        %v4802 = vrot.slane %v4774, %v4801
        %v4803 = vcombine.low %v4781, %v4788
        %v4804 = vcombine.low %v4795, %v4802
        %v4806 = vunpack.c.l.s4 1966171168
        %v4807 = vunpack.c.0.s8 %v4806
        %v4808 = vlaneseq
        %v4809 = vshrl.u32 %v4808, 7
        %v4810 = vsub.s32 %v4807, %v4809
        %v4811 = vrot.slane %v4803, %v4810
        %v4813 = vunpack.c.l.s4 1966171168
        %v4814 = vunpack.c.0.s8 %v4813
        %v4815 = vlaneseq
        %v4816 = vshrl.u32 %v4815, 7
        %v4817 = vsub.s32 %v4814, %v4816
        %v4818 = vrot.slane %v4804, %v4817
        %v4819 = vcombine.low %v4811, %v4818
        %v4820 = vcombine.low %v2384, %v2388
        %v4821 = vcombine.low %v2392, %v2396
        %v4822 = vcombine.low %v2400, %v2404
        %v4823 = vcombine.low %v2408, %v2412
        %v4825 = vunpack.c.l.s4 1966171168
        %v4826 = vunpack.c.0.s8 %v4825
        %v4827 = vlaneseq
        %v4828 = vshrl.u32 %v4827, 7
        %v4829 = vsub.s32 %v4826, %v4828
        %v4830 = vrot.slane %v4820, %v4829
        %v4832 = vunpack.c.l.s4 1966171168
        %v4833 = vunpack.c.0.s8 %v4832
        %v4834 = vlaneseq
        %v4835 = vshrl.u32 %v4834, 7
        %v4836 = vsub.s32 %v4833, %v4835
        %v4837 = vrot.slane %v4821, %v4836
        %v4839 = vunpack.c.l.s4 1966171168
        %v4840 = vunpack.c.0.s8 %v4839
        %v4841 = vlaneseq
        %v4842 = vshrl.u32 %v4841, 7
        %v4843 = vsub.s32 %v4840, %v4842
        %v4844 = vrot.slane %v4822, %v4843
        %v4846 = vunpack.c.l.s4 1966171168
        %v4847 = vunpack.c.0.s8 %v4846
        %v4848 = vlaneseq
        %v4849 = vshrl.u32 %v4848, 7
        %v4850 = vsub.s32 %v4847, %v4849
        %v4851 = vrot.slane %v4823, %v4850
        %v4852 = vcombine.low %v4830, %v4837
        %v4853 = vcombine.low %v4844, %v4851
        %v4855 = vunpack.c.l.s4 1966171168
        %v4856 = vunpack.c.0.s8 %v4855
        %v4857 = vlaneseq
        %v4858 = vshrl.u32 %v4857, 7
        %v4859 = vsub.s32 %v4856, %v4858
        %v4860 = vrot.slane %v4852, %v4859
        %v4862 = vunpack.c.l.s4 1966171168
        %v4863 = vunpack.c.0.s8 %v4862
        %v4864 = vlaneseq
        %v4865 = vshrl.u32 %v4864, 7
        %v4866 = vsub.s32 %v4863, %v4865
        %v4867 = vrot.slane %v4853, %v4866
        %v4868 = vcombine.low %v4860, %v4867
        %v4869 = vcombine.low %v2416, %v2420
        %v4870 = vcombine.low %v2424, %v2428
        %v4871 = vcombine.low %v2432, %v2436
        %v4872 = vcombine.low %v2440, %v2444
        %v4874 = vunpack.c.l.s4 1966171168
        %v4875 = vunpack.c.0.s8 %v4874
        %v4876 = vlaneseq
        %v4877 = vshrl.u32 %v4876, 7
        %v4878 = vsub.s32 %v4875, %v4877
        %v4879 = vrot.slane %v4869, %v4878
        %v4881 = vunpack.c.l.s4 1966171168
        %v4882 = vunpack.c.0.s8 %v4881
        %v4883 = vlaneseq
        %v4884 = vshrl.u32 %v4883, 7
        %v4885 = vsub.s32 %v4882, %v4884
        %v4886 = vrot.slane %v4870, %v4885
        %v4888 = vunpack.c.l.s4 1966171168
        %v4889 = vunpack.c.0.s8 %v4888
        %v4890 = vlaneseq
        %v4891 = vshrl.u32 %v4890, 7
        %v4892 = vsub.s32 %v4889, %v4891
        %v4893 = vrot.slane %v4871, %v4892
        %v4895 = vunpack.c.l.s4 1966171168
        %v4896 = vunpack.c.0.s8 %v4895
        %v4897 = vlaneseq
        %v4898 = vshrl.u32 %v4897, 7
        %v4899 = vsub.s32 %v4896, %v4898
        %v4900 = vrot.slane %v4872, %v4899
        %v4901 = vcombine.low %v4879, %v4886
        %v4902 = vcombine.low %v4893, %v4900
        %v4904 = vunpack.c.l.s4 1966171168
        %v4905 = vunpack.c.0.s8 %v4904
        %v4906 = vlaneseq
        %v4907 = vshrl.u32 %v4906, 7
        %v4908 = vsub.s32 %v4905, %v4907
        %v4909 = vrot.slane %v4901, %v4908
        %v4911 = vunpack.c.l.s4 1966171168
        %v4912 = vunpack.c.0.s8 %v4911
        %v4913 = vlaneseq
        %v4914 = vshrl.u32 %v4913, 7
        %v4915 = vsub.s32 %v4912, %v4914
        %v4916 = vrot.slane %v4902, %v4915
        %v4917 = vcombine.low %v4909, %v4916
        %v4918 = vcombine.low %v2448, %v2452
        %v4919 = vcombine.low %v2456, %v2460
        %v4920 = vcombine.low %v2464, %v2468
        %v4921 = vcombine.low %v2472, %v2476
        %v4923 = vunpack.c.l.s4 1966171168
        %v4924 = vunpack.c.0.s8 %v4923
        %v4925 = vlaneseq
        %v4926 = vshrl.u32 %v4925, 7
        %v4927 = vsub.s32 %v4924, %v4926
        %v4928 = vrot.slane %v4918, %v4927
        %v4930 = vunpack.c.l.s4 1966171168
        %v4931 = vunpack.c.0.s8 %v4930
        %v4932 = vlaneseq
        %v4933 = vshrl.u32 %v4932, 7
        %v4934 = vsub.s32 %v4931, %v4933
        %v4935 = vrot.slane %v4919, %v4934
        %v4937 = vunpack.c.l.s4 1966171168
        %v4938 = vunpack.c.0.s8 %v4937
        %v4939 = vlaneseq
        %v4940 = vshrl.u32 %v4939, 7
        %v4941 = vsub.s32 %v4938, %v4940
        %v4942 = vrot.slane %v4920, %v4941
        %v4944 = vunpack.c.l.s4 1966171168
        %v4945 = vunpack.c.0.s8 %v4944
        %v4946 = vlaneseq
        %v4947 = vshrl.u32 %v4946, 7
        %v4948 = vsub.s32 %v4945, %v4947
        %v4949 = vrot.slane %v4921, %v4948
        %v4950 = vcombine.low %v4928, %v4935
        %v4951 = vcombine.low %v4942, %v4949
        %v4953 = vunpack.c.l.s4 1966171168
        %v4954 = vunpack.c.0.s8 %v4953
        %v4955 = vlaneseq
        %v4956 = vshrl.u32 %v4955, 7
        %v4957 = vsub.s32 %v4954, %v4956
        %v4958 = vrot.slane %v4950, %v4957
        %v4960 = vunpack.c.l.s4 1966171168
        %v4961 = vunpack.c.0.s8 %v4960
        %v4962 = vlaneseq
        %v4963 = vshrl.u32 %v4962, 7
        %v4964 = vsub.s32 %v4961, %v4963
        %v4965 = vrot.slane %v4951, %v4964
        %v4966 = vcombine.low %v4958, %v4965
        %v4967 = vcombine.low %v2480, %v2484
        %v4968 = vcombine.low %v2488, %v2492
        %v4969 = vcombine.low %v2496, %v2500
        %v4970 = vcombine.low %v2504, %v2508
        %v4972 = vunpack.c.l.s4 1966171168
        %v4973 = vunpack.c.0.s8 %v4972
        %v4974 = vlaneseq
        %v4975 = vshrl.u32 %v4974, 7
        %v4976 = vsub.s32 %v4973, %v4975
        %v4977 = vrot.slane %v4967, %v4976
        %v4979 = vunpack.c.l.s4 1966171168
        %v4980 = vunpack.c.0.s8 %v4979
        %v4981 = vlaneseq
        %v4982 = vshrl.u32 %v4981, 7
        %v4983 = vsub.s32 %v4980, %v4982
        %v4984 = vrot.slane %v4968, %v4983
        %v4986 = vunpack.c.l.s4 1966171168
        %v4987 = vunpack.c.0.s8 %v4986
        %v4988 = vlaneseq
        %v4989 = vshrl.u32 %v4988, 7
        %v4990 = vsub.s32 %v4987, %v4989
        %v4991 = vrot.slane %v4969, %v4990
        %v4993 = vunpack.c.l.s4 1966171168
        %v4994 = vunpack.c.0.s8 %v4993
        %v4995 = vlaneseq
        %v4996 = vshrl.u32 %v4995, 7
        %v4997 = vsub.s32 %v4994, %v4996
        %v4998 = vrot.slane %v4970, %v4997
        %v4999 = vcombine.low %v4977, %v4984
        %v5000 = vcombine.low %v4991, %v4998
        %v5002 = vunpack.c.l.s4 1966171168
        %v5003 = vunpack.c.0.s8 %v5002
        %v5004 = vlaneseq
        %v5005 = vshrl.u32 %v5004, 7
        %v5006 = vsub.s32 %v5003, %v5005
        %v5007 = vrot.slane %v4999, %v5006
        %v5009 = vunpack.c.l.s4 1966171168
        %v5010 = vunpack.c.0.s8 %v5009
        %v5011 = vlaneseq
        %v5012 = vshrl.u32 %v5011, 7
        %v5013 = vsub.s32 %v5010, %v5012
        %v5014 = vrot.slane %v5000, %v5013
        %v5015 = vcombine.low %v5007, %v5014
        %v5016 = vcombine.low %v2512, %v2516
        %v5017 = vcombine.low %v2520, %v2524
        %v5018 = vcombine.low %v2528, %v2532
        %v5019 = vcombine.low %v2536, %v2540
        %v5021 = vunpack.c.l.s4 1966171168
        %v5022 = vunpack.c.0.s8 %v5021
        %v5023 = vlaneseq
        %v5024 = vshrl.u32 %v5023, 7
        %v5025 = vsub.s32 %v5022, %v5024
        %v5026 = vrot.slane %v5016, %v5025
        %v5028 = vunpack.c.l.s4 1966171168
        %v5029 = vunpack.c.0.s8 %v5028
        %v5030 = vlaneseq
        %v5031 = vshrl.u32 %v5030, 7
        %v5032 = vsub.s32 %v5029, %v5031
        %v5033 = vrot.slane %v5017, %v5032
        %v5035 = vunpack.c.l.s4 1966171168
        %v5036 = vunpack.c.0.s8 %v5035
        %v5037 = vlaneseq
        %v5038 = vshrl.u32 %v5037, 7
        %v5039 = vsub.s32 %v5036, %v5038
        %v5040 = vrot.slane %v5018, %v5039
        %v5042 = vunpack.c.l.s4 1966171168
        %v5043 = vunpack.c.0.s8 %v5042
        %v5044 = vlaneseq
        %v5045 = vshrl.u32 %v5044, 7
        %v5046 = vsub.s32 %v5043, %v5045
        %v5047 = vrot.slane %v5019, %v5046
        %v5048 = vcombine.low %v5026, %v5033
        %v5049 = vcombine.low %v5040, %v5047
        %v5051 = vunpack.c.l.s4 1966171168
        %v5052 = vunpack.c.0.s8 %v5051
        %v5053 = vlaneseq
        %v5054 = vshrl.u32 %v5053, 7
        %v5055 = vsub.s32 %v5052, %v5054
        %v5056 = vrot.slane %v5048, %v5055
        %v5058 = vunpack.c.l.s4 1966171168
        %v5059 = vunpack.c.0.s8 %v5058
        %v5060 = vlaneseq
        %v5061 = vshrl.u32 %v5060, 7
        %v5062 = vsub.s32 %v5059, %v5061
        %v5063 = vrot.slane %v5049, %v5062
        %v5064 = vcombine.low %v5056, %v5063
        %v5065 = vcombine.low %v2544, %v2548
        %v5066 = vcombine.low %v2552, %v2556
        %v5067 = vcombine.low %v2560, %v2564
        %v5068 = vcombine.low %v2568, %v2572
        %v5070 = vunpack.c.l.s4 1966171168
        %v5071 = vunpack.c.0.s8 %v5070
        %v5072 = vlaneseq
        %v5073 = vshrl.u32 %v5072, 7
        %v5074 = vsub.s32 %v5071, %v5073
        %v5075 = vrot.slane %v5065, %v5074
        %v5077 = vunpack.c.l.s4 1966171168
        %v5078 = vunpack.c.0.s8 %v5077
        %v5079 = vlaneseq
        %v5080 = vshrl.u32 %v5079, 7
        %v5081 = vsub.s32 %v5078, %v5080
        %v5082 = vrot.slane %v5066, %v5081
        %v5084 = vunpack.c.l.s4 1966171168
        %v5085 = vunpack.c.0.s8 %v5084
        %v5086 = vlaneseq
        %v5087 = vshrl.u32 %v5086, 7
        %v5088 = vsub.s32 %v5085, %v5087
        %v5089 = vrot.slane %v5067, %v5088
        %v5091 = vunpack.c.l.s4 1966171168
        %v5092 = vunpack.c.0.s8 %v5091
        %v5093 = vlaneseq
        %v5094 = vshrl.u32 %v5093, 7
        %v5095 = vsub.s32 %v5092, %v5094
        %v5096 = vrot.slane %v5068, %v5095
        %v5097 = vcombine.low %v5075, %v5082
        %v5098 = vcombine.low %v5089, %v5096
        %v5100 = vunpack.c.l.s4 1966171168
        %v5101 = vunpack.c.0.s8 %v5100
        %v5102 = vlaneseq
        %v5103 = vshrl.u32 %v5102, 7
        %v5104 = vsub.s32 %v5101, %v5103
        %v5105 = vrot.slane %v5097, %v5104
        %v5107 = vunpack.c.l.s4 1966171168
        %v5108 = vunpack.c.0.s8 %v5107
        %v5109 = vlaneseq
        %v5110 = vshrl.u32 %v5109, 7
        %v5111 = vsub.s32 %v5108, %v5110
        %v5112 = vrot.slane %v5098, %v5111
        %v5113 = vcombine.low %v5105, %v5112
        %v5114 = vcombine.low %v2576, %v2580
        %v5115 = vcombine.low %v2584, %v2588
        %v5116 = vcombine.low %v2592, %v2596
        %v5117 = vcombine.low %v2600, %v2604
        %v5119 = vunpack.c.l.s4 1966171168
        %v5120 = vunpack.c.0.s8 %v5119
        %v5121 = vlaneseq
        %v5122 = vshrl.u32 %v5121, 7
        %v5123 = vsub.s32 %v5120, %v5122
        %v5124 = vrot.slane %v5114, %v5123
        %v5126 = vunpack.c.l.s4 1966171168
        %v5127 = vunpack.c.0.s8 %v5126
        %v5128 = vlaneseq
        %v5129 = vshrl.u32 %v5128, 7
        %v5130 = vsub.s32 %v5127, %v5129
        %v5131 = vrot.slane %v5115, %v5130
        %v5133 = vunpack.c.l.s4 1966171168
        %v5134 = vunpack.c.0.s8 %v5133
        %v5135 = vlaneseq
        %v5136 = vshrl.u32 %v5135, 7
        %v5137 = vsub.s32 %v5134, %v5136
        %v5138 = vrot.slane %v5116, %v5137
        %v5140 = vunpack.c.l.s4 1966171168
        %v5141 = vunpack.c.0.s8 %v5140
        %v5142 = vlaneseq
        %v5143 = vshrl.u32 %v5142, 7
        %v5144 = vsub.s32 %v5141, %v5143
        %v5145 = vrot.slane %v5117, %v5144
        %v5146 = vcombine.low %v5124, %v5131
        %v5147 = vcombine.low %v5138, %v5145
        %v5149 = vunpack.c.l.s4 1966171168
        %v5150 = vunpack.c.0.s8 %v5149
        %v5151 = vlaneseq
        %v5152 = vshrl.u32 %v5151, 7
        %v5153 = vsub.s32 %v5150, %v5152
        %v5154 = vrot.slane %v5146, %v5153
        %v5156 = vunpack.c.l.s4 1966171168
        %v5157 = vunpack.c.0.s8 %v5156
        %v5158 = vlaneseq
        %v5159 = vshrl.u32 %v5158, 7
        %v5160 = vsub.s32 %v5157, %v5159
        %v5161 = vrot.slane %v5147, %v5160
        %v5162 = vcombine.low %v5154, %v5161
        %v5163 = vcombine.low %v2608, %v2612
        %v5164 = vcombine.low %v2616, %v2620
        %v5165 = vcombine.low %v2624, %v2628
        %v5166 = vcombine.low %v2632, %v2636
        %v5168 = vunpack.c.l.s4 1966171168
        %v5169 = vunpack.c.0.s8 %v5168
        %v5170 = vlaneseq
        %v5171 = vshrl.u32 %v5170, 7
        %v5172 = vsub.s32 %v5169, %v5171
        %v5173 = vrot.slane %v5163, %v5172
        %v5175 = vunpack.c.l.s4 1966171168
        %v5176 = vunpack.c.0.s8 %v5175
        %v5177 = vlaneseq
        %v5178 = vshrl.u32 %v5177, 7
        %v5179 = vsub.s32 %v5176, %v5178
        %v5180 = vrot.slane %v5164, %v5179
        %v5182 = vunpack.c.l.s4 1966171168
        %v5183 = vunpack.c.0.s8 %v5182
        %v5184 = vlaneseq
        %v5185 = vshrl.u32 %v5184, 7
        %v5186 = vsub.s32 %v5183, %v5185
        %v5187 = vrot.slane %v5165, %v5186
        %v5189 = vunpack.c.l.s4 1966171168
        %v5190 = vunpack.c.0.s8 %v5189
        %v5191 = vlaneseq
        %v5192 = vshrl.u32 %v5191, 7
        %v5193 = vsub.s32 %v5190, %v5192
        %v5194 = vrot.slane %v5166, %v5193
        %v5195 = vcombine.low %v5173, %v5180
        %v5196 = vcombine.low %v5187, %v5194
        %v5198 = vunpack.c.l.s4 1966171168
        %v5199 = vunpack.c.0.s8 %v5198
        %v5200 = vlaneseq
        %v5201 = vshrl.u32 %v5200, 7
        %v5202 = vsub.s32 %v5199, %v5201
        %v5203 = vrot.slane %v5195, %v5202
        %v5205 = vunpack.c.l.s4 1966171168
        %v5206 = vunpack.c.0.s8 %v5205
        %v5207 = vlaneseq
        %v5208 = vshrl.u32 %v5207, 7
        %v5209 = vsub.s32 %v5206, %v5208
        %v5210 = vrot.slane %v5196, %v5209
        %v5211 = vcombine.low %v5203, %v5210
        %v5212 = vcombine.low %v2640, %v2644
        %v5213 = vcombine.low %v2648, %v2652
        %v5214 = vcombine.low %v2656, %v2660
        %v5215 = vcombine.low %v2664, %v2668
        %v5217 = vunpack.c.l.s4 1966171168
        %v5218 = vunpack.c.0.s8 %v5217
        %v5219 = vlaneseq
        %v5220 = vshrl.u32 %v5219, 7
        %v5221 = vsub.s32 %v5218, %v5220
        %v5222 = vrot.slane %v5212, %v5221
        %v5224 = vunpack.c.l.s4 1966171168
        %v5225 = vunpack.c.0.s8 %v5224
        %v5226 = vlaneseq
        %v5227 = vshrl.u32 %v5226, 7
        %v5228 = vsub.s32 %v5225, %v5227
        %v5229 = vrot.slane %v5213, %v5228
        %v5231 = vunpack.c.l.s4 1966171168
        %v5232 = vunpack.c.0.s8 %v5231
        %v5233 = vlaneseq
        %v5234 = vshrl.u32 %v5233, 7
        %v5235 = vsub.s32 %v5232, %v5234
        %v5236 = vrot.slane %v5214, %v5235
        %v5238 = vunpack.c.l.s4 1966171168
        %v5239 = vunpack.c.0.s8 %v5238
        %v5240 = vlaneseq
        %v5241 = vshrl.u32 %v5240, 7
        %v5242 = vsub.s32 %v5239, %v5241
        %v5243 = vrot.slane %v5215, %v5242
        %v5244 = vcombine.low %v5222, %v5229
        %v5245 = vcombine.low %v5236, %v5243
        %v5247 = vunpack.c.l.s4 1966171168
        %v5248 = vunpack.c.0.s8 %v5247
        %v5249 = vlaneseq
        %v5250 = vshrl.u32 %v5249, 7
        %v5251 = vsub.s32 %v5248, %v5250
        %v5252 = vrot.slane %v5244, %v5251
        %v5254 = vunpack.c.l.s4 1966171168
        %v5255 = vunpack.c.0.s8 %v5254
        %v5256 = vlaneseq
        %v5257 = vshrl.u32 %v5256, 7
        %v5258 = vsub.s32 %v5255, %v5257
        %v5259 = vrot.slane %v5245, %v5258
        %v5260 = vcombine.low %v5252, %v5259
        %v5261 = vcombine.low %v2672, %v2676
        %v5262 = vcombine.low %v2680, %v2684
        %v5263 = vcombine.low %v2688, %v2692
        %v5264 = vcombine.low %v2696, %v2700
        %v5266 = vunpack.c.l.s4 1966171168
        %v5267 = vunpack.c.0.s8 %v5266
        %v5268 = vlaneseq
        %v5269 = vshrl.u32 %v5268, 7
        %v5270 = vsub.s32 %v5267, %v5269
        %v5271 = vrot.slane %v5261, %v5270
        %v5273 = vunpack.c.l.s4 1966171168
        %v5274 = vunpack.c.0.s8 %v5273
        %v5275 = vlaneseq
        %v5276 = vshrl.u32 %v5275, 7
        %v5277 = vsub.s32 %v5274, %v5276
        %v5278 = vrot.slane %v5262, %v5277
        %v5280 = vunpack.c.l.s4 1966171168
        %v5281 = vunpack.c.0.s8 %v5280
        %v5282 = vlaneseq
        %v5283 = vshrl.u32 %v5282, 7
        %v5284 = vsub.s32 %v5281, %v5283
        %v5285 = vrot.slane %v5263, %v5284
        %v5287 = vunpack.c.l.s4 1966171168
        %v5288 = vunpack.c.0.s8 %v5287
        %v5289 = vlaneseq
        %v5290 = vshrl.u32 %v5289, 7
        %v5291 = vsub.s32 %v5288, %v5290
        %v5292 = vrot.slane %v5264, %v5291
        %v5293 = vcombine.low %v5271, %v5278
        %v5294 = vcombine.low %v5285, %v5292
        %v5296 = vunpack.c.l.s4 1966171168
        %v5297 = vunpack.c.0.s8 %v5296
        %v5298 = vlaneseq
        %v5299 = vshrl.u32 %v5298, 7
        %v5300 = vsub.s32 %v5297, %v5299
        %v5301 = vrot.slane %v5293, %v5300
        %v5303 = vunpack.c.l.s4 1966171168
        %v5304 = vunpack.c.0.s8 %v5303
        %v5305 = vlaneseq
        %v5306 = vshrl.u32 %v5305, 7
        %v5307 = vsub.s32 %v5304, %v5306
        %v5308 = vrot.slane %v5294, %v5307
        %v5309 = vcombine.low %v5301, %v5308
        %v5310 = vcombine.low %v2704, %v2708
        %v5311 = vcombine.low %v2712, %v2716
        %v5312 = vcombine.low %v2720, %v2724
        %v5313 = vcombine.low %v2728, %v2732
        %v5315 = vunpack.c.l.s4 1966171168
        %v5316 = vunpack.c.0.s8 %v5315
        %v5317 = vlaneseq
        %v5318 = vshrl.u32 %v5317, 7
        %v5319 = vsub.s32 %v5316, %v5318
        %v5320 = vrot.slane %v5310, %v5319
        %v5322 = vunpack.c.l.s4 1966171168
        %v5323 = vunpack.c.0.s8 %v5322
        %v5324 = vlaneseq
        %v5325 = vshrl.u32 %v5324, 7
        %v5326 = vsub.s32 %v5323, %v5325
        %v5327 = vrot.slane %v5311, %v5326
        %v5329 = vunpack.c.l.s4 1966171168
        %v5330 = vunpack.c.0.s8 %v5329
        %v5331 = vlaneseq
        %v5332 = vshrl.u32 %v5331, 7
        %v5333 = vsub.s32 %v5330, %v5332
        %v5334 = vrot.slane %v5312, %v5333
        %v5336 = vunpack.c.l.s4 1966171168
        %v5337 = vunpack.c.0.s8 %v5336
        %v5338 = vlaneseq
        %v5339 = vshrl.u32 %v5338, 7
        %v5340 = vsub.s32 %v5337, %v5339
        %v5341 = vrot.slane %v5313, %v5340
        %v5342 = vcombine.low %v5320, %v5327
        %v5343 = vcombine.low %v5334, %v5341
        %v5345 = vunpack.c.l.s4 1966171168
        %v5346 = vunpack.c.0.s8 %v5345
        %v5347 = vlaneseq
        %v5348 = vshrl.u32 %v5347, 7
        %v5349 = vsub.s32 %v5346, %v5348
        %v5350 = vrot.slane %v5342, %v5349
        %v5352 = vunpack.c.l.s4 1966171168
        %v5353 = vunpack.c.0.s8 %v5352
        %v5354 = vlaneseq
        %v5355 = vshrl.u32 %v5354, 7
        %v5356 = vsub.s32 %v5353, %v5355
        %v5357 = vrot.slane %v5343, %v5356
        %v5358 = vcombine.low %v5350, %v5357
        %v5359 = vcombine.low %v2736, %v2740
        %v5360 = vcombine.low %v2744, %v2748
        %v5361 = vcombine.low %v2752, %v2756
        %v5362 = vcombine.low %v2760, %v2764
        %v5364 = vunpack.c.l.s4 1966171168
        %v5365 = vunpack.c.0.s8 %v5364
        %v5366 = vlaneseq
        %v5367 = vshrl.u32 %v5366, 7
        %v5368 = vsub.s32 %v5365, %v5367
        %v5369 = vrot.slane %v5359, %v5368
        %v5371 = vunpack.c.l.s4 1966171168
        %v5372 = vunpack.c.0.s8 %v5371
        %v5373 = vlaneseq
        %v5374 = vshrl.u32 %v5373, 7
        %v5375 = vsub.s32 %v5372, %v5374
        %v5376 = vrot.slane %v5360, %v5375
        %v5378 = vunpack.c.l.s4 1966171168
        %v5379 = vunpack.c.0.s8 %v5378
        %v5380 = vlaneseq
        %v5381 = vshrl.u32 %v5380, 7
        %v5382 = vsub.s32 %v5379, %v5381
        %v5383 = vrot.slane %v5361, %v5382
        %v5385 = vunpack.c.l.s4 1966171168
        %v5386 = vunpack.c.0.s8 %v5385
        %v5387 = vlaneseq
        %v5388 = vshrl.u32 %v5387, 7
        %v5389 = vsub.s32 %v5386, %v5388
        %v5390 = vrot.slane %v5362, %v5389
        %v5391 = vcombine.low %v5369, %v5376
        %v5392 = vcombine.low %v5383, %v5390
        %v5394 = vunpack.c.l.s4 1966171168
        %v5395 = vunpack.c.0.s8 %v5394
        %v5396 = vlaneseq
        %v5397 = vshrl.u32 %v5396, 7
        %v5398 = vsub.s32 %v5395, %v5397
        %v5399 = vrot.slane %v5391, %v5398
        %v5401 = vunpack.c.l.s4 1966171168
        %v5402 = vunpack.c.0.s8 %v5401
        %v5403 = vlaneseq
        %v5404 = vshrl.u32 %v5403, 7
        %v5405 = vsub.s32 %v5402, %v5404
        %v5406 = vrot.slane %v5392, %v5405
        %v5407 = vcombine.low %v5399, %v5406
        %v5408 = vcombine.low %v2768, %v2772
        %v5409 = vcombine.low %v2776, %v2780
        %v5410 = vcombine.low %v2784, %v2788
        %v5411 = vcombine.low %v2792, %v2796
        %v5413 = vunpack.c.l.s4 1966171168
        %v5414 = vunpack.c.0.s8 %v5413
        %v5415 = vlaneseq
        %v5416 = vshrl.u32 %v5415, 7
        %v5417 = vsub.s32 %v5414, %v5416
        %v5418 = vrot.slane %v5408, %v5417
        %v5420 = vunpack.c.l.s4 1966171168
        %v5421 = vunpack.c.0.s8 %v5420
        %v5422 = vlaneseq
        %v5423 = vshrl.u32 %v5422, 7
        %v5424 = vsub.s32 %v5421, %v5423
        %v5425 = vrot.slane %v5409, %v5424
        %v5427 = vunpack.c.l.s4 1966171168
        %v5428 = vunpack.c.0.s8 %v5427
        %v5429 = vlaneseq
        %v5430 = vshrl.u32 %v5429, 7
        %v5431 = vsub.s32 %v5428, %v5430
        %v5432 = vrot.slane %v5410, %v5431
        %v5434 = vunpack.c.l.s4 1966171168
        %v5435 = vunpack.c.0.s8 %v5434
        %v5436 = vlaneseq
        %v5437 = vshrl.u32 %v5436, 7
        %v5438 = vsub.s32 %v5435, %v5437
        %v5439 = vrot.slane %v5411, %v5438
        %v5440 = vcombine.low %v5418, %v5425
        %v5441 = vcombine.low %v5432, %v5439
        %v5443 = vunpack.c.l.s4 1966171168
        %v5444 = vunpack.c.0.s8 %v5443
        %v5445 = vlaneseq
        %v5446 = vshrl.u32 %v5445, 7
        %v5447 = vsub.s32 %v5444, %v5446
        %v5448 = vrot.slane %v5440, %v5447
        %v5450 = vunpack.c.l.s4 1966171168
        %v5451 = vunpack.c.0.s8 %v5450
        %v5452 = vlaneseq
        %v5453 = vshrl.u32 %v5452, 7
        %v5454 = vsub.s32 %v5451, %v5453
        %v5455 = vrot.slane %v5441, %v5454
        %v5456 = vcombine.low %v5448, %v5455
        %v5457 = vcombine.low %v2800, %v2804
        %v5458 = vcombine.low %v2808, %v2812
        %v5459 = vcombine.low %v2816, %v2820
        %v5460 = vcombine.low %v2824, %v2828
        %v5462 = vunpack.c.l.s4 1966171168
        %v5463 = vunpack.c.0.s8 %v5462
        %v5464 = vlaneseq
        %v5465 = vshrl.u32 %v5464, 7
        %v5466 = vsub.s32 %v5463, %v5465
        %v5467 = vrot.slane %v5457, %v5466
        %v5469 = vunpack.c.l.s4 1966171168
        %v5470 = vunpack.c.0.s8 %v5469
        %v5471 = vlaneseq
        %v5472 = vshrl.u32 %v5471, 7
        %v5473 = vsub.s32 %v5470, %v5472
        %v5474 = vrot.slane %v5458, %v5473
        %v5476 = vunpack.c.l.s4 1966171168
        %v5477 = vunpack.c.0.s8 %v5476
        %v5478 = vlaneseq
        %v5479 = vshrl.u32 %v5478, 7
        %v5480 = vsub.s32 %v5477, %v5479
        %v5481 = vrot.slane %v5459, %v5480
        %v5483 = vunpack.c.l.s4 1966171168
        %v5484 = vunpack.c.0.s8 %v5483
        %v5485 = vlaneseq
        %v5486 = vshrl.u32 %v5485, 7
        %v5487 = vsub.s32 %v5484, %v5486
        %v5488 = vrot.slane %v5460, %v5487
        %v5489 = vcombine.low %v5467, %v5474
        %v5490 = vcombine.low %v5481, %v5488
        %v5492 = vunpack.c.l.s4 1966171168
        %v5493 = vunpack.c.0.s8 %v5492
        %v5494 = vlaneseq
        %v5495 = vshrl.u32 %v5494, 7
        %v5496 = vsub.s32 %v5493, %v5495
        %v5497 = vrot.slane %v5489, %v5496
        %v5499 = vunpack.c.l.s4 1966171168
        %v5500 = vunpack.c.0.s8 %v5499
        %v5501 = vlaneseq
        %v5502 = vshrl.u32 %v5501, 7
        %v5503 = vsub.s32 %v5500, %v5502
        %v5504 = vrot.slane %v5490, %v5503
        %v5505 = vcombine.low %v5497, %v5504
        %v5506 = vcombine.low %v2832, %v2836
        %v5507 = vcombine.low %v2840, %v2844
        %v5508 = vcombine.low %v2848, %v2852
        %v5509 = vcombine.low %v2856, %v2860
        %v5511 = vunpack.c.l.s4 1966171168
        %v5512 = vunpack.c.0.s8 %v5511
        %v5513 = vlaneseq
        %v5514 = vshrl.u32 %v5513, 7
        %v5515 = vsub.s32 %v5512, %v5514
        %v5516 = vrot.slane %v5506, %v5515
        %v5518 = vunpack.c.l.s4 1966171168
        %v5519 = vunpack.c.0.s8 %v5518
        %v5520 = vlaneseq
        %v5521 = vshrl.u32 %v5520, 7
        %v5522 = vsub.s32 %v5519, %v5521
        %v5523 = vrot.slane %v5507, %v5522
        %v5525 = vunpack.c.l.s4 1966171168
        %v5526 = vunpack.c.0.s8 %v5525
        %v5527 = vlaneseq
        %v5528 = vshrl.u32 %v5527, 7
        %v5529 = vsub.s32 %v5526, %v5528
        %v5530 = vrot.slane %v5508, %v5529
        %v5532 = vunpack.c.l.s4 1966171168
        %v5533 = vunpack.c.0.s8 %v5532
        %v5534 = vlaneseq
        %v5535 = vshrl.u32 %v5534, 7
        %v5536 = vsub.s32 %v5533, %v5535
        %v5537 = vrot.slane %v5509, %v5536
        %v5538 = vcombine.low %v5516, %v5523
        %v5539 = vcombine.low %v5530, %v5537
        %v5541 = vunpack.c.l.s4 1966171168
        %v5542 = vunpack.c.0.s8 %v5541
        %v5543 = vlaneseq
        %v5544 = vshrl.u32 %v5543, 7
        %v5545 = vsub.s32 %v5542, %v5544
        %v5546 = vrot.slane %v5538, %v5545
        %v5548 = vunpack.c.l.s4 1966171168
        %v5549 = vunpack.c.0.s8 %v5548
        %v5550 = vlaneseq
        %v5551 = vshrl.u32 %v5550, 7
        %v5552 = vsub.s32 %v5549, %v5551
        %v5553 = vrot.slane %v5539, %v5552
        %v5554 = vcombine.low %v5546, %v5553
        %v5555 = vcombine.low %v2864, %v2868
        %v5556 = vcombine.low %v2872, %v2876
        %v5557 = vcombine.low %v2880, %v2884
        %v5558 = vcombine.low %v2888, %v2892
        %v5560 = vunpack.c.l.s4 1966171168
        %v5561 = vunpack.c.0.s8 %v5560
        %v5562 = vlaneseq
        %v5563 = vshrl.u32 %v5562, 7
        %v5564 = vsub.s32 %v5561, %v5563
        %v5565 = vrot.slane %v5555, %v5564
        %v5567 = vunpack.c.l.s4 1966171168
        %v5568 = vunpack.c.0.s8 %v5567
        %v5569 = vlaneseq
        %v5570 = vshrl.u32 %v5569, 7
        %v5571 = vsub.s32 %v5568, %v5570
        %v5572 = vrot.slane %v5556, %v5571
        %v5574 = vunpack.c.l.s4 1966171168
        %v5575 = vunpack.c.0.s8 %v5574
        %v5576 = vlaneseq
        %v5577 = vshrl.u32 %v5576, 7
        %v5578 = vsub.s32 %v5575, %v5577
        %v5579 = vrot.slane %v5557, %v5578
        %v5581 = vunpack.c.l.s4 1966171168
        %v5582 = vunpack.c.0.s8 %v5581
        %v5583 = vlaneseq
        %v5584 = vshrl.u32 %v5583, 7
        %v5585 = vsub.s32 %v5582, %v5584
        %v5586 = vrot.slane %v5558, %v5585
        %v5587 = vcombine.low %v5565, %v5572
        %v5588 = vcombine.low %v5579, %v5586
        %v5590 = vunpack.c.l.s4 1966171168
        %v5591 = vunpack.c.0.s8 %v5590
        %v5592 = vlaneseq
        %v5593 = vshrl.u32 %v5592, 7
        %v5594 = vsub.s32 %v5591, %v5593
        %v5595 = vrot.slane %v5587, %v5594
        %v5597 = vunpack.c.l.s4 1966171168
        %v5598 = vunpack.c.0.s8 %v5597
        %v5599 = vlaneseq
        %v5600 = vshrl.u32 %v5599, 7
        %v5601 = vsub.s32 %v5598, %v5600
        %v5602 = vrot.slane %v5588, %v5601
        %v5603 = vcombine.low %v5595, %v5602
        %v5604 = vcombine.low %v2896, %v2900
        %v5605 = vcombine.low %v2904, %v2908
        %v5606 = vcombine.low %v2912, %v2916
        %v5607 = vcombine.low %v2920, %v2924
        %v5609 = vunpack.c.l.s4 1966171168
        %v5610 = vunpack.c.0.s8 %v5609
        %v5611 = vlaneseq
        %v5612 = vshrl.u32 %v5611, 7
        %v5613 = vsub.s32 %v5610, %v5612
        %v5614 = vrot.slane %v5604, %v5613
        %v5616 = vunpack.c.l.s4 1966171168
        %v5617 = vunpack.c.0.s8 %v5616
        %v5618 = vlaneseq
        %v5619 = vshrl.u32 %v5618, 7
        %v5620 = vsub.s32 %v5617, %v5619
        %v5621 = vrot.slane %v5605, %v5620
        %v5623 = vunpack.c.l.s4 1966171168
        %v5624 = vunpack.c.0.s8 %v5623
        %v5625 = vlaneseq
        %v5626 = vshrl.u32 %v5625, 7
        %v5627 = vsub.s32 %v5624, %v5626
        %v5628 = vrot.slane %v5606, %v5627
        %v5630 = vunpack.c.l.s4 1966171168
        %v5631 = vunpack.c.0.s8 %v5630
        %v5632 = vlaneseq
        %v5633 = vshrl.u32 %v5632, 7
        %v5634 = vsub.s32 %v5631, %v5633
        %v5635 = vrot.slane %v5607, %v5634
        %v5636 = vcombine.low %v5614, %v5621
        %v5637 = vcombine.low %v5628, %v5635
        %v5639 = vunpack.c.l.s4 1966171168
        %v5640 = vunpack.c.0.s8 %v5639
        %v5641 = vlaneseq
        %v5642 = vshrl.u32 %v5641, 7
        %v5643 = vsub.s32 %v5640, %v5642
        %v5644 = vrot.slane %v5636, %v5643
        %v5646 = vunpack.c.l.s4 1966171168
        %v5647 = vunpack.c.0.s8 %v5646
        %v5648 = vlaneseq
        %v5649 = vshrl.u32 %v5648, 7
        %v5650 = vsub.s32 %v5647, %v5649
        %v5651 = vrot.slane %v5637, %v5650
        %v5652 = vcombine.low %v5644, %v5651
        %v5653 = vcombine.low %v2928, %v2932
        %v5654 = vcombine.low %v2936, %v2940
        %v5655 = vcombine.low %v2944, %v2948
        %v5656 = vcombine.low %v2952, %v2956
        %v5658 = vunpack.c.l.s4 1966171168
        %v5659 = vunpack.c.0.s8 %v5658
        %v5660 = vlaneseq
        %v5661 = vshrl.u32 %v5660, 7
        %v5662 = vsub.s32 %v5659, %v5661
        %v5663 = vrot.slane %v5653, %v5662
        %v5665 = vunpack.c.l.s4 1966171168
        %v5666 = vunpack.c.0.s8 %v5665
        %v5667 = vlaneseq
        %v5668 = vshrl.u32 %v5667, 7
        %v5669 = vsub.s32 %v5666, %v5668
        %v5670 = vrot.slane %v5654, %v5669
        %v5672 = vunpack.c.l.s4 1966171168
        %v5673 = vunpack.c.0.s8 %v5672
        %v5674 = vlaneseq
        %v5675 = vshrl.u32 %v5674, 7
        %v5676 = vsub.s32 %v5673, %v5675
        %v5677 = vrot.slane %v5655, %v5676
        %v5679 = vunpack.c.l.s4 1966171168
        %v5680 = vunpack.c.0.s8 %v5679
        %v5681 = vlaneseq
        %v5682 = vshrl.u32 %v5681, 7
        %v5683 = vsub.s32 %v5680, %v5682
        %v5684 = vrot.slane %v5656, %v5683
        %v5685 = vcombine.low %v5663, %v5670
        %v5686 = vcombine.low %v5677, %v5684
        %v5688 = vunpack.c.l.s4 1966171168
        %v5689 = vunpack.c.0.s8 %v5688
        %v5690 = vlaneseq
        %v5691 = vshrl.u32 %v5690, 7
        %v5692 = vsub.s32 %v5689, %v5691
        %v5693 = vrot.slane %v5685, %v5692
        %v5695 = vunpack.c.l.s4 1966171168
        %v5696 = vunpack.c.0.s8 %v5695
        %v5697 = vlaneseq
        %v5698 = vshrl.u32 %v5697, 7
        %v5699 = vsub.s32 %v5696, %v5698
        %v5700 = vrot.slane %v5686, %v5699
        %v5701 = vcombine.low %v5693, %v5700
        %v5702 = vcombine.low %v2960, %v2964
        %v5703 = vcombine.low %v2968, %v2972
        %v5704 = vcombine.low %v2976, %v2980
        %v5705 = vcombine.low %v2984, %v2988
        %v5707 = vunpack.c.l.s4 1966171168
        %v5708 = vunpack.c.0.s8 %v5707
        %v5709 = vlaneseq
        %v5710 = vshrl.u32 %v5709, 7
        %v5711 = vsub.s32 %v5708, %v5710
        %v5712 = vrot.slane %v5702, %v5711
        %v5714 = vunpack.c.l.s4 1966171168
        %v5715 = vunpack.c.0.s8 %v5714
        %v5716 = vlaneseq
        %v5717 = vshrl.u32 %v5716, 7
        %v5718 = vsub.s32 %v5715, %v5717
        %v5719 = vrot.slane %v5703, %v5718
        %v5721 = vunpack.c.l.s4 1966171168
        %v5722 = vunpack.c.0.s8 %v5721
        %v5723 = vlaneseq
        %v5724 = vshrl.u32 %v5723, 7
        %v5725 = vsub.s32 %v5722, %v5724
        %v5726 = vrot.slane %v5704, %v5725
        %v5728 = vunpack.c.l.s4 1966171168
        %v5729 = vunpack.c.0.s8 %v5728
        %v5730 = vlaneseq
        %v5731 = vshrl.u32 %v5730, 7
        %v5732 = vsub.s32 %v5729, %v5731
        %v5733 = vrot.slane %v5705, %v5732
        %v5734 = vcombine.low %v5712, %v5719
        %v5735 = vcombine.low %v5726, %v5733
        %v5737 = vunpack.c.l.s4 1966171168
        %v5738 = vunpack.c.0.s8 %v5737
        %v5739 = vlaneseq
        %v5740 = vshrl.u32 %v5739, 7
        %v5741 = vsub.s32 %v5738, %v5740
        %v5742 = vrot.slane %v5734, %v5741
        %v5744 = vunpack.c.l.s4 1966171168
        %v5745 = vunpack.c.0.s8 %v5744
        %v5746 = vlaneseq
        %v5747 = vshrl.u32 %v5746, 7
        %v5748 = vsub.s32 %v5745, %v5747
        %v5749 = vrot.slane %v5735, %v5748
        %v5750 = vcombine.low %v5742, %v5749
        %v5751 = vcombine.low %v2992, %v2996
        %v5752 = vcombine.low %v3000, %v3004
        %v5753 = vcombine.low %v3008, %v3012
        %v5754 = vcombine.low %v3016, %v3020
        %v5756 = vunpack.c.l.s4 1966171168
        %v5757 = vunpack.c.0.s8 %v5756
        %v5758 = vlaneseq
        %v5759 = vshrl.u32 %v5758, 7
        %v5760 = vsub.s32 %v5757, %v5759
        %v5761 = vrot.slane %v5751, %v5760
        %v5763 = vunpack.c.l.s4 1966171168
        %v5764 = vunpack.c.0.s8 %v5763
        %v5765 = vlaneseq
        %v5766 = vshrl.u32 %v5765, 7
        %v5767 = vsub.s32 %v5764, %v5766
        %v5768 = vrot.slane %v5752, %v5767
        %v5770 = vunpack.c.l.s4 1966171168
        %v5771 = vunpack.c.0.s8 %v5770
        %v5772 = vlaneseq
        %v5773 = vshrl.u32 %v5772, 7
        %v5774 = vsub.s32 %v5771, %v5773
        %v5775 = vrot.slane %v5753, %v5774
        %v5777 = vunpack.c.l.s4 1966171168
        %v5778 = vunpack.c.0.s8 %v5777
        %v5779 = vlaneseq
        %v5780 = vshrl.u32 %v5779, 7
        %v5781 = vsub.s32 %v5778, %v5780
        %v5782 = vrot.slane %v5754, %v5781
        %v5783 = vcombine.low %v5761, %v5768
        %v5784 = vcombine.low %v5775, %v5782
        %v5786 = vunpack.c.l.s4 1966171168
        %v5787 = vunpack.c.0.s8 %v5786
        %v5788 = vlaneseq
        %v5789 = vshrl.u32 %v5788, 7
        %v5790 = vsub.s32 %v5787, %v5789
        %v5791 = vrot.slane %v5783, %v5790
        %v5793 = vunpack.c.l.s4 1966171168
        %v5794 = vunpack.c.0.s8 %v5793
        %v5795 = vlaneseq
        %v5796 = vshrl.u32 %v5795, 7
        %v5797 = vsub.s32 %v5794, %v5796
        %v5798 = vrot.slane %v5784, %v5797
        %v5799 = vcombine.low %v5791, %v5798
        %v5800 = vcombine.low %v3024, %v3028
        %v5801 = vcombine.low %v3032, %v3036
        %v5802 = vcombine.low %v3040, %v3044
        %v5803 = vcombine.low %v3048, %v3052
        %v5805 = vunpack.c.l.s4 1966171168
        %v5806 = vunpack.c.0.s8 %v5805
        %v5807 = vlaneseq
        %v5808 = vshrl.u32 %v5807, 7
        %v5809 = vsub.s32 %v5806, %v5808
        %v5810 = vrot.slane %v5800, %v5809
        %v5812 = vunpack.c.l.s4 1966171168
        %v5813 = vunpack.c.0.s8 %v5812
        %v5814 = vlaneseq
        %v5815 = vshrl.u32 %v5814, 7
        %v5816 = vsub.s32 %v5813, %v5815
        %v5817 = vrot.slane %v5801, %v5816
        %v5819 = vunpack.c.l.s4 1966171168
        %v5820 = vunpack.c.0.s8 %v5819
        %v5821 = vlaneseq
        %v5822 = vshrl.u32 %v5821, 7
        %v5823 = vsub.s32 %v5820, %v5822
        %v5824 = vrot.slane %v5802, %v5823
        %v5826 = vunpack.c.l.s4 1966171168
        %v5827 = vunpack.c.0.s8 %v5826
        %v5828 = vlaneseq
        %v5829 = vshrl.u32 %v5828, 7
        %v5830 = vsub.s32 %v5827, %v5829
        %v5831 = vrot.slane %v5803, %v5830
        %v5832 = vcombine.low %v5810, %v5817
        %v5833 = vcombine.low %v5824, %v5831
        %v5835 = vunpack.c.l.s4 1966171168
        %v5836 = vunpack.c.0.s8 %v5835
        %v5837 = vlaneseq
        %v5838 = vshrl.u32 %v5837, 7
        %v5839 = vsub.s32 %v5836, %v5838
        %v5840 = vrot.slane %v5832, %v5839
        %v5842 = vunpack.c.l.s4 1966171168
        %v5843 = vunpack.c.0.s8 %v5842
        %v5844 = vlaneseq
        %v5845 = vshrl.u32 %v5844, 7
        %v5846 = vsub.s32 %v5843, %v5845
        %v5847 = vrot.slane %v5833, %v5846
        %v5848 = vcombine.low %v5840, %v5847
        %v5849 = vcombine.low %v3056, %v3060
        %v5850 = vcombine.low %v3064, %v3068
        %v5851 = vcombine.low %v3072, %v3076
        %v5852 = vcombine.low %v3080, %v3084
        %v5854 = vunpack.c.l.s4 1966171168
        %v5855 = vunpack.c.0.s8 %v5854
        %v5856 = vlaneseq
        %v5857 = vshrl.u32 %v5856, 7
        %v5858 = vsub.s32 %v5855, %v5857
        %v5859 = vrot.slane %v5849, %v5858
        %v5861 = vunpack.c.l.s4 1966171168
        %v5862 = vunpack.c.0.s8 %v5861
        %v5863 = vlaneseq
        %v5864 = vshrl.u32 %v5863, 7
        %v5865 = vsub.s32 %v5862, %v5864
        %v5866 = vrot.slane %v5850, %v5865
        %v5868 = vunpack.c.l.s4 1966171168
        %v5869 = vunpack.c.0.s8 %v5868
        %v5870 = vlaneseq
        %v5871 = vshrl.u32 %v5870, 7
        %v5872 = vsub.s32 %v5869, %v5871
        %v5873 = vrot.slane %v5851, %v5872
        %v5875 = vunpack.c.l.s4 1966171168
        %v5876 = vunpack.c.0.s8 %v5875
        %v5877 = vlaneseq
        %v5878 = vshrl.u32 %v5877, 7
        %v5879 = vsub.s32 %v5876, %v5878
        %v5880 = vrot.slane %v5852, %v5879
        %v5881 = vcombine.low %v5859, %v5866
        %v5882 = vcombine.low %v5873, %v5880
        %v5884 = vunpack.c.l.s4 1966171168
        %v5885 = vunpack.c.0.s8 %v5884
        %v5886 = vlaneseq
        %v5887 = vshrl.u32 %v5886, 7
        %v5888 = vsub.s32 %v5885, %v5887
        %v5889 = vrot.slane %v5881, %v5888
        %v5891 = vunpack.c.l.s4 1966171168
        %v5892 = vunpack.c.0.s8 %v5891
        %v5893 = vlaneseq
        %v5894 = vshrl.u32 %v5893, 7
        %v5895 = vsub.s32 %v5892, %v5894
        %v5896 = vrot.slane %v5882, %v5895
        %v5897 = vcombine.low %v5889, %v5896
        %v5898 = vcombine.low %v3088, %v3092
        %v5899 = vcombine.low %v3096, %v3100
        %v5900 = vcombine.low %v3104, %v3108
        %v5901 = vcombine.low %v3112, %v3116
        %v5903 = vunpack.c.l.s4 1966171168
        %v5904 = vunpack.c.0.s8 %v5903
        %v5905 = vlaneseq
        %v5906 = vshrl.u32 %v5905, 7
        %v5907 = vsub.s32 %v5904, %v5906
        %v5908 = vrot.slane %v5898, %v5907
        %v5910 = vunpack.c.l.s4 1966171168
        %v5911 = vunpack.c.0.s8 %v5910
        %v5912 = vlaneseq
        %v5913 = vshrl.u32 %v5912, 7
        %v5914 = vsub.s32 %v5911, %v5913
        %v5915 = vrot.slane %v5899, %v5914
        %v5917 = vunpack.c.l.s4 1966171168
        %v5918 = vunpack.c.0.s8 %v5917
        %v5919 = vlaneseq
        %v5920 = vshrl.u32 %v5919, 7
        %v5921 = vsub.s32 %v5918, %v5920
        %v5922 = vrot.slane %v5900, %v5921
        %v5924 = vunpack.c.l.s4 1966171168
        %v5925 = vunpack.c.0.s8 %v5924
        %v5926 = vlaneseq
        %v5927 = vshrl.u32 %v5926, 7
        %v5928 = vsub.s32 %v5925, %v5927
        %v5929 = vrot.slane %v5901, %v5928
        %v5930 = vcombine.low %v5908, %v5915
        %v5931 = vcombine.low %v5922, %v5929
        %v5933 = vunpack.c.l.s4 1966171168
        %v5934 = vunpack.c.0.s8 %v5933
        %v5935 = vlaneseq
        %v5936 = vshrl.u32 %v5935, 7
        %v5937 = vsub.s32 %v5934, %v5936
        %v5938 = vrot.slane %v5930, %v5937
        %v5940 = vunpack.c.l.s4 1966171168
        %v5941 = vunpack.c.0.s8 %v5940
        %v5942 = vlaneseq
        %v5943 = vshrl.u32 %v5942, 7
        %v5944 = vsub.s32 %v5941, %v5943
        %v5945 = vrot.slane %v5931, %v5944
        %v5946 = vcombine.low %v5938, %v5945
        %v5947 = vcombine.low %v3120, %v3124
        %v5948 = vcombine.low %v3128, %v3132
        %v5949 = vcombine.low %v3136, %v3140
        %v5950 = vcombine.low %v3144, %v3148
        %v5952 = vunpack.c.l.s4 1966171168
        %v5953 = vunpack.c.0.s8 %v5952
        %v5954 = vlaneseq
        %v5955 = vshrl.u32 %v5954, 7
        %v5956 = vsub.s32 %v5953, %v5955
        %v5957 = vrot.slane %v5947, %v5956
        %v5959 = vunpack.c.l.s4 1966171168
        %v5960 = vunpack.c.0.s8 %v5959
        %v5961 = vlaneseq
        %v5962 = vshrl.u32 %v5961, 7
        %v5963 = vsub.s32 %v5960, %v5962
        %v5964 = vrot.slane %v5948, %v5963
        %v5966 = vunpack.c.l.s4 1966171168
        %v5967 = vunpack.c.0.s8 %v5966
        %v5968 = vlaneseq
        %v5969 = vshrl.u32 %v5968, 7
        %v5970 = vsub.s32 %v5967, %v5969
        %v5971 = vrot.slane %v5949, %v5970
        %v5973 = vunpack.c.l.s4 1966171168
        %v5974 = vunpack.c.0.s8 %v5973
        %v5975 = vlaneseq
        %v5976 = vshrl.u32 %v5975, 7
        %v5977 = vsub.s32 %v5974, %v5976
        %v5978 = vrot.slane %v5950, %v5977
        %v5979 = vcombine.low %v5957, %v5964
        %v5980 = vcombine.low %v5971, %v5978
        %v5982 = vunpack.c.l.s4 1966171168
        %v5983 = vunpack.c.0.s8 %v5982
        %v5984 = vlaneseq
        %v5985 = vshrl.u32 %v5984, 7
        %v5986 = vsub.s32 %v5983, %v5985
        %v5987 = vrot.slane %v5979, %v5986
        %v5989 = vunpack.c.l.s4 1966171168
        %v5990 = vunpack.c.0.s8 %v5989
        %v5991 = vlaneseq
        %v5992 = vshrl.u32 %v5991, 7
        %v5993 = vsub.s32 %v5990, %v5992
        %v5994 = vrot.slane %v5980, %v5993
        %v5995 = vcombine.low %v5987, %v5994
        %v5996 = vcombine.low %v3152, %v3156
        %v5997 = vcombine.low %v3160, %v3164
        %v5998 = vcombine.low %v3168, %v3172
        %v5999 = vcombine.low %v3176, %v3180
        %v6001 = vunpack.c.l.s4 1966171168
        %v6002 = vunpack.c.0.s8 %v6001
        %v6003 = vlaneseq
        %v6004 = vshrl.u32 %v6003, 7
        %v6005 = vsub.s32 %v6002, %v6004
        %v6006 = vrot.slane %v5996, %v6005
        %v6008 = vunpack.c.l.s4 1966171168
        %v6009 = vunpack.c.0.s8 %v6008
        %v6010 = vlaneseq
        %v6011 = vshrl.u32 %v6010, 7
        %v6012 = vsub.s32 %v6009, %v6011
        %v6013 = vrot.slane %v5997, %v6012
        %v6015 = vunpack.c.l.s4 1966171168
        %v6016 = vunpack.c.0.s8 %v6015
        %v6017 = vlaneseq
        %v6018 = vshrl.u32 %v6017, 7
        %v6019 = vsub.s32 %v6016, %v6018
        %v6020 = vrot.slane %v5998, %v6019
        %v6022 = vunpack.c.l.s4 1966171168
        %v6023 = vunpack.c.0.s8 %v6022
        %v6024 = vlaneseq
        %v6025 = vshrl.u32 %v6024, 7
        %v6026 = vsub.s32 %v6023, %v6025
        %v6027 = vrot.slane %v5999, %v6026
        %v6028 = vcombine.low %v6006, %v6013
        %v6029 = vcombine.low %v6020, %v6027
        %v6031 = vunpack.c.l.s4 1966171168
        %v6032 = vunpack.c.0.s8 %v6031
        %v6033 = vlaneseq
        %v6034 = vshrl.u32 %v6033, 7
        %v6035 = vsub.s32 %v6032, %v6034
        %v6036 = vrot.slane %v6028, %v6035
        %v6038 = vunpack.c.l.s4 1966171168
        %v6039 = vunpack.c.0.s8 %v6038
        %v6040 = vlaneseq
        %v6041 = vshrl.u32 %v6040, 7
        %v6042 = vsub.s32 %v6039, %v6041
        %v6043 = vrot.slane %v6029, %v6042
        %v6044 = vcombine.low %v6036, %v6043
        %v6045 = vcombine.low %v3184, %v3188
        %v6046 = vcombine.low %v3192, %v3196
        %v6047 = vcombine.low %v3200, %v3204
        %v6048 = vcombine.low %v3208, %v3212
        %v6050 = vunpack.c.l.s4 1966171168
        %v6051 = vunpack.c.0.s8 %v6050
        %v6052 = vlaneseq
        %v6053 = vshrl.u32 %v6052, 7
        %v6054 = vsub.s32 %v6051, %v6053
        %v6055 = vrot.slane %v6045, %v6054
        %v6057 = vunpack.c.l.s4 1966171168
        %v6058 = vunpack.c.0.s8 %v6057
        %v6059 = vlaneseq
        %v6060 = vshrl.u32 %v6059, 7
        %v6061 = vsub.s32 %v6058, %v6060
        %v6062 = vrot.slane %v6046, %v6061
        %v6064 = vunpack.c.l.s4 1966171168
        %v6065 = vunpack.c.0.s8 %v6064
        %v6066 = vlaneseq
        %v6067 = vshrl.u32 %v6066, 7
        %v6068 = vsub.s32 %v6065, %v6067
        %v6069 = vrot.slane %v6047, %v6068
        %v6071 = vunpack.c.l.s4 1966171168
        %v6072 = vunpack.c.0.s8 %v6071
        %v6073 = vlaneseq
        %v6074 = vshrl.u32 %v6073, 7
        %v6075 = vsub.s32 %v6072, %v6074
        %v6076 = vrot.slane %v6048, %v6075
        %v6077 = vcombine.low %v6055, %v6062
        %v6078 = vcombine.low %v6069, %v6076
        %v6080 = vunpack.c.l.s4 1966171168
        %v6081 = vunpack.c.0.s8 %v6080
        %v6082 = vlaneseq
        %v6083 = vshrl.u32 %v6082, 7
        %v6084 = vsub.s32 %v6081, %v6083
        %v6085 = vrot.slane %v6077, %v6084
        %v6087 = vunpack.c.l.s4 1966171168
        %v6088 = vunpack.c.0.s8 %v6087
        %v6089 = vlaneseq
        %v6090 = vshrl.u32 %v6089, 7
        %v6091 = vsub.s32 %v6088, %v6090
        %v6092 = vrot.slane %v6078, %v6091
        %v6093 = vcombine.low %v6085, %v6092
        %v6094 = vcombine.low %v3216, %v3220
        %v6095 = vcombine.low %v3224, %v3228
        %v6096 = vcombine.low %v3232, %v3236
        %v6097 = vcombine.low %v3240, %v3244
        %v6099 = vunpack.c.l.s4 1966171168
        %v6100 = vunpack.c.0.s8 %v6099
        %v6101 = vlaneseq
        %v6102 = vshrl.u32 %v6101, 7
        %v6103 = vsub.s32 %v6100, %v6102
        %v6104 = vrot.slane %v6094, %v6103
        %v6106 = vunpack.c.l.s4 1966171168
        %v6107 = vunpack.c.0.s8 %v6106
        %v6108 = vlaneseq
        %v6109 = vshrl.u32 %v6108, 7
        %v6110 = vsub.s32 %v6107, %v6109
        %v6111 = vrot.slane %v6095, %v6110
        %v6113 = vunpack.c.l.s4 1966171168
        %v6114 = vunpack.c.0.s8 %v6113
        %v6115 = vlaneseq
        %v6116 = vshrl.u32 %v6115, 7
        %v6117 = vsub.s32 %v6114, %v6116
        %v6118 = vrot.slane %v6096, %v6117
        %v6120 = vunpack.c.l.s4 1966171168
        %v6121 = vunpack.c.0.s8 %v6120
        %v6122 = vlaneseq
        %v6123 = vshrl.u32 %v6122, 7
        %v6124 = vsub.s32 %v6121, %v6123
        %v6125 = vrot.slane %v6097, %v6124
        %v6126 = vcombine.low %v6104, %v6111
        %v6127 = vcombine.low %v6118, %v6125
        %v6129 = vunpack.c.l.s4 1966171168
        %v6130 = vunpack.c.0.s8 %v6129
        %v6131 = vlaneseq
        %v6132 = vshrl.u32 %v6131, 7
        %v6133 = vsub.s32 %v6130, %v6132
        %v6134 = vrot.slane %v6126, %v6133
        %v6136 = vunpack.c.l.s4 1966171168
        %v6137 = vunpack.c.0.s8 %v6136
        %v6138 = vlaneseq
        %v6139 = vshrl.u32 %v6138, 7
        %v6140 = vsub.s32 %v6137, %v6139
        %v6141 = vrot.slane %v6127, %v6140
        %v6142 = vcombine.low %v6134, %v6141
        %v6143 = vcombine.low %v3248, %v3252
        %v6144 = vcombine.low %v3256, %v3260
        %v6145 = vcombine.low %v3264, %v3268
        %v6146 = vcombine.low %v3272, %v3276
        %v6148 = vunpack.c.l.s4 1966171168
        %v6149 = vunpack.c.0.s8 %v6148
        %v6150 = vlaneseq
        %v6151 = vshrl.u32 %v6150, 7
        %v6152 = vsub.s32 %v6149, %v6151
        %v6153 = vrot.slane %v6143, %v6152
        %v6155 = vunpack.c.l.s4 1966171168
        %v6156 = vunpack.c.0.s8 %v6155
        %v6157 = vlaneseq
        %v6158 = vshrl.u32 %v6157, 7
        %v6159 = vsub.s32 %v6156, %v6158
        %v6160 = vrot.slane %v6144, %v6159
        %v6162 = vunpack.c.l.s4 1966171168
        %v6163 = vunpack.c.0.s8 %v6162
        %v6164 = vlaneseq
        %v6165 = vshrl.u32 %v6164, 7
        %v6166 = vsub.s32 %v6163, %v6165
        %v6167 = vrot.slane %v6145, %v6166
        %v6169 = vunpack.c.l.s4 1966171168
        %v6170 = vunpack.c.0.s8 %v6169
        %v6171 = vlaneseq
        %v6172 = vshrl.u32 %v6171, 7
        %v6173 = vsub.s32 %v6170, %v6172
        %v6174 = vrot.slane %v6146, %v6173
        %v6175 = vcombine.low %v6153, %v6160
        %v6176 = vcombine.low %v6167, %v6174
        %v6178 = vunpack.c.l.s4 1966171168
        %v6179 = vunpack.c.0.s8 %v6178
        %v6180 = vlaneseq
        %v6181 = vshrl.u32 %v6180, 7
        %v6182 = vsub.s32 %v6179, %v6181
        %v6183 = vrot.slane %v6175, %v6182
        %v6185 = vunpack.c.l.s4 1966171168
        %v6186 = vunpack.c.0.s8 %v6185
        %v6187 = vlaneseq
        %v6188 = vshrl.u32 %v6187, 7
        %v6189 = vsub.s32 %v6186, %v6188
        %v6190 = vrot.slane %v6176, %v6189
        %v6191 = vcombine.low %v6183, %v6190
        %v6192 = vcombine.low %v3280, %v3284
        %v6193 = vcombine.low %v3288, %v3292
        %v6194 = vcombine.low %v3296, %v3300
        %v6195 = vcombine.low %v3304, %v3308
        %v6197 = vunpack.c.l.s4 1966171168
        %v6198 = vunpack.c.0.s8 %v6197
        %v6199 = vlaneseq
        %v6200 = vshrl.u32 %v6199, 7
        %v6201 = vsub.s32 %v6198, %v6200
        %v6202 = vrot.slane %v6192, %v6201
        %v6204 = vunpack.c.l.s4 1966171168
        %v6205 = vunpack.c.0.s8 %v6204
        %v6206 = vlaneseq
        %v6207 = vshrl.u32 %v6206, 7
        %v6208 = vsub.s32 %v6205, %v6207
        %v6209 = vrot.slane %v6193, %v6208
        %v6211 = vunpack.c.l.s4 1966171168
        %v6212 = vunpack.c.0.s8 %v6211
        %v6213 = vlaneseq
        %v6214 = vshrl.u32 %v6213, 7
        %v6215 = vsub.s32 %v6212, %v6214
        %v6216 = vrot.slane %v6194, %v6215
        %v6218 = vunpack.c.l.s4 1966171168
        %v6219 = vunpack.c.0.s8 %v6218
        %v6220 = vlaneseq
        %v6221 = vshrl.u32 %v6220, 7
        %v6222 = vsub.s32 %v6219, %v6221
        %v6223 = vrot.slane %v6195, %v6222
        %v6224 = vcombine.low %v6202, %v6209
        %v6225 = vcombine.low %v6216, %v6223
        %v6227 = vunpack.c.l.s4 1966171168
        %v6228 = vunpack.c.0.s8 %v6227
        %v6229 = vlaneseq
        %v6230 = vshrl.u32 %v6229, 7
        %v6231 = vsub.s32 %v6228, %v6230
        %v6232 = vrot.slane %v6224, %v6231
        %v6234 = vunpack.c.l.s4 1966171168
        %v6235 = vunpack.c.0.s8 %v6234
        %v6236 = vlaneseq
        %v6237 = vshrl.u32 %v6236, 7
        %v6238 = vsub.s32 %v6235, %v6237
        %v6239 = vrot.slane %v6225, %v6238
        %v6240 = vcombine.low %v6232, %v6239
        %v6241 = vcombine.low %v3312, %v3316
        %v6242 = vcombine.low %v3320, %v3324
        %v6243 = vcombine.low %v3328, %v3332
        %v6244 = vcombine.low %v3336, %v3340
        %v6246 = vunpack.c.l.s4 1966171168
        %v6247 = vunpack.c.0.s8 %v6246
        %v6248 = vlaneseq
        %v6249 = vshrl.u32 %v6248, 7
        %v6250 = vsub.s32 %v6247, %v6249
        %v6251 = vrot.slane %v6241, %v6250
        %v6253 = vunpack.c.l.s4 1966171168
        %v6254 = vunpack.c.0.s8 %v6253
        %v6255 = vlaneseq
        %v6256 = vshrl.u32 %v6255, 7
        %v6257 = vsub.s32 %v6254, %v6256
        %v6258 = vrot.slane %v6242, %v6257
        %v6260 = vunpack.c.l.s4 1966171168
        %v6261 = vunpack.c.0.s8 %v6260
        %v6262 = vlaneseq
        %v6263 = vshrl.u32 %v6262, 7
        %v6264 = vsub.s32 %v6261, %v6263
        %v6265 = vrot.slane %v6243, %v6264
        %v6267 = vunpack.c.l.s4 1966171168
        %v6268 = vunpack.c.0.s8 %v6267
        %v6269 = vlaneseq
        %v6270 = vshrl.u32 %v6269, 7
        %v6271 = vsub.s32 %v6268, %v6270
        %v6272 = vrot.slane %v6244, %v6271
        %v6273 = vcombine.low %v6251, %v6258
        %v6274 = vcombine.low %v6265, %v6272
        %v6276 = vunpack.c.l.s4 1966171168
        %v6277 = vunpack.c.0.s8 %v6276
        %v6278 = vlaneseq
        %v6279 = vshrl.u32 %v6278, 7
        %v6280 = vsub.s32 %v6277, %v6279
        %v6281 = vrot.slane %v6273, %v6280
        %v6283 = vunpack.c.l.s4 1966171168
        %v6284 = vunpack.c.0.s8 %v6283
        %v6285 = vlaneseq
        %v6286 = vshrl.u32 %v6285, 7
        %v6287 = vsub.s32 %v6284, %v6286
        %v6288 = vrot.slane %v6274, %v6287
        %v6289 = vcombine.low %v6281, %v6288
        %v6290 = vcombine.low %v3344, %v3348
        %v6291 = vcombine.low %v3352, %v3356
        %v6292 = vcombine.low %v3360, %v3364
        %v6293 = vcombine.low %v3368, %v3372
        %v6295 = vunpack.c.l.s4 1966171168
        %v6296 = vunpack.c.0.s8 %v6295
        %v6297 = vlaneseq
        %v6298 = vshrl.u32 %v6297, 7
        %v6299 = vsub.s32 %v6296, %v6298
        %v6300 = vrot.slane %v6290, %v6299
        %v6302 = vunpack.c.l.s4 1966171168
        %v6303 = vunpack.c.0.s8 %v6302
        %v6304 = vlaneseq
        %v6305 = vshrl.u32 %v6304, 7
        %v6306 = vsub.s32 %v6303, %v6305
        %v6307 = vrot.slane %v6291, %v6306
        %v6309 = vunpack.c.l.s4 1966171168
        %v6310 = vunpack.c.0.s8 %v6309
        %v6311 = vlaneseq
        %v6312 = vshrl.u32 %v6311, 7
        %v6313 = vsub.s32 %v6310, %v6312
        %v6314 = vrot.slane %v6292, %v6313
        %v6316 = vunpack.c.l.s4 1966171168
        %v6317 = vunpack.c.0.s8 %v6316
        %v6318 = vlaneseq
        %v6319 = vshrl.u32 %v6318, 7
        %v6320 = vsub.s32 %v6317, %v6319
        %v6321 = vrot.slane %v6293, %v6320
        %v6322 = vcombine.low %v6300, %v6307
        %v6323 = vcombine.low %v6314, %v6321
        %v6325 = vunpack.c.l.s4 1966171168
        %v6326 = vunpack.c.0.s8 %v6325
        %v6327 = vlaneseq
        %v6328 = vshrl.u32 %v6327, 7
        %v6329 = vsub.s32 %v6326, %v6328
        %v6330 = vrot.slane %v6322, %v6329
        %v6332 = vunpack.c.l.s4 1966171168
        %v6333 = vunpack.c.0.s8 %v6332
        %v6334 = vlaneseq
        %v6335 = vshrl.u32 %v6334, 7
        %v6336 = vsub.s32 %v6333, %v6335
        %v6337 = vrot.slane %v6323, %v6336
        %v6338 = vcombine.low %v6330, %v6337
        %v6339 = vcombine.low %v3376, %v3380
        %v6340 = vcombine.low %v3384, %v3388
        %v6341 = vcombine.low %v3392, %v3396
        %v6342 = vcombine.low %v3400, %v3404
        %v6344 = vunpack.c.l.s4 1966171168
        %v6345 = vunpack.c.0.s8 %v6344
        %v6346 = vlaneseq
        %v6347 = vshrl.u32 %v6346, 7
        %v6348 = vsub.s32 %v6345, %v6347
        %v6349 = vrot.slane %v6339, %v6348
        %v6351 = vunpack.c.l.s4 1966171168
        %v6352 = vunpack.c.0.s8 %v6351
        %v6353 = vlaneseq
        %v6354 = vshrl.u32 %v6353, 7
        %v6355 = vsub.s32 %v6352, %v6354
        %v6356 = vrot.slane %v6340, %v6355
        %v6358 = vunpack.c.l.s4 1966171168
        %v6359 = vunpack.c.0.s8 %v6358
        %v6360 = vlaneseq
        %v6361 = vshrl.u32 %v6360, 7
        %v6362 = vsub.s32 %v6359, %v6361
        %v6363 = vrot.slane %v6341, %v6362
        %v6365 = vunpack.c.l.s4 1966171168
        %v6366 = vunpack.c.0.s8 %v6365
        %v6367 = vlaneseq
        %v6368 = vshrl.u32 %v6367, 7
        %v6369 = vsub.s32 %v6366, %v6368
        %v6370 = vrot.slane %v6342, %v6369
        %v6371 = vcombine.low %v6349, %v6356
        %v6372 = vcombine.low %v6363, %v6370
        %v6374 = vunpack.c.l.s4 1966171168
        %v6375 = vunpack.c.0.s8 %v6374
        %v6376 = vlaneseq
        %v6377 = vshrl.u32 %v6376, 7
        %v6378 = vsub.s32 %v6375, %v6377
        %v6379 = vrot.slane %v6371, %v6378
        %v6381 = vunpack.c.l.s4 1966171168
        %v6382 = vunpack.c.0.s8 %v6381
        %v6383 = vlaneseq
        %v6384 = vshrl.u32 %v6383, 7
        %v6385 = vsub.s32 %v6382, %v6384
        %v6386 = vrot.slane %v6372, %v6385
        %v6387 = vcombine.low %v6379, %v6386
        %v6388 = vcombine.low %v3408, %v3412
        %v6389 = vcombine.low %v3416, %v3420
        %v6390 = vcombine.low %v3424, %v3428
        %v6391 = vcombine.low %v3432, %v3436
        %v6393 = vunpack.c.l.s4 1966171168
        %v6394 = vunpack.c.0.s8 %v6393
        %v6395 = vlaneseq
        %v6396 = vshrl.u32 %v6395, 7
        %v6397 = vsub.s32 %v6394, %v6396
        %v6398 = vrot.slane %v6388, %v6397
        %v6400 = vunpack.c.l.s4 1966171168
        %v6401 = vunpack.c.0.s8 %v6400
        %v6402 = vlaneseq
        %v6403 = vshrl.u32 %v6402, 7
        %v6404 = vsub.s32 %v6401, %v6403
        %v6405 = vrot.slane %v6389, %v6404
        %v6407 = vunpack.c.l.s4 1966171168
        %v6408 = vunpack.c.0.s8 %v6407
        %v6409 = vlaneseq
        %v6410 = vshrl.u32 %v6409, 7
        %v6411 = vsub.s32 %v6408, %v6410
        %v6412 = vrot.slane %v6390, %v6411
        %v6414 = vunpack.c.l.s4 1966171168
        %v6415 = vunpack.c.0.s8 %v6414
        %v6416 = vlaneseq
        %v6417 = vshrl.u32 %v6416, 7
        %v6418 = vsub.s32 %v6415, %v6417
        %v6419 = vrot.slane %v6391, %v6418
        %v6420 = vcombine.low %v6398, %v6405
        %v6421 = vcombine.low %v6412, %v6419
        %v6423 = vunpack.c.l.s4 1966171168
        %v6424 = vunpack.c.0.s8 %v6423
        %v6425 = vlaneseq
        %v6426 = vshrl.u32 %v6425, 7
        %v6427 = vsub.s32 %v6424, %v6426
        %v6428 = vrot.slane %v6420, %v6427
        %v6430 = vunpack.c.l.s4 1966171168
        %v6431 = vunpack.c.0.s8 %v6430
        %v6432 = vlaneseq
        %v6433 = vshrl.u32 %v6432, 7
        %v6434 = vsub.s32 %v6431, %v6433
        %v6435 = vrot.slane %v6421, %v6434
        %v6436 = vcombine.low %v6428, %v6435
        %v6437 = vcombine.low %v3440, %v3444
        %v6438 = vcombine.low %v3448, %v3452
        %v6439 = vcombine.low %v3456, %v3460
        %v6440 = vcombine.low %v3464, %v3468
        %v6442 = vunpack.c.l.s4 1966171168
        %v6443 = vunpack.c.0.s8 %v6442
        %v6444 = vlaneseq
        %v6445 = vshrl.u32 %v6444, 7
        %v6446 = vsub.s32 %v6443, %v6445
        %v6447 = vrot.slane %v6437, %v6446
        %v6449 = vunpack.c.l.s4 1966171168
        %v6450 = vunpack.c.0.s8 %v6449
        %v6451 = vlaneseq
        %v6452 = vshrl.u32 %v6451, 7
        %v6453 = vsub.s32 %v6450, %v6452
        %v6454 = vrot.slane %v6438, %v6453
        %v6456 = vunpack.c.l.s4 1966171168
        %v6457 = vunpack.c.0.s8 %v6456
        %v6458 = vlaneseq
        %v6459 = vshrl.u32 %v6458, 7
        %v6460 = vsub.s32 %v6457, %v6459
        %v6461 = vrot.slane %v6439, %v6460
        %v6463 = vunpack.c.l.s4 1966171168
        %v6464 = vunpack.c.0.s8 %v6463
        %v6465 = vlaneseq
        %v6466 = vshrl.u32 %v6465, 7
        %v6467 = vsub.s32 %v6464, %v6466
        %v6468 = vrot.slane %v6440, %v6467
        %v6469 = vcombine.low %v6447, %v6454
        %v6470 = vcombine.low %v6461, %v6468
        %v6472 = vunpack.c.l.s4 1966171168
        %v6473 = vunpack.c.0.s8 %v6472
        %v6474 = vlaneseq
        %v6475 = vshrl.u32 %v6474, 7
        %v6476 = vsub.s32 %v6473, %v6475
        %v6477 = vrot.slane %v6469, %v6476
        %v6479 = vunpack.c.l.s4 1966171168
        %v6480 = vunpack.c.0.s8 %v6479
        %v6481 = vlaneseq
        %v6482 = vshrl.u32 %v6481, 7
        %v6483 = vsub.s32 %v6480, %v6482
        %v6484 = vrot.slane %v6470, %v6483
        %v6485 = vcombine.low %v6477, %v6484
        %v6486 = vcombine.low %v3472, %v3476
        %v6487 = vcombine.low %v3480, %v3484
        %v6488 = vcombine.low %v3488, %v3492
        %v6489 = vcombine.low %v3496, %v3500
        %v6491 = vunpack.c.l.s4 1966171168
        %v6492 = vunpack.c.0.s8 %v6491
        %v6493 = vlaneseq
        %v6494 = vshrl.u32 %v6493, 7
        %v6495 = vsub.s32 %v6492, %v6494
        %v6496 = vrot.slane %v6486, %v6495
        %v6498 = vunpack.c.l.s4 1966171168
        %v6499 = vunpack.c.0.s8 %v6498
        %v6500 = vlaneseq
        %v6501 = vshrl.u32 %v6500, 7
        %v6502 = vsub.s32 %v6499, %v6501
        %v6503 = vrot.slane %v6487, %v6502
        %v6505 = vunpack.c.l.s4 1966171168
        %v6506 = vunpack.c.0.s8 %v6505
        %v6507 = vlaneseq
        %v6508 = vshrl.u32 %v6507, 7
        %v6509 = vsub.s32 %v6506, %v6508
        %v6510 = vrot.slane %v6488, %v6509
        %v6512 = vunpack.c.l.s4 1966171168
        %v6513 = vunpack.c.0.s8 %v6512
        %v6514 = vlaneseq
        %v6515 = vshrl.u32 %v6514, 7
        %v6516 = vsub.s32 %v6513, %v6515
        %v6517 = vrot.slane %v6489, %v6516
        %v6518 = vcombine.low %v6496, %v6503
        %v6519 = vcombine.low %v6510, %v6517
        %v6521 = vunpack.c.l.s4 1966171168
        %v6522 = vunpack.c.0.s8 %v6521
        %v6523 = vlaneseq
        %v6524 = vshrl.u32 %v6523, 7
        %v6525 = vsub.s32 %v6522, %v6524
        %v6526 = vrot.slane %v6518, %v6525
        %v6528 = vunpack.c.l.s4 1966171168
        %v6529 = vunpack.c.0.s8 %v6528
        %v6530 = vlaneseq
        %v6531 = vshrl.u32 %v6530, 7
        %v6532 = vsub.s32 %v6529, %v6531
        %v6533 = vrot.slane %v6519, %v6532
        %v6534 = vcombine.low %v6526, %v6533
        %v6535 = vcombine.low %v3504, %v3508
        %v6536 = vcombine.low %v3512, %v3516
        %v6537 = vcombine.low %v3520, %v3524
        %v6538 = vcombine.low %v3528, %v3532
        %v6540 = vunpack.c.l.s4 1966171168
        %v6541 = vunpack.c.0.s8 %v6540
        %v6542 = vlaneseq
        %v6543 = vshrl.u32 %v6542, 7
        %v6544 = vsub.s32 %v6541, %v6543
        %v6545 = vrot.slane %v6535, %v6544
        %v6547 = vunpack.c.l.s4 1966171168
        %v6548 = vunpack.c.0.s8 %v6547
        %v6549 = vlaneseq
        %v6550 = vshrl.u32 %v6549, 7
        %v6551 = vsub.s32 %v6548, %v6550
        %v6552 = vrot.slane %v6536, %v6551
        %v6554 = vunpack.c.l.s4 1966171168
        %v6555 = vunpack.c.0.s8 %v6554
        %v6556 = vlaneseq
        %v6557 = vshrl.u32 %v6556, 7
        %v6558 = vsub.s32 %v6555, %v6557
        %v6559 = vrot.slane %v6537, %v6558
        %v6561 = vunpack.c.l.s4 1966171168
        %v6562 = vunpack.c.0.s8 %v6561
        %v6563 = vlaneseq
        %v6564 = vshrl.u32 %v6563, 7
        %v6565 = vsub.s32 %v6562, %v6564
        %v6566 = vrot.slane %v6538, %v6565
        %v6567 = vcombine.low %v6545, %v6552
        %v6568 = vcombine.low %v6559, %v6566
        %v6570 = vunpack.c.l.s4 1966171168
        %v6571 = vunpack.c.0.s8 %v6570
        %v6572 = vlaneseq
        %v6573 = vshrl.u32 %v6572, 7
        %v6574 = vsub.s32 %v6571, %v6573
        %v6575 = vrot.slane %v6567, %v6574
        %v6577 = vunpack.c.l.s4 1966171168
        %v6578 = vunpack.c.0.s8 %v6577
        %v6579 = vlaneseq
        %v6580 = vshrl.u32 %v6579, 7
        %v6581 = vsub.s32 %v6578, %v6580
        %v6582 = vrot.slane %v6568, %v6581
        %v6583 = vcombine.low %v6575, %v6582
        %v6584 = vcombine.low %v3536, %v3540
        %v6585 = vcombine.low %v3544, %v3548
        %v6586 = vcombine.low %v3552, %v3556
        %v6587 = vcombine.low %v3560, %v3564
        %v6589 = vunpack.c.l.s4 1966171168
        %v6590 = vunpack.c.0.s8 %v6589
        %v6591 = vlaneseq
        %v6592 = vshrl.u32 %v6591, 7
        %v6593 = vsub.s32 %v6590, %v6592
        %v6594 = vrot.slane %v6584, %v6593
        %v6596 = vunpack.c.l.s4 1966171168
        %v6597 = vunpack.c.0.s8 %v6596
        %v6598 = vlaneseq
        %v6599 = vshrl.u32 %v6598, 7
        %v6600 = vsub.s32 %v6597, %v6599
        %v6601 = vrot.slane %v6585, %v6600
        %v6603 = vunpack.c.l.s4 1966171168
        %v6604 = vunpack.c.0.s8 %v6603
        %v6605 = vlaneseq
        %v6606 = vshrl.u32 %v6605, 7
        %v6607 = vsub.s32 %v6604, %v6606
        %v6608 = vrot.slane %v6586, %v6607
        %v6610 = vunpack.c.l.s4 1966171168
        %v6611 = vunpack.c.0.s8 %v6610
        %v6612 = vlaneseq
        %v6613 = vshrl.u32 %v6612, 7
        %v6614 = vsub.s32 %v6611, %v6613
        %v6615 = vrot.slane %v6587, %v6614
        %v6616 = vcombine.low %v6594, %v6601
        %v6617 = vcombine.low %v6608, %v6615
        %v6619 = vunpack.c.l.s4 1966171168
        %v6620 = vunpack.c.0.s8 %v6619
        %v6621 = vlaneseq
        %v6622 = vshrl.u32 %v6621, 7
        %v6623 = vsub.s32 %v6620, %v6622
        %v6624 = vrot.slane %v6616, %v6623
        %v6626 = vunpack.c.l.s4 1966171168
        %v6627 = vunpack.c.0.s8 %v6626
        %v6628 = vlaneseq
        %v6629 = vshrl.u32 %v6628, 7
        %v6630 = vsub.s32 %v6627, %v6629
        %v6631 = vrot.slane %v6617, %v6630
        %v6632 = vcombine.low %v6624, %v6631
        %v6633 = vcombine.low %v3568, %v3572
        %v6634 = vcombine.low %v3576, %v3580
        %v6635 = vcombine.low %v3584, %v3588
        %v6636 = vcombine.low %v3592, %v3596
        %v6638 = vunpack.c.l.s4 1966171168
        %v6639 = vunpack.c.0.s8 %v6638
        %v6640 = vlaneseq
        %v6641 = vshrl.u32 %v6640, 7
        %v6642 = vsub.s32 %v6639, %v6641
        %v6643 = vrot.slane %v6633, %v6642
        %v6645 = vunpack.c.l.s4 1966171168
        %v6646 = vunpack.c.0.s8 %v6645
        %v6647 = vlaneseq
        %v6648 = vshrl.u32 %v6647, 7
        %v6649 = vsub.s32 %v6646, %v6648
        %v6650 = vrot.slane %v6634, %v6649
        %v6652 = vunpack.c.l.s4 1966171168
        %v6653 = vunpack.c.0.s8 %v6652
        %v6654 = vlaneseq
        %v6655 = vshrl.u32 %v6654, 7
        %v6656 = vsub.s32 %v6653, %v6655
        %v6657 = vrot.slane %v6635, %v6656
        %v6659 = vunpack.c.l.s4 1966171168
        %v6660 = vunpack.c.0.s8 %v6659
        %v6661 = vlaneseq
        %v6662 = vshrl.u32 %v6661, 7
        %v6663 = vsub.s32 %v6660, %v6662
        %v6664 = vrot.slane %v6636, %v6663
        %v6665 = vcombine.low %v6643, %v6650
        %v6666 = vcombine.low %v6657, %v6664
        %v6668 = vunpack.c.l.s4 1966171168
        %v6669 = vunpack.c.0.s8 %v6668
        %v6670 = vlaneseq
        %v6671 = vshrl.u32 %v6670, 7
        %v6672 = vsub.s32 %v6669, %v6671
        %v6673 = vrot.slane %v6665, %v6672
        %v6675 = vunpack.c.l.s4 1966171168
        %v6676 = vunpack.c.0.s8 %v6675
        %v6677 = vlaneseq
        %v6678 = vshrl.u32 %v6677, 7
        %v6679 = vsub.s32 %v6676, %v6678
        %v6680 = vrot.slane %v6666, %v6679
        %v6681 = vcombine.low %v6673, %v6680
        %v6682 = vcombine.low %v3600, %v3604
        %v6683 = vcombine.low %v3608, %v3612
        %v6684 = vcombine.low %v3616, %v3620
        %v6685 = vcombine.low %v3624, %v3628
        %v6687 = vunpack.c.l.s4 1966171168
        %v6688 = vunpack.c.0.s8 %v6687
        %v6689 = vlaneseq
        %v6690 = vshrl.u32 %v6689, 7
        %v6691 = vsub.s32 %v6688, %v6690
        %v6692 = vrot.slane %v6682, %v6691
        %v6694 = vunpack.c.l.s4 1966171168
        %v6695 = vunpack.c.0.s8 %v6694
        %v6696 = vlaneseq
        %v6697 = vshrl.u32 %v6696, 7
        %v6698 = vsub.s32 %v6695, %v6697
        %v6699 = vrot.slane %v6683, %v6698
        %v6701 = vunpack.c.l.s4 1966171168
        %v6702 = vunpack.c.0.s8 %v6701
        %v6703 = vlaneseq
        %v6704 = vshrl.u32 %v6703, 7
        %v6705 = vsub.s32 %v6702, %v6704
        %v6706 = vrot.slane %v6684, %v6705
        %v6708 = vunpack.c.l.s4 1966171168
        %v6709 = vunpack.c.0.s8 %v6708
        %v6710 = vlaneseq
        %v6711 = vshrl.u32 %v6710, 7
        %v6712 = vsub.s32 %v6709, %v6711
        %v6713 = vrot.slane %v6685, %v6712
        %v6714 = vcombine.low %v6692, %v6699
        %v6715 = vcombine.low %v6706, %v6713
        %v6717 = vunpack.c.l.s4 1966171168
        %v6718 = vunpack.c.0.s8 %v6717
        %v6719 = vlaneseq
        %v6720 = vshrl.u32 %v6719, 7
        %v6721 = vsub.s32 %v6718, %v6720
        %v6722 = vrot.slane %v6714, %v6721
        %v6724 = vunpack.c.l.s4 1966171168
        %v6725 = vunpack.c.0.s8 %v6724
        %v6726 = vlaneseq
        %v6727 = vshrl.u32 %v6726, 7
        %v6728 = vsub.s32 %v6725, %v6727
        %v6729 = vrot.slane %v6715, %v6728
        %v6730 = vcombine.low %v6722, %v6729
        %v6731 = vcombine.low %v3632, %v3636
        %v6732 = vcombine.low %v3640, %v3644
        %v6733 = vcombine.low %v3648, %v3652
        %v6734 = vcombine.low %v3656, %v3660
        %v6736 = vunpack.c.l.s4 1966171168
        %v6737 = vunpack.c.0.s8 %v6736
        %v6738 = vlaneseq
        %v6739 = vshrl.u32 %v6738, 7
        %v6740 = vsub.s32 %v6737, %v6739
        %v6741 = vrot.slane %v6731, %v6740
        %v6743 = vunpack.c.l.s4 1966171168
        %v6744 = vunpack.c.0.s8 %v6743
        %v6745 = vlaneseq
        %v6746 = vshrl.u32 %v6745, 7
        %v6747 = vsub.s32 %v6744, %v6746
        %v6748 = vrot.slane %v6732, %v6747
        %v6750 = vunpack.c.l.s4 1966171168
        %v6751 = vunpack.c.0.s8 %v6750
        %v6752 = vlaneseq
        %v6753 = vshrl.u32 %v6752, 7
        %v6754 = vsub.s32 %v6751, %v6753
        %v6755 = vrot.slane %v6733, %v6754
        %v6757 = vunpack.c.l.s4 1966171168
        %v6758 = vunpack.c.0.s8 %v6757
        %v6759 = vlaneseq
        %v6760 = vshrl.u32 %v6759, 7
        %v6761 = vsub.s32 %v6758, %v6760
        %v6762 = vrot.slane %v6734, %v6761
        %v6763 = vcombine.low %v6741, %v6748
        %v6764 = vcombine.low %v6755, %v6762
        %v6766 = vunpack.c.l.s4 1966171168
        %v6767 = vunpack.c.0.s8 %v6766
        %v6768 = vlaneseq
        %v6769 = vshrl.u32 %v6768, 7
        %v6770 = vsub.s32 %v6767, %v6769
        %v6771 = vrot.slane %v6763, %v6770
        %v6773 = vunpack.c.l.s4 1966171168
        %v6774 = vunpack.c.0.s8 %v6773
        %v6775 = vlaneseq
        %v6776 = vshrl.u32 %v6775, 7
        %v6777 = vsub.s32 %v6774, %v6776
        %v6778 = vrot.slane %v6764, %v6777
        %v6779 = vcombine.low %v6771, %v6778
        %v6780 = vcombine.low %v3664, %v3668
        %v6781 = vcombine.low %v3672, %v3676
        %v6782 = vcombine.low %v3680, %v3684
        %v6783 = vcombine.low %v3688, %v3692
        %v6785 = vunpack.c.l.s4 1966171168
        %v6786 = vunpack.c.0.s8 %v6785
        %v6787 = vlaneseq
        %v6788 = vshrl.u32 %v6787, 7
        %v6789 = vsub.s32 %v6786, %v6788
        %v6790 = vrot.slane %v6780, %v6789
        %v6792 = vunpack.c.l.s4 1966171168
        %v6793 = vunpack.c.0.s8 %v6792
        %v6794 = vlaneseq
        %v6795 = vshrl.u32 %v6794, 7
        %v6796 = vsub.s32 %v6793, %v6795
        %v6797 = vrot.slane %v6781, %v6796
        %v6799 = vunpack.c.l.s4 1966171168
        %v6800 = vunpack.c.0.s8 %v6799
        %v6801 = vlaneseq
        %v6802 = vshrl.u32 %v6801, 7
        %v6803 = vsub.s32 %v6800, %v6802
        %v6804 = vrot.slane %v6782, %v6803
        %v6806 = vunpack.c.l.s4 1966171168
        %v6807 = vunpack.c.0.s8 %v6806
        %v6808 = vlaneseq
        %v6809 = vshrl.u32 %v6808, 7
        %v6810 = vsub.s32 %v6807, %v6809
        %v6811 = vrot.slane %v6783, %v6810
        %v6812 = vcombine.low %v6790, %v6797
        %v6813 = vcombine.low %v6804, %v6811
        %v6815 = vunpack.c.l.s4 1966171168
        %v6816 = vunpack.c.0.s8 %v6815
        %v6817 = vlaneseq
        %v6818 = vshrl.u32 %v6817, 7
        %v6819 = vsub.s32 %v6816, %v6818
        %v6820 = vrot.slane %v6812, %v6819
        %v6822 = vunpack.c.l.s4 1966171168
        %v6823 = vunpack.c.0.s8 %v6822
        %v6824 = vlaneseq
        %v6825 = vshrl.u32 %v6824, 7
        %v6826 = vsub.s32 %v6823, %v6825
        %v6827 = vrot.slane %v6813, %v6826
        %v6828 = vcombine.low %v6820, %v6827
        %6829 = vset.pattern.permute.xlu0 0
        %6830 = vperm.xlu0 %6829, %v3741
        %v6831 = vpop.permute.xlu0 %6830
        %6832 = vset.pattern.permute.xlu0 0
        %6833 = vperm.xlu0 %6832, %v3790
        %v6834 = vpop.permute.xlu0 %6833
        %6835 = vset.pattern.permute.xlu0 0
        %6836 = vperm.xlu0 %6835, %v3839
        %v6837 = vpop.permute.xlu0 %6836
        %6838 = vset.pattern.permute.xlu0 0
        %6839 = vperm.xlu0 %6838, %v3888
        %v6840 = vpop.permute.xlu0 %6839
        %6841 = vset.pattern.permute.xlu0 0
        %6842 = vperm.xlu0 %6841, %v3937
        %v6843 = vpop.permute.xlu0 %6842
        %6844 = vset.pattern.permute.xlu0 0
        %6845 = vperm.xlu0 %6844, %v3986
        %v6846 = vpop.permute.xlu0 %6845
        %6847 = vset.pattern.permute.xlu0 0
        %6848 = vperm.xlu0 %6847, %v4035
        %v6849 = vpop.permute.xlu0 %6848
        %6850 = vset.pattern.permute.xlu0 0
        %6851 = vperm.xlu0 %6850, %v4084
        %v6852 = vpop.permute.xlu0 %6851
        %6853 = vset.pattern.permute.xlu0 0
        %6854 = vperm.xlu0 %6853, %v4133
        %v6855 = vpop.permute.xlu0 %6854
        %6856 = vset.pattern.permute.xlu0 0
        %6857 = vperm.xlu0 %6856, %v4182
        %v6858 = vpop.permute.xlu0 %6857
        %6859 = vset.pattern.permute.xlu0 0
        %6860 = vperm.xlu0 %6859, %v4231
        %v6861 = vpop.permute.xlu0 %6860
        %6862 = vset.pattern.permute.xlu0 0
        %6863 = vperm.xlu0 %6862, %v4280
        %v6864 = vpop.permute.xlu0 %6863
        %6865 = vset.pattern.permute.xlu0 0
        %6866 = vperm.xlu0 %6865, %v4329
        %v6867 = vpop.permute.xlu0 %6866
        %6868 = vset.pattern.permute.xlu0 0
        %6869 = vperm.xlu0 %6868, %v4378
        %v6870 = vpop.permute.xlu0 %6869
        %6871 = vset.pattern.permute.xlu0 0
        %6872 = vperm.xlu0 %6871, %v4427
        %v6873 = vpop.permute.xlu0 %6872
        %6874 = vset.pattern.permute.xlu0 0
        %6875 = vperm.xlu0 %6874, %v4476
        %v6876 = vpop.permute.xlu0 %6875
        %6877 = vset.pattern.permute.xlu0 0
        %6878 = vperm.xlu0 %6877, %v4525
        %v6879 = vpop.permute.xlu0 %6878
        %6880 = vset.pattern.permute.xlu0 0
        %6881 = vperm.xlu0 %6880, %v4574
        %v6882 = vpop.permute.xlu0 %6881
        %6883 = vset.pattern.permute.xlu0 0
        %6884 = vperm.xlu0 %6883, %v4623
        %v6885 = vpop.permute.xlu0 %6884
        %6886 = vset.pattern.permute.xlu0 0
        %6887 = vperm.xlu0 %6886, %v4672
        %v6888 = vpop.permute.xlu0 %6887
        %6889 = vset.pattern.permute.xlu0 0
        %6890 = vperm.xlu0 %6889, %v4721
        %v6891 = vpop.permute.xlu0 %6890
        %6892 = vset.pattern.permute.xlu0 0
        %6893 = vperm.xlu0 %6892, %v4770
        %v6894 = vpop.permute.xlu0 %6893
        %6895 = vset.pattern.permute.xlu0 0
        %6896 = vperm.xlu0 %6895, %v4819
        %v6897 = vpop.permute.xlu0 %6896
        %6898 = vset.pattern.permute.xlu0 0
        %6899 = vperm.xlu0 %6898, %v4868
        %v6900 = vpop.permute.xlu0 %6899
        %6901 = vset.pattern.permute.xlu0 0
        %6902 = vperm.xlu0 %6901, %v4917
        %v6903 = vpop.permute.xlu0 %6902
        %6904 = vset.pattern.permute.xlu0 0
        %6905 = vperm.xlu0 %6904, %v4966
        %v6906 = vpop.permute.xlu0 %6905
        %6907 = vset.pattern.permute.xlu0 0
        %6908 = vperm.xlu0 %6907, %v5015
        %v6909 = vpop.permute.xlu0 %6908
        %6910 = vset.pattern.permute.xlu0 0
        %6911 = vperm.xlu0 %6910, %v5064
        %v6912 = vpop.permute.xlu0 %6911
        %6913 = vset.pattern.permute.xlu0 0
        %6914 = vperm.xlu0 %6913, %v5113
        %v6915 = vpop.permute.xlu0 %6914
        %6916 = vset.pattern.permute.xlu0 0
        %6917 = vperm.xlu0 %6916, %v5162
        %v6918 = vpop.permute.xlu0 %6917
        %6919 = vset.pattern.permute.xlu0 0
        %6920 = vperm.xlu0 %6919, %v5211
        %v6921 = vpop.permute.xlu0 %6920
        %6922 = vset.pattern.permute.xlu0 0
        %6923 = vperm.xlu0 %6922, %v5260
        %v6924 = vpop.permute.xlu0 %6923
        %6925 = vset.pattern.permute.xlu0 0
        %6926 = vperm.xlu0 %6925, %v5309
        %v6927 = vpop.permute.xlu0 %6926
        %6928 = vset.pattern.permute.xlu0 0
        %6929 = vperm.xlu0 %6928, %v5358
        %v6930 = vpop.permute.xlu0 %6929
        %6931 = vset.pattern.permute.xlu0 0
        %6932 = vperm.xlu0 %6931, %v5407
        %v6933 = vpop.permute.xlu0 %6932
        %6934 = vset.pattern.permute.xlu0 0
        %6935 = vperm.xlu0 %6934, %v5456
        %v6936 = vpop.permute.xlu0 %6935
        %6937 = vset.pattern.permute.xlu0 0
        %6938 = vperm.xlu0 %6937, %v5505
        %v6939 = vpop.permute.xlu0 %6938
        %6940 = vset.pattern.permute.xlu0 0
        %6941 = vperm.xlu0 %6940, %v5554
        %v6942 = vpop.permute.xlu0 %6941
        %6943 = vset.pattern.permute.xlu0 0
        %6944 = vperm.xlu0 %6943, %v5603
        %v6945 = vpop.permute.xlu0 %6944
        %6946 = vset.pattern.permute.xlu0 0
        %6947 = vperm.xlu0 %6946, %v5652
        %v6948 = vpop.permute.xlu0 %6947
        %6949 = vset.pattern.permute.xlu0 0
        %6950 = vperm.xlu0 %6949, %v5701
        %v6951 = vpop.permute.xlu0 %6950
        %6952 = vset.pattern.permute.xlu0 0
        %6953 = vperm.xlu0 %6952, %v5750
        %v6954 = vpop.permute.xlu0 %6953
        %6955 = vset.pattern.permute.xlu0 0
        %6956 = vperm.xlu0 %6955, %v5799
        %v6957 = vpop.permute.xlu0 %6956
        %6958 = vset.pattern.permute.xlu0 0
        %6959 = vperm.xlu0 %6958, %v5848
        %v6960 = vpop.permute.xlu0 %6959
        %6961 = vset.pattern.permute.xlu0 0
        %6962 = vperm.xlu0 %6961, %v5897
        %v6963 = vpop.permute.xlu0 %6962
        %6964 = vset.pattern.permute.xlu0 0
        %6965 = vperm.xlu0 %6964, %v5946
        %v6966 = vpop.permute.xlu0 %6965
        %6967 = vset.pattern.permute.xlu0 0
        %6968 = vperm.xlu0 %6967, %v5995
        %v6969 = vpop.permute.xlu0 %6968
        %6970 = vset.pattern.permute.xlu0 0
        %6971 = vperm.xlu0 %6970, %v6044
        %v6972 = vpop.permute.xlu0 %6971
        %6973 = vset.pattern.permute.xlu0 0
        %6974 = vperm.xlu0 %6973, %v6093
        %v6975 = vpop.permute.xlu0 %6974
        %6976 = vset.pattern.permute.xlu0 0
        %6977 = vperm.xlu0 %6976, %v6142
        %v6978 = vpop.permute.xlu0 %6977
        %6979 = vset.pattern.permute.xlu0 0
        %6980 = vperm.xlu0 %6979, %v6191
        %v6981 = vpop.permute.xlu0 %6980
        %6982 = vset.pattern.permute.xlu0 0
        %6983 = vperm.xlu0 %6982, %v6240
        %v6984 = vpop.permute.xlu0 %6983
        %6985 = vset.pattern.permute.xlu0 0
        %6986 = vperm.xlu0 %6985, %v6289
        %v6987 = vpop.permute.xlu0 %6986
        %6988 = vset.pattern.permute.xlu0 0
        %6989 = vperm.xlu0 %6988, %v6338
        %v6990 = vpop.permute.xlu0 %6989
        %6991 = vset.pattern.permute.xlu0 0
        %6992 = vperm.xlu0 %6991, %v6387
        %v6993 = vpop.permute.xlu0 %6992
        %6994 = vset.pattern.permute.xlu0 0
        %6995 = vperm.xlu0 %6994, %v6436
        %v6996 = vpop.permute.xlu0 %6995
        %6997 = vset.pattern.permute.xlu0 0
        %6998 = vperm.xlu0 %6997, %v6485
        %v6999 = vpop.permute.xlu0 %6998
        %7000 = vset.pattern.permute.xlu0 0
        %7001 = vperm.xlu0 %7000, %v6534
        %v7002 = vpop.permute.xlu0 %7001
        %7003 = vset.pattern.permute.xlu0 0
        %7004 = vperm.xlu0 %7003, %v6583
        %v7005 = vpop.permute.xlu0 %7004
        %7006 = vset.pattern.permute.xlu0 0
        %7007 = vperm.xlu0 %7006, %v6632
        %v7008 = vpop.permute.xlu0 %7007
        %7009 = vset.pattern.permute.xlu0 0
        %7010 = vperm.xlu0 %7009, %v6681
        %v7011 = vpop.permute.xlu0 %7010
        %7012 = vset.pattern.permute.xlu0 0
        %7013 = vperm.xlu0 %7012, %v6730
        %v7014 = vpop.permute.xlu0 %7013
        %7015 = vset.pattern.permute.xlu0 0
        %7016 = vperm.xlu0 %7015, %v6779
        %v7017 = vpop.permute.xlu0 %7016
        %7018 = vset.pattern.permute.xlu0 0
        %7019 = vperm.xlu0 %7018, %v6828
        %v7020 = vpop.permute.xlu0 %7019
        %v7021 = vlaneseq
        %v7022 = vand.u32 %v7021, 127
        %v7023 = vlaneseq
        %v7024 = vshrl.u32 %v7023, 7
        %v7025 = vsub.s32 %v7022, %v7024
        %v7026 = vrot.slane %v6831, %v7025
        %v7027 = vadd.s32 %v7022, 4294967288
        %v7028 = vlaneseq
        %v7029 = vshrl.u32 %v7028, 7
        %v7030 = vsub.s32 %v7027, %v7029
        %v7031 = vrot.slane %v6834, %v7030
        %vm7032 = vcmask 130112
        %v7033 = vsel %vm7032, %v7031, %v7026
        %v7034 = vadd.s32 %v7022, 4294967280
        %v7035 = vlaneseq
        %v7036 = vshrl.u32 %v7035, 7
        %v7037 = vsub.s32 %v7034, %v7036
        %v7038 = vrot.slane %v6837, %v7037
        %vm7039 = vcmask 195712
        %v7040 = vsel %vm7039, %v7038, %v7033
        %v7041 = vadd.s32 %v7022, 4294967272
        %v7042 = vlaneseq
        %v7043 = vshrl.u32 %v7042, 7
        %v7044 = vsub.s32 %v7041, %v7043
        %v7045 = vrot.slane %v6840, %v7044
        %vm7046 = vcmask 261312
        %v7047 = vsel %vm7046, %v7045, %v7040
        %v7048 = vadd.s32 %v7022, 4294967264
        %v7049 = vlaneseq
        %v7050 = vshrl.u32 %v7049, 7
        %v7051 = vsub.s32 %v7048, %v7050
        %v7052 = vrot.slane %v6843, %v7051
        %vm7053 = vcmask 326912
        %v7054 = vsel %vm7053, %v7052, %v7047
        %v7055 = vadd.s32 %v7022, 4294967256
        %v7056 = vlaneseq
        %v7057 = vshrl.u32 %v7056, 7
        %v7058 = vsub.s32 %v7055, %v7057
        %v7059 = vrot.slane %v6846, %v7058
        %vm7060 = vcmask 392512
        %v7061 = vsel %vm7060, %v7059, %v7054
        %v7062 = vadd.s32 %v7022, 4294967248
        %v7063 = vlaneseq
        %v7064 = vshrl.u32 %v7063, 7
        %v7065 = vsub.s32 %v7062, %v7064
        %v7066 = vrot.slane %v6849, %v7065
        %vm7067 = vcmask 458112
        %v7068 = vsel %vm7067, %v7066, %v7061
        %v7069 = vadd.s32 %v7022, 4294967240
        %v7070 = vlaneseq
        %v7071 = vshrl.u32 %v7070, 7
        %v7072 = vsub.s32 %v7069, %v7071
        %v7073 = vrot.slane %v6852, %v7072
        %vm7074 = vcmask 523712
        %v7075 = vsel %vm7074, %v7073, %v7068
        %v7076 = vadd.s32 %v7022, 4294967232
        %v7077 = vlaneseq
        %v7078 = vshrl.u32 %v7077, 7
        %v7079 = vsub.s32 %v7076, %v7078
        %v7080 = vrot.slane %v6855, %v7079
        %vm7081 = vcmask 589312
        %v7082 = vsel %vm7081, %v7080, %v7075
        %v7083 = vadd.s32 %v7022, 4294967224
        %v7084 = vlaneseq
        %v7085 = vshrl.u32 %v7084, 7
        %v7086 = vsub.s32 %v7083, %v7085
        %v7087 = vrot.slane %v6858, %v7086
        %vm7088 = vcmask 654912
        %v7089 = vsel %vm7088, %v7087, %v7082
        %v7090 = vadd.s32 %v7022, 4294967216
        %v7091 = vlaneseq
        %v7092 = vshrl.u32 %v7091, 7
        %v7093 = vsub.s32 %v7090, %v7092
        %v7094 = vrot.slane %v6861, %v7093
        %vm7095 = vcmask 720512
        %v7096 = vsel %vm7095, %v7094, %v7089
        %v7097 = vadd.s32 %v7022, 4294967208
        %v7098 = vlaneseq
        %v7099 = vshrl.u32 %v7098, 7
        %v7100 = vsub.s32 %v7097, %v7099
        %v7101 = vrot.slane %v6864, %v7100
        %vm7102 = vcmask 786112
        %v7103 = vsel %vm7102, %v7101, %v7096
        %v7104 = vadd.s32 %v7022, 4294967200
        %v7105 = vlaneseq
        %v7106 = vshrl.u32 %v7105, 7
        %v7107 = vsub.s32 %v7104, %v7106
        %v7108 = vrot.slane %v6867, %v7107
        %vm7109 = vcmask 851712
        %v7110 = vsel %vm7109, %v7108, %v7103
        %v7111 = vadd.s32 %v7022, 4294967192
        %v7112 = vlaneseq
        %v7113 = vshrl.u32 %v7112, 7
        %v7114 = vsub.s32 %v7111, %v7113
        %v7115 = vrot.slane %v6870, %v7114
        %vm7116 = vcmask 917312
        %v7117 = vsel %vm7116, %v7115, %v7110
        %v7118 = vadd.s32 %v7022, 4294967184
        %v7119 = vlaneseq
        %v7120 = vshrl.u32 %v7119, 7
        %v7121 = vsub.s32 %v7118, %v7120
        %v7122 = vrot.slane %v6873, %v7121
        %vm7123 = vcmask 982912
        %v7124 = vsel %vm7123, %v7122, %v7117
        %v7125 = vadd.s32 %v7022, 4294967176
        %v7126 = vlaneseq
        %v7127 = vshrl.u32 %v7126, 7
        %v7128 = vsub.s32 %v7125, %v7127
        %v7129 = vrot.slane %v6876, %v7128
        %vm7130 = vcmask 1048512
        %v7131 = vsel %vm7130, %v7129, %v7124
        %v7132 = vlaneseq
        %v7133 = vshrl.u32 %v7132, 7
        %v7134 = vsub.s32 %v7022, %v7133
        %v7135 = vrot.slane %v6879, %v7134
        %v7136 = vlaneseq
        %v7137 = vshrl.u32 %v7136, 7
        %v7138 = vsub.s32 %v7027, %v7137
        %v7139 = vrot.slane %v6882, %v7138
        %v7140 = vsel %vm7032, %v7139, %v7135
        %v7141 = vlaneseq
        %v7142 = vshrl.u32 %v7141, 7
        %v7143 = vsub.s32 %v7034, %v7142
        %v7144 = vrot.slane %v6885, %v7143
        %v7145 = vsel %vm7039, %v7144, %v7140
        %v7146 = vlaneseq
        %v7147 = vshrl.u32 %v7146, 7
        %v7148 = vsub.s32 %v7041, %v7147
        %v7149 = vrot.slane %v6888, %v7148
        %v7150 = vsel %vm7046, %v7149, %v7145
        %v7151 = vlaneseq
        %v7152 = vshrl.u32 %v7151, 7
        %v7153 = vsub.s32 %v7048, %v7152
        %v7154 = vrot.slane %v6891, %v7153
        %v7155 = vsel %vm7053, %v7154, %v7150
        %v7156 = vlaneseq
        %v7157 = vshrl.u32 %v7156, 7
        %v7158 = vsub.s32 %v7055, %v7157
        %v7159 = vrot.slane %v6894, %v7158
        %v7160 = vsel %vm7060, %v7159, %v7155
        %v7161 = vlaneseq
        %v7162 = vshrl.u32 %v7161, 7
        %v7163 = vsub.s32 %v7062, %v7162
        %v7164 = vrot.slane %v6897, %v7163
        %v7165 = vsel %vm7067, %v7164, %v7160
        %v7166 = vlaneseq
        %v7167 = vshrl.u32 %v7166, 7
        %v7168 = vsub.s32 %v7069, %v7167
        %v7169 = vrot.slane %v6900, %v7168
        %v7170 = vsel %vm7074, %v7169, %v7165
        %v7171 = vlaneseq
        %v7172 = vshrl.u32 %v7171, 7
        %v7173 = vsub.s32 %v7076, %v7172
        %v7174 = vrot.slane %v6903, %v7173
        %v7175 = vsel %vm7081, %v7174, %v7170
        %v7176 = vlaneseq
        %v7177 = vshrl.u32 %v7176, 7
        %v7178 = vsub.s32 %v7083, %v7177
        %v7179 = vrot.slane %v6906, %v7178
        %v7180 = vsel %vm7088, %v7179, %v7175
        %v7181 = vlaneseq
        %v7182 = vshrl.u32 %v7181, 7
        %v7183 = vsub.s32 %v7090, %v7182
        %v7184 = vrot.slane %v6909, %v7183
        %v7185 = vsel %vm7095, %v7184, %v7180
        %v7186 = vlaneseq
        %v7187 = vshrl.u32 %v7186, 7
        %v7188 = vsub.s32 %v7097, %v7187
        %v7189 = vrot.slane %v6912, %v7188
        %v7190 = vsel %vm7102, %v7189, %v7185
        %v7191 = vlaneseq
        %v7192 = vshrl.u32 %v7191, 7
        %v7193 = vsub.s32 %v7104, %v7192
        %v7194 = vrot.slane %v6915, %v7193
        %v7195 = vsel %vm7109, %v7194, %v7190
        %v7196 = vlaneseq
        %v7197 = vshrl.u32 %v7196, 7
        %v7198 = vsub.s32 %v7111, %v7197
        %v7199 = vrot.slane %v6918, %v7198
        %v7200 = vsel %vm7116, %v7199, %v7195
        %v7201 = vlaneseq
        %v7202 = vshrl.u32 %v7201, 7
        %v7203 = vsub.s32 %v7118, %v7202
        %v7204 = vrot.slane %v6921, %v7203
        %v7205 = vsel %vm7123, %v7204, %v7200
        %v7206 = vlaneseq
        %v7207 = vshrl.u32 %v7206, 7
        %v7208 = vsub.s32 %v7125, %v7207
        %v7209 = vrot.slane %v6924, %v7208
        %v7210 = vsel %vm7130, %v7209, %v7205
        %v7211 = vlaneseq
        %v7212 = vshrl.u32 %v7211, 7
        %v7213 = vsub.s32 %v7022, %v7212
        %v7214 = vrot.slane %v6927, %v7213
        %v7215 = vlaneseq
        %v7216 = vshrl.u32 %v7215, 7
        %v7217 = vsub.s32 %v7027, %v7216
        %v7218 = vrot.slane %v6930, %v7217
        %v7219 = vsel %vm7032, %v7218, %v7214
        %v7220 = vlaneseq
        %v7221 = vshrl.u32 %v7220, 7
        %v7222 = vsub.s32 %v7034, %v7221
        %v7223 = vrot.slane %v6933, %v7222
        %v7224 = vsel %vm7039, %v7223, %v7219
        %v7225 = vlaneseq
        %v7226 = vshrl.u32 %v7225, 7
        %v7227 = vsub.s32 %v7041, %v7226
        %v7228 = vrot.slane %v6936, %v7227
        %v7229 = vsel %vm7046, %v7228, %v7224
        %v7230 = vlaneseq
        %v7231 = vshrl.u32 %v7230, 7
        %v7232 = vsub.s32 %v7048, %v7231
        %v7233 = vrot.slane %v6939, %v7232
        %v7234 = vsel %vm7053, %v7233, %v7229
        %v7235 = vlaneseq
        %v7236 = vshrl.u32 %v7235, 7
        %v7237 = vsub.s32 %v7055, %v7236
        %v7238 = vrot.slane %v6942, %v7237
        %v7239 = vsel %vm7060, %v7238, %v7234
        %v7240 = vlaneseq
        %v7241 = vshrl.u32 %v7240, 7
        %v7242 = vsub.s32 %v7062, %v7241
        %v7243 = vrot.slane %v6945, %v7242
        %v7244 = vsel %vm7067, %v7243, %v7239
        %v7245 = vlaneseq
        %v7246 = vshrl.u32 %v7245, 7
        %v7247 = vsub.s32 %v7069, %v7246
        %v7248 = vrot.slane %v6948, %v7247
        %v7249 = vsel %vm7074, %v7248, %v7244
        %v7250 = vlaneseq
        %v7251 = vshrl.u32 %v7250, 7
        %v7252 = vsub.s32 %v7076, %v7251
        %v7253 = vrot.slane %v6951, %v7252
        %v7254 = vsel %vm7081, %v7253, %v7249
        %v7255 = vlaneseq
        %v7256 = vshrl.u32 %v7255, 7
        %v7257 = vsub.s32 %v7083, %v7256
        %v7258 = vrot.slane %v6954, %v7257
        %v7259 = vsel %vm7088, %v7258, %v7254
        %v7260 = vlaneseq
        %v7261 = vshrl.u32 %v7260, 7
        %v7262 = vsub.s32 %v7090, %v7261
        %v7263 = vrot.slane %v6957, %v7262
        %v7264 = vsel %vm7095, %v7263, %v7259
        %v7265 = vlaneseq
        %v7266 = vshrl.u32 %v7265, 7
        %v7267 = vsub.s32 %v7097, %v7266
        %v7268 = vrot.slane %v6960, %v7267
        %v7269 = vsel %vm7102, %v7268, %v7264
        %v7270 = vlaneseq
        %v7271 = vshrl.u32 %v7270, 7
        %v7272 = vsub.s32 %v7104, %v7271
        %v7273 = vrot.slane %v6963, %v7272
        %v7274 = vsel %vm7109, %v7273, %v7269
        %v7275 = vlaneseq
        %v7276 = vshrl.u32 %v7275, 7
        %v7277 = vsub.s32 %v7111, %v7276
        %v7278 = vrot.slane %v6966, %v7277
        %v7279 = vsel %vm7116, %v7278, %v7274
        %v7280 = vlaneseq
        %v7281 = vshrl.u32 %v7280, 7
        %v7282 = vsub.s32 %v7118, %v7281
        %v7283 = vrot.slane %v6969, %v7282
        %v7284 = vsel %vm7123, %v7283, %v7279
        %v7285 = vlaneseq
        %v7286 = vshrl.u32 %v7285, 7
        %v7287 = vsub.s32 %v7125, %v7286
        %v7288 = vrot.slane %v6972, %v7287
        %v7289 = vsel %vm7130, %v7288, %v7284
        %v7290 = vlaneseq
        %v7291 = vshrl.u32 %v7290, 7
        %v7292 = vsub.s32 %v7022, %v7291
        %v7293 = vrot.slane %v6975, %v7292
        %v7294 = vlaneseq
        %v7295 = vshrl.u32 %v7294, 7
        %v7296 = vsub.s32 %v7027, %v7295
        %v7297 = vrot.slane %v6978, %v7296
        %v7298 = vsel %vm7032, %v7297, %v7293
        %v7299 = vlaneseq
        %v7300 = vshrl.u32 %v7299, 7
        %v7301 = vsub.s32 %v7034, %v7300
        %v7302 = vrot.slane %v6981, %v7301
        %v7303 = vsel %vm7039, %v7302, %v7298
        %v7304 = vlaneseq
        %v7305 = vshrl.u32 %v7304, 7
        %v7306 = vsub.s32 %v7041, %v7305
        %v7307 = vrot.slane %v6984, %v7306
        %v7308 = vsel %vm7046, %v7307, %v7303
        %v7309 = vlaneseq
        %v7310 = vshrl.u32 %v7309, 7
        %v7311 = vsub.s32 %v7048, %v7310
        %v7312 = vrot.slane %v6987, %v7311
        %v7313 = vsel %vm7053, %v7312, %v7308
        %v7314 = vlaneseq
        %v7315 = vshrl.u32 %v7314, 7
        %v7316 = vsub.s32 %v7055, %v7315
        %v7317 = vrot.slane %v6990, %v7316
        %v7318 = vsel %vm7060, %v7317, %v7313
        %v7319 = vlaneseq
        %v7320 = vshrl.u32 %v7319, 7
        %v7321 = vsub.s32 %v7062, %v7320
        %v7322 = vrot.slane %v6993, %v7321
        %v7323 = vsel %vm7067, %v7322, %v7318
        %v7324 = vlaneseq
        %v7325 = vshrl.u32 %v7324, 7
        %v7326 = vsub.s32 %v7069, %v7325
        %v7327 = vrot.slane %v6996, %v7326
        %v7328 = vsel %vm7074, %v7327, %v7323
        %v7329 = vlaneseq
        %v7330 = vshrl.u32 %v7329, 7
        %v7331 = vsub.s32 %v7076, %v7330
        %v7332 = vrot.slane %v6999, %v7331
        %v7333 = vsel %vm7081, %v7332, %v7328
        %v7334 = vlaneseq
        %v7335 = vshrl.u32 %v7334, 7
        %v7336 = vsub.s32 %v7083, %v7335
        %v7337 = vrot.slane %v7002, %v7336
        %v7338 = vsel %vm7088, %v7337, %v7333
        %v7339 = vlaneseq
        %v7340 = vshrl.u32 %v7339, 7
        %v7341 = vsub.s32 %v7090, %v7340
        %v7342 = vrot.slane %v7005, %v7341
        %v7343 = vsel %vm7095, %v7342, %v7338
        %v7344 = vlaneseq
        %v7345 = vshrl.u32 %v7344, 7
        %v7346 = vsub.s32 %v7097, %v7345
        %v7347 = vrot.slane %v7008, %v7346
        %v7348 = vsel %vm7102, %v7347, %v7343
        %v7349 = vlaneseq
        %v7350 = vshrl.u32 %v7349, 7
        %v7351 = vsub.s32 %v7104, %v7350
        %v7352 = vrot.slane %v7011, %v7351
        %v7353 = vsel %vm7109, %v7352, %v7348
        %v7354 = vlaneseq
        %v7355 = vshrl.u32 %v7354, 7
        %v7356 = vsub.s32 %v7111, %v7355
        %v7357 = vrot.slane %v7014, %v7356
        %v7358 = vsel %vm7116, %v7357, %v7353
        %v7359 = vlaneseq
        %v7360 = vshrl.u32 %v7359, 7
        %v7361 = vsub.s32 %v7118, %v7360
        %v7362 = vrot.slane %v7017, %v7361
        %v7363 = vsel %vm7123, %v7362, %v7358
        %v7364 = vlaneseq
        %v7365 = vshrl.u32 %v7364, 7
        %v7366 = vsub.s32 %v7125, %v7365
        %v7367 = vrot.slane %v7020, %v7366
        %v7368 = vsel %vm7130, %v7367, %v7363
        %v7369 = vcombine.low %v7131, %v7210
        %v7370 = vcombine.low %v7289, %v7368
        %v7372 = vunpack.c.l.s4 1966171168
        %v7373 = vunpack.c.0.s8 %v7372
        %v7374 = vlaneseq
        %v7375 = vshrl.u32 %v7374, 7
        %v7376 = vsub.s32 %v7373, %v7375
        %v7377 = vrot.slane %v7369, %v7376
        %v7379 = vunpack.c.l.s4 1966171168
        %v7380 = vunpack.c.0.s8 %v7379
        %v7381 = vlaneseq
        %v7382 = vshrl.u32 %v7381, 7
        %v7383 = vsub.s32 %v7380, %v7382
        %v7384 = vrot.slane %v7370, %v7383
        %v7385 = vcombine.low %v7377, %v7384
        %v7387 = vunpack.c.l.s4 1966171168
        %v7388 = vunpack.c.0.s8 %v7387
        %v7389 = vlaneseq
        %v7390 = vshrl.u32 %v7389, 7
        %v7391 = vsub.s32 %v7388, %v7390
        %v7392 = vrot.slane %v7385, %v7391
        %v7394 = vlaneseq
        %vm7395 = vcmp.ge.s32.totalorder %v7394, 0
        %vm7396 = vcmp.lt.s32.totalorder %v7394, 512
        %vm7397 = vmand %vm7395, %vm7396
        %7398 = vst.msk [vmem:[%s352] sm:$0xf] %vm7397, %v7392
        %s7399 = sand.u32 %s171, 1
        %s7400 = scalar_lea.sflag [#allocation4], %s7399
        %s7401 = sand.u32 %s171, 1
        %s7402 = smul.addr %s7401, 4
        %s7403 = scalar_lea.vmem [#allocation10], %s7402
        // Predicated region
        $region61: #{tpu_custom_call.1} parent=43 // pred_check
          %p7404 = pneg %p181
        $region62: #{tpu_custom_call.1} parent=43 // pred_check_branch
          %7406 = sbr.rel (%p7404) target = $region64
        $region63: #{tpu_custom_call.1} parent=43 // pred_region
          %s7407 = smul.u32 4, %s27
          %s7409 = ssub.s32 64, 64
          %7410 = vsyncadd %s7400, %s7409
          %s7411 = smul.addr %s7407, 16
          %s7412 = scalar_lea.hbm %s6, %s7411
          %s7414 = sshll.u32 %s7403, 4
          %s7415 = int_to_ptr.vmem [resolvable:$true] %s7414
          %7417 = dma.vmem_to_hbm [thread:$0]  %s7415, 64, %s7412, %s7400
        $region64: #{tpu_custom_call.1} parent=43 // pred_fallthru
          _
      $region44: #{tpu_custom_call.1} parent=5 // pred_fallthru
        _
      %p7418 = scmp.le.s32.totalorder 2, %s22
      // Predicated region
      $region65: #{tpu_custom_call.1} parent=5 // pred_check
        %p7419 = pneg %p7418
      $region66: #{tpu_custom_call.1} parent=5 // pred_check_branch
        %7421 = sbr.rel (%p7419) target = $region68
      $region67: #{tpu_custom_call.1} parent=5 // pred_region
        %s7422 = ssub.s32 %s22, 2
        // Predicated region
        $region69: #{tpu_custom_call.1} parent=67 // pred_check
          %p7423 = pneg %p187
        $region70: #{tpu_custom_call.1} parent=67 // pred_check_branch
          %7425 = sbr.rel (%p7423) target = $region72
        $region71: #{tpu_custom_call.1} parent=67 // pred_region
          %s7426 = sand.u32 %s172, 1
          %s7427 = scalar_lea.sflag [#allocation4], %s7426
          %s7428 = sand.u32 %s172, 1
          %s7429 = smul.addr %s7428, 4
          %s7430 = scalar_lea.vmem [#allocation10], %s7429
          %7431 = dma.done %s7427, 64
        $region72: #{tpu_custom_call.1} parent=67 // pred_fallthru
          _
      $region68: #{tpu_custom_call.1} parent=5 // pred_fallthru
        _
    $region6: #{tpu_custom_call.1} parent=1 // loop_footer
      %s26 = sadd.s32 1, %s22
    $region7: #{tpu_custom_call.1} parent=1 // loop_footer_branch
      %21 = sbr.rel target = $region3
    $region8: #{tpu_custom_call.1} parent=1 // loop_exit
      _
    %7432 = vsyncpa [#allocation3], 1
    %s7433 = scalar_lea.sflag [#allocation3], 1
    %7434 = vsyncpa %s7433, 1
    %7435 = vsyncpa [#allocation6], 1
    %s7436 = scalar_lea.sflag [#allocation6], 1
    %7437 = vsyncpa %s7436, 1
    %7438 = vsyncpa [#allocation9], 1
    %7439 = vsyncpa [#allocation4], 1
    %s7440 = scalar_lea.sflag [#allocation4], 1
    %7441 = vsyncpa %s7440, 1

</llo_original>
